<compile_context>
chip_gen: v7x
topology: tpu7x:2x2x1
jax: 0.10.0
libtpu: 0.0.40
codegen_flags: <defaults>
</compile_context>

<pallas_src>
import math
import jax
import jax.numpy as jnp
from jax.experimental import pallas as pl
from jax.experimental.pallas import tpu as pltpu

# ---- model dims (small, consistent with the module's __init__/forward) ----
S, B = 8, 2            # seq len, batch
E, H = 32, 4           # emb_size, nhead
HD = E // H            # head dim
FF = 64                # dim_feedforward
V = 50                 # vocab_size
L = 2                  # num_encoder_layers
MAXLEN = 64
LN_EPS = 1e-5
VP = 128               # lane-padded vocab width for the fused generator output
SQRT_E = math.sqrt(E)
ATTN_SCALE = 1.0 / math.sqrt(HD)


def _layer_norm(x, w, b):
    mu = jnp.mean(x, axis=-1, keepdims=True)
    xc = x - mu
    var = jnp.mean(xc * xc, axis=-1, keepdims=True)
    return xc * jax.lax.rsqrt(var + LN_EPS) * w + b


# ------------------------------ Pallas kernel ------------------------------

def fused_forward_kernel(ids_ref,                        # (S, B) int32, SMEM (scalar prefetch)
                         emb_ref, pos_ref,               # (V, E) f32 (pre-scaled), (S, E) f32
                         wqkv_ref, bqkv_ref,             # (L,3,H,E,HD) bf16, (L,3,H,1,HD) f32
                         wo_ref, bo_ref,                 # (L,H,HD,E) bf16, (L,1,E) f32
                         w1_ref, b1_ref,                 # (L,E,FF) bf16, (L,1,FF) f32
                         w2_ref, b2_ref,                 # (L,FF,E) bf16, (L,1,E) f32
                         lnw_ref, lnb_ref,               # (L,2,1,E) f32
                         gw_ref, gb_ref,                 # (E,VP) bf16, (1,VP) f32
                         o_ref,                          # (S, VP) f32
                         xbuf_ref):                      # VMEM scratch (B*S, E) f32
    """Whole forward pass in one grid step: gather + pos-enc, L post-LN encoder
    layers (unrolled), batch-mean pooling and the generator linear."""

    # ---- token embedding gather (table pre-scaled by sqrt(E)) + positional enc ----
    for b in range(B):
        for s in range(S):
            tok = ids_ref[s, b]                                      # SMEM scalar
            xbuf_ref[pl.ds(b * S + s, 1), :] = (
                emb_ref[pl.ds(tok, 1), :] + pos_ref[pl.ds(s, 1), :])

    x = xbuf_ref[...]                                                # (B*S, E) f32, b-major

    # ---- transformer encoder layers (post-LN), fully unrolled ----
    for l in range(L):
        x_bf = x.astype(jnp.bfloat16)
        attn_acc = jnp.zeros((B * S, E), jnp.float32)
        for h in range(H):
            # per-head projections: weights pre-split per head in the wrapper, so
            # only free leading-axis indexing here (no lane slicing of a fused qkv).
            q = (jnp.dot(x_bf, wqkv_ref[l, 0, h, :, :],
                         preferred_element_type=jnp.float32)
                 + bqkv_ref[l, 0, h, :, :]).reshape(B, S, HD)
            k = (jnp.dot(x_bf, wqkv_ref[l, 1, h, :, :],
                         preferred_element_type=jnp.float32)
                 + bqkv_ref[l, 1, h, :, :]).reshape(B, S, HD)
            v = (jnp.dot(x_bf, wqkv_ref[l, 2, h, :, :],
                         preferred_element_type=jnp.float32)
                 + bqkv_ref[l, 2, h, :, :]).reshape(B, S, HD)

            s_bqk = jnp.einsum('bqd,bkd->bqk',
                               q.astype(jnp.bfloat16), k.astype(jnp.bfloat16),
                               preferred_element_type=jnp.float32) * ATTN_SCALE
            m = jnp.max(s_bqk, axis=-1, keepdims=True)
            p = jnp.exp(s_bqk - m)
            denom = jnp.sum(p, axis=-1, keepdims=True)
            attn = p * pl.reciprocal(denom, approx=True)             # EUP divide

            oh = jnp.einsum('bqk,bkd->bqd',
                            attn.astype(jnp.bfloat16), v.astype(jnp.bfloat16),
                            preferred_element_type=jnp.float32)      # (B,S,HD) f32

            # fold the output projection per head and accumulate -> no lane concat
            attn_acc = attn_acc + jnp.dot(
                oh.reshape(B * S, HD).astype(jnp.bfloat16),
                wo_ref[l, h, :, :], preferred_element_type=jnp.float32)

        attn_out = attn_acc + bo_ref[l, :, :]
        x1 = _layer_norm(x + attn_out, lnw_ref[l, 0, :, :], lnb_ref[l, 0, :, :])

        # ---- feed forward (relu), bf16 MXU operands / f32 accumulate ----
        h1 = jnp.maximum(
            jnp.dot(x1.astype(jnp.bfloat16), w1_ref[l, :, :],
                    preferred_element_type=jnp.float32) + b1_ref[l, :, :], 0.0)
        h2 = jnp.dot(h1.astype(jnp.bfloat16), w2_ref[l, :, :],
                     preferred_element_type=jnp.float32) + b2_ref[l, :, :]
        x = _layer_norm(x1 + h2, lnw_ref[l, 1, :, :], lnb_ref[l, 1, :, :])

    # ---- generator epilogue: mean over BATCH (== torch .mean(1)), then linear ----
    # static, sublane-aligned slices (rows b*S:(b+1)*S) instead of reshape+reduce
    pooled = x[0:S, :]
    for b in range(1, B):
        pooled = pooled + x[b * S:(b + 1) * S, :]
    pooled = pooled * (1.0 / B)                                      # (S, E) f32
    logits = jnp.dot(pooled.astype(jnp.bfloat16), gw_ref[...],
                     preferred_element_type=jnp.float32) + gb_ref[...]
    o_ref[...] = logits.astype(o_ref.dtype)                          # (8,128): lane-dense store


# ------------------------------ JAX wrappers ------------------------------

def _full_spec(shape):
    n = len(shape)
    return pl.BlockSpec(tuple(shape), lambda i, ids, _n=n: (0,) * _n)


def prepare_params(p):
    """One-time repack of PyTorch-layout params into kernel layouts/dtypes."""
    # in_proj_weight (L,3E,E): rows ordered [q|k|v], heads contiguous within each.
    wqkv = jnp.transpose(p['in_w'].reshape(L, 3, H, HD, E), (0, 1, 2, 4, 3))   # (L,3,H,E,HD)
    # out_proj: y = o @ W_out^T; per-head block of W_out^T is (HD, E).
    wo = jnp.transpose(p['out_w'], (0, 2, 1)).reshape(L, H, HD, E)
    gw = jnp.zeros((E, VP), jnp.float32).at[:, :V].set(p['gen_w'].T)
    gb = jnp.zeros((1, VP), jnp.float32).at[0, :V].set(p['gen_b'])
    return {
        'emb':  (p['emb'] * SQRT_E).astype(jnp.float32),   # fold * sqrt(E) into the table
        'pos':  p['pos'][:S].astype(jnp.float32),
        'wqkv': wqkv.astype(jnp.bfloat16),
        'bqkv': p['in_b'].reshape(L, 3, H, 1, HD).astype(jnp.float32),
        'wo':   wo.astype(jnp.bfloat16),
        'bo':   p['out_b'].reshape(L, 1, E).astype(jnp.float32),
        'w1':   jnp.transpose(p['l1_w'], (0, 2, 1)).astype(jnp.bfloat16),      # (L,E,FF)
        'b1':   p['l1_b'].reshape(L, 1, FF).astype(jnp.float32),
        'w2':   jnp.transpose(p['l2_w'], (0, 2, 1)).astype(jnp.bfloat16),      # (L,FF,E)
        'b2':   p['l2_b'].reshape(L, 1, E).astype(jnp.float32),
        'ln_w': jnp.stack([p['ln1_w'], p['ln2_w']], axis=1).reshape(L, 2, 1, E).astype(jnp.float32),
        'ln_b': jnp.stack([p['ln1_b'], p['ln2_b']], axis=1).reshape(L, 2, 1, E).astype(jnp.float32),
        'gw':   gw.astype(jnp.bfloat16),
        'gb':   gb,
    }


@jax.jit
def masked_lm_forward(word, kp):
    """word: (S, B) int tokens -> (S, V) f32 logits (same output as the torch module)."""
    out = pl.pallas_call(
        fused_forward_kernel,
        out_shape=jax.ShapeDtypeStruct((S, VP), jnp.float32),
        grid_spec=pltpu.PrefetchScalarGridSpec(
            num_scalar_prefetch=1,            # token ids -> SMEM
            grid=(1,),
            in_specs=[
                _full_spec((V, E)),           # emb table (pre-scaled by sqrt(E))
                _full_spec((S, E)),           # pos table (rows :S)
                _full_spec((L, 3, H, E, HD)), # wqkv (per-head, pre-transposed)
                _full_spec((L, 3, H, 1, HD)), # bqkv
                _full_spec((L, H, HD, E)),    # wo (per-head out-proj blocks)
                _full_spec((L, 1, E)),        # bo
                _full_spec((L, E, FF)),       # w1
                _full_spec((L, 1, FF)),       # b1
                _full_spec((L, FF, E)),       # w2
                _full_spec((L, 1, E)),        # b2
                _full_spec((L, 2, 1, E)),     # ln weights
                _full_spec((L, 2, 1, E)),     # ln biases
                _full_spec((E, VP)),          # generator weight (lane-padded)
                _full_spec((1, VP)),          # generator bias   (lane-padded)
            ],
            out_specs=_full_spec((S, VP)),
            scratch_shapes=[pltpu.VMEM((B * S, E), jnp.float32)],
        ),
        compiler_params=pltpu.CompilerParams(dimension_semantics=("arbitrary",)),
    )(word.astype(jnp.int32), kp['emb'], kp['pos'],
      kp['wqkv'], kp['bqkv'], kp['wo'], kp['bo'],
      kp['w1'], kp['b1'], kp['w2'], kp['b2'],
      kp['ln_w'], kp['ln_b'], kp['gw'], kp['gb'])
    return out[:, :V]


# --------------------------- params / reference ---------------------------

def init_params(key):
    ks = jax.random.split(key, 11)

    def nrm(k, shape, scale=0.05):
        return (scale * jax.random.normal(k, shape)).astype(jnp.float32)

    p = {
        'emb':   nrm(ks[0], (V, E), 1.0),
        'in_w':  nrm(ks[1], (L, 3 * E, E)),  'in_b':  nrm(ks[2], (L, 3 * E)),
        'out_w': nrm(ks[3], (L, E, E)),      'out_b': nrm(ks[4], (L, E)),
        'l1_w':  nrm(ks[5], (L, FF, E)),     'l1_b':  nrm(ks[6], (L, FF)),
        'l2_w':  nrm(ks[7], (L, E, FF)),     'l2_b':  nrm(ks[8], (L, E)),
        'ln1_w': jnp.ones((L, E), jnp.float32), 'ln1_b': jnp.zeros((L, E), jnp.float32),
        'ln2_w': jnp.ones((L, E), jnp.float32), 'ln2_b': jnp.zeros((L, E), jnp.float32),
        'gen_w': nrm(ks[9], (V, E)),         'gen_b': nrm(ks[10], (V,)),
    }
    # sinusoidal table, identical construction to PositionalEncoding.__init__
    den = jnp.exp(-jnp.arange(0, E, 2, dtype=jnp.float32) * math.log(10000.0) / E)
    pos = jnp.arange(0, MAXLEN, dtype=jnp.float32)[:, None]
    pe = jnp.zeros((MAXLEN, E), jnp.float32)
    pe = pe.at[:, 0::2].set(jnp.sin(pos * den))
    pe = pe.at[:, 1::2].set(jnp.cos(pos * den))
    p['pos'] = pe
    return p


def reference_forward(word, p):
    """Pure-JAX f32 (HIGHEST precision) reference matching the PyTorch forward (eval mode)."""
    hp = jax.lax.Precision.HIGHEST
    x = p['emb'][word] * math.sqrt(E) + p['pos'][:S][:, None, :]     # (S, B, E)
    for l in range(L):
        qkv = jnp.einsum('sbe,fe->sbf', x, p['in_w'][l], precision=hp) + p['in_b'][l]
        q = qkv[..., :E].reshape(S, B, H, HD)
        k = qkv[..., E:2 * E].reshape(S, B, H, HD)
        v = qkv[..., 2 * E:].reshape(S, B, H, HD)
        s = jnp.einsum('qbhd,kbhd->bhqk', q, k, precision=hp) / math.sqrt(HD)
        a = jax.nn.softmax(s, axis=-1)
        o = jnp.einsum('bhqk,kbhd->qbhd', a, v, precision=hp).reshape(S, B, E)
        o = jnp.einsum('sbe,fe->sbf', o, p['out_w'][l], precision=hp) + p['out_b'][l]
        x = _layer_norm(x + o, p['ln1_w'][l], p['ln1_b'][l])
        h1 = jax.nn.relu(jnp.einsum('sbe,fe->sbf', x, p['l1_w'][l], precision=hp) + p['l1_b'][l])
        h2 = jnp.einsum('sbf,ef->sbe', h1, p['l2_w'][l], precision=hp) + p['l2_b'][l]
        x = _layer_norm(x + h2, p['ln2_w'][l], p['ln2_b'][l])
    pooled = x.mean(axis=1)                                          # .mean(1): over batch
    return jnp.einsum('se,ve->sv', pooled, p['gen_w'], precision=hp) + p['gen_b']


if __name__ == "__main__":
    key = jax.random.PRNGKey(0)
    pk, wk = jax.random.split(key)
    params = init_params(pk)
    word = jax.random.randint(wk, (S, B), 0, V, dtype=jnp.int32)

    kparams = prepare_params(params)
    out = masked_lm_forward(word, kparams)
    out = jax.block_until_ready(out)
    assert out.shape == (S, V), out.shape

    ref = reference_forward(word, params)
    # kernel uses bf16 MXU operands (f32 accumulate, f32 softmax/LN), so compare
    # against the full-f32 reference with a bf16-appropriate tolerance.
    if not bool(jnp.allclose(out, ref, rtol=5e-2, atol=5e-2)):
        max_err = float(jnp.max(jnp.abs(out - ref)))
        raise AssertionError(f"Pallas output does not match JAX reference (max |err|={max_err})")

    print("KERNEL_OK")
</pallas_src>

<mosaic_0001>
module attributes {stable_mosaic.version = 11 : i64} {
  func.func @fused_forward_kernel(%arg0: i32, %arg1: memref<8x2xi32, #tpu.memory_space<smem>>, %arg2: memref<50x32xf32, #tpu.memory_space<vmem>>, %arg3: memref<8x32xf32, #tpu.memory_space<vmem>>, %arg4: memref<2x3x4x32x8xbf16, #tpu.memory_space<vmem>>, %arg5: memref<2x3x4x1x8xf32, #tpu.memory_space<vmem>>, %arg6: memref<2x4x8x32xbf16, #tpu.memory_space<vmem>>, %arg7: memref<2x1x32xf32, #tpu.memory_space<vmem>>, %arg8: memref<2x32x64xbf16, #tpu.memory_space<vmem>>, %arg9: memref<2x1x64xf32, #tpu.memory_space<vmem>>, %arg10: memref<2x64x32xbf16, #tpu.memory_space<vmem>>, %arg11: memref<2x1x32xf32, #tpu.memory_space<vmem>>, %arg12: memref<2x2x1x32xf32, #tpu.memory_space<vmem>>, %arg13: memref<2x2x1x32xf32, #tpu.memory_space<vmem>>, %arg14: memref<32x128xbf16, #tpu.memory_space<vmem>>, %arg15: memref<1x128xf32, #tpu.memory_space<vmem>>, %arg16: memref<8x128xf32, #tpu.memory_space<vmem>>, %arg17: memref<16x32xf32, #tpu.memory_space<vmem>>) attributes {dimension_semantics = [#tpu.dimension_semantics<arbitrary>], iteration_bounds = array<i64: 1>, scalar_prefetch = 1 : i64, scratch_operands = 1 : i64, tpu.core_type = #tpu.core_type<tc>, window_params = [{pipeline_mode = #tpu.pipeline_mode<synchronous>, transform_indices = @transform_0, window_bounds = array<i64: 50, 32>}, {pipeline_mode = #tpu.pipeline_mode<synchronous>, transform_indices = @transform_1, window_bounds = array<i64: 8, 32>}, {pipeline_mode = #tpu.pipeline_mode<synchronous>, transform_indices = @transform_2, window_bounds = array<i64: 2, 3, 4, 32, 8>}, {pipeline_mode = #tpu.pipeline_mode<synchronous>, transform_indices = @transform_3, window_bounds = array<i64: 2, 3, 4, 1, 8>}, {pipeline_mode = #tpu.pipeline_mode<synchronous>, transform_indices = @transform_4, window_bounds = array<i64: 2, 4, 8, 32>}, {pipeline_mode = #tpu.pipeline_mode<synchronous>, transform_indices = @transform_5, window_bounds = array<i64: 2, 1, 32>}, {pipeline_mode = #tpu.pipeline_mode<synchronous>, transform_indices = @transform_6, window_bounds = array<i64: 2, 32, 64>}, {pipeline_mode = #tpu.pipeline_mode<synchronous>, transform_indices = @transform_7, window_bounds = array<i64: 2, 1, 64>}, {pipeline_mode = #tpu.pipeline_mode<synchronous>, transform_indices = @transform_8, window_bounds = array<i64: 2, 64, 32>}, {pipeline_mode = #tpu.pipeline_mode<synchronous>, transform_indices = @transform_9, window_bounds = array<i64: 2, 1, 32>}, {pipeline_mode = #tpu.pipeline_mode<synchronous>, transform_indices = @transform_10, window_bounds = array<i64: 2, 2, 1, 32>}, {pipeline_mode = #tpu.pipeline_mode<synchronous>, transform_indices = @transform_11, window_bounds = array<i64: 2, 2, 1, 32>}, {pipeline_mode = #tpu.pipeline_mode<synchronous>, transform_indices = @transform_12, window_bounds = array<i64: 32, 128>}, {pipeline_mode = #tpu.pipeline_mode<synchronous>, transform_indices = @transform_13, window_bounds = array<i64: 1, 128>}, {pipeline_mode = #tpu.pipeline_mode<synchronous>, transform_indices = @transform_14, window_bounds = array<i64: 8, 128>}]} {
    %c0 = arith.constant 0 : index
    %c0_0 = arith.constant 0 : index
    %0 = memref.load %arg1[%c0, %c0_0] : memref<8x2xi32, #tpu.memory_space<smem>>
    %1 = arith.index_cast %0 : i32 to index
    %c0_1 = arith.constant 0 : index
    %2 = vector.load %arg2[%1, %c0_1] : memref<50x32xf32, #tpu.memory_space<vmem>>, vector<1x32xf32>
    %c0_2 = arith.constant 0 : index
    %c0_3 = arith.constant 0 : index
    %3 = vector.load %arg3[%c0_2, %c0_3] : memref<8x32xf32, #tpu.memory_space<vmem>>, vector<1x32xf32>
    %4 = arith.addf %2, %3 : vector<1x32xf32>
    %c0_4 = arith.constant 0 : index
    %c0_5 = arith.constant 0 : index
    %5 = vector.load %arg17[%c0_4, %c0_5] : memref<16x32xf32, #tpu.memory_space<vmem>>, vector<1x32xf32>
    tpu.vector_store %arg17[%c0_4, %c0_5], %4 {strides = array<i32>} : memref<16x32xf32, #tpu.memory_space<vmem>>, vector<1x32xf32>,
    %c1 = arith.constant 1 : index
    %c0_6 = arith.constant 0 : index
    %6 = memref.load %arg1[%c1, %c0_6] : memref<8x2xi32, #tpu.memory_space<smem>>
    %7 = arith.index_cast %6 : i32 to index
    %c0_7 = arith.constant 0 : index
    %8 = vector.load %arg2[%7, %c0_7] : memref<50x32xf32, #tpu.memory_space<vmem>>, vector<1x32xf32>
    %c1_8 = arith.constant 1 : index
    %c0_9 = arith.constant 0 : index
    %9 = vector.load %arg3[%c1_8, %c0_9] : memref<8x32xf32, #tpu.memory_space<vmem>>, vector<1x32xf32>
    %10 = arith.addf %8, %9 : vector<1x32xf32>
    %c1_10 = arith.constant 1 : index
    %c0_11 = arith.constant 0 : index
    %11 = vector.load %arg17[%c1_10, %c0_11] : memref<16x32xf32, #tpu.memory_space<vmem>>, vector<1x32xf32>
    tpu.vector_store %arg17[%c1_10, %c0_11], %10 {strides = array<i32>} : memref<16x32xf32, #tpu.memory_space<vmem>>, vector<1x32xf32>,
    %c2 = arith.constant 2 : index
    %c0_12 = arith.constant 0 : index
    %12 = memref.load %arg1[%c2, %c0_12] : memref<8x2xi32, #tpu.memory_space<smem>>
    %13 = arith.index_cast %12 : i32 to index
    %c0_13 = arith.constant 0 : index
    %14 = vector.load %arg2[%13, %c0_13] : memref<50x32xf32, #tpu.memory_space<vmem>>, vector<1x32xf32>
    %c2_14 = arith.constant 2 : index
    %c0_15 = arith.constant 0 : index
    %15 = vector.load %arg3[%c2_14, %c0_15] : memref<8x32xf32, #tpu.memory_space<vmem>>, vector<1x32xf32>
    %16 = arith.addf %14, %15 : vector<1x32xf32>
    %c2_16 = arith.constant 2 : index
    %c0_17 = arith.constant 0 : index
    %17 = vector.load %arg17[%c2_16, %c0_17] : memref<16x32xf32, #tpu.memory_space<vmem>>, vector<1x32xf32>
    tpu.vector_store %arg17[%c2_16, %c0_17], %16 {strides = array<i32>} : memref<16x32xf32, #tpu.memory_space<vmem>>, vector<1x32xf32>,
    %c3 = arith.constant 3 : index
    %c0_18 = arith.constant 0 : index
    %18 = memref.load %arg1[%c3, %c0_18] : memref<8x2xi32, #tpu.memory_space<smem>>
    %19 = arith.index_cast %18 : i32 to index
    %c0_19 = arith.constant 0 : index
    %20 = vector.load %arg2[%19, %c0_19] : memref<50x32xf32, #tpu.memory_space<vmem>>, vector<1x32xf32>
    %c3_20 = arith.constant 3 : index
    %c0_21 = arith.constant 0 : index
    %21 = vector.load %arg3[%c3_20, %c0_21] : memref<8x32xf32, #tpu.memory_space<vmem>>, vector<1x32xf32>
    %22 = arith.addf %20, %21 : vector<1x32xf32>
    %c3_22 = arith.constant 3 : index
    %c0_23 = arith.constant 0 : index
    %23 = vector.load %arg17[%c3_22, %c0_23] : memref<16x32xf32, #tpu.memory_space<vmem>>, vector<1x32xf32>
    tpu.vector_store %arg17[%c3_22, %c0_23], %22 {strides = array<i32>} : memref<16x32xf32, #tpu.memory_space<vmem>>, vector<1x32xf32>,
    %c4 = arith.constant 4 : index
    %c0_24 = arith.constant 0 : index
    %24 = memref.load %arg1[%c4, %c0_24] : memref<8x2xi32, #tpu.memory_space<smem>>
    %25 = arith.index_cast %24 : i32 to index
    %c0_25 = arith.constant 0 : index
    %26 = vector.load %arg2[%25, %c0_25] : memref<50x32xf32, #tpu.memory_space<vmem>>, vector<1x32xf32>
    %c4_26 = arith.constant 4 : index
    %c0_27 = arith.constant 0 : index
    %27 = vector.load %arg3[%c4_26, %c0_27] : memref<8x32xf32, #tpu.memory_space<vmem>>, vector<1x32xf32>
    %28 = arith.addf %26, %27 : vector<1x32xf32>
    %c4_28 = arith.constant 4 : index
    %c0_29 = arith.constant 0 : index
    %29 = vector.load %arg17[%c4_28, %c0_29] : memref<16x32xf32, #tpu.memory_space<vmem>>, vector<1x32xf32>
    tpu.vector_store %arg17[%c4_28, %c0_29], %28 {strides = array<i32>} : memref<16x32xf32, #tpu.memory_space<vmem>>, vector<1x32xf32>,
    %c5 = arith.constant 5 : index
    %c0_30 = arith.constant 0 : index
    %30 = memref.load %arg1[%c5, %c0_30] : memref<8x2xi32, #tpu.memory_space<smem>>
    %31 = arith.index_cast %30 : i32 to index
    %c0_31 = arith.constant 0 : index
    %32 = vector.load %arg2[%31, %c0_31] : memref<50x32xf32, #tpu.memory_space<vmem>>, vector<1x32xf32>
    %c5_32 = arith.constant 5 : index
    %c0_33 = arith.constant 0 : index
    %33 = vector.load %arg3[%c5_32, %c0_33] : memref<8x32xf32, #tpu.memory_space<vmem>>, vector<1x32xf32>
    %34 = arith.addf %32, %33 : vector<1x32xf32>
    %c5_34 = arith.constant 5 : index
    %c0_35 = arith.constant 0 : index
    %35 = vector.load %arg17[%c5_34, %c0_35] : memref<16x32xf32, #tpu.memory_space<vmem>>, vector<1x32xf32>
    tpu.vector_store %arg17[%c5_34, %c0_35], %34 {strides = array<i32>} : memref<16x32xf32, #tpu.memory_space<vmem>>, vector<1x32xf32>,
    %c6 = arith.constant 6 : index
    %c0_36 = arith.constant 0 : index
    %36 = memref.load %arg1[%c6, %c0_36] : memref<8x2xi32, #tpu.memory_space<smem>>
    %37 = arith.index_cast %36 : i32 to index
    %c0_37 = arith.constant 0 : index
    %38 = vector.load %arg2[%37, %c0_37] : memref<50x32xf32, #tpu.memory_space<vmem>>, vector<1x32xf32>
    %c6_38 = arith.constant 6 : index
    %c0_39 = arith.constant 0 : index
    %39 = vector.load %arg3[%c6_38, %c0_39] : memref<8x32xf32, #tpu.memory_space<vmem>>, vector<1x32xf32>
    %40 = arith.addf %38, %39 : vector<1x32xf32>
    %c6_40 = arith.constant 6 : index
    %c0_41 = arith.constant 0 : index
    %41 = vector.load %arg17[%c6_40, %c0_41] : memref<16x32xf32, #tpu.memory_space<vmem>>, vector<1x32xf32>
    tpu.vector_store %arg17[%c6_40, %c0_41], %40 {strides = array<i32>} : memref<16x32xf32, #tpu.memory_space<vmem>>, vector<1x32xf32>,
    %c7 = arith.constant 7 : index
    %c0_42 = arith.constant 0 : index
    %42 = memref.load %arg1[%c7, %c0_42] : memref<8x2xi32, #tpu.memory_space<smem>>
    %43 = arith.index_cast %42 : i32 to index
    %c0_43 = arith.constant 0 : index
    %44 = vector.load %arg2[%43, %c0_43] : memref<50x32xf32, #tpu.memory_space<vmem>>, vector<1x32xf32>
    %c7_44 = arith.constant 7 : index
    %c0_45 = arith.constant 0 : index
    %45 = vector.load %arg3[%c7_44, %c0_45] : memref<8x32xf32, #tpu.memory_space<vmem>>, vector<1x32xf32>
    %46 = arith.addf %44, %45 : vector<1x32xf32>
    %c7_46 = arith.constant 7 : index
    %c0_47 = arith.constant 0 : index
    %47 = vector.load %arg17[%c7_46, %c0_47] : memref<16x32xf32, #tpu.memory_space<vmem>>, vector<1x32xf32>
    tpu.vector_store %arg17[%c7_46, %c0_47], %46 {strides = array<i32>} : memref<16x32xf32, #tpu.memory_space<vmem>>, vector<1x32xf32>,
    %c0_48 = arith.constant 0 : index
    %c1_49 = arith.constant 1 : index
    %48 = memref.load %arg1[%c0_48, %c1_49] : memref<8x2xi32, #tpu.memory_space<smem>>
    %49 = arith.index_cast %48 : i32 to index
    %c0_50 = arith.constant 0 : index
    %50 = vector.load %arg2[%49, %c0_50] : memref<50x32xf32, #tpu.memory_space<vmem>>, vector<1x32xf32>
    %c0_51 = arith.constant 0 : index
    %c0_52 = arith.constant 0 : index
    %51 = vector.load %arg3[%c0_51, %c0_52] : memref<8x32xf32, #tpu.memory_space<vmem>>, vector<1x32xf32>
    %52 = arith.addf %50, %51 : vector<1x32xf32>
    %c8 = arith.constant 8 : index
    %c0_53 = arith.constant 0 : index
    %53 = vector.load %arg17[%c8, %c0_53] : memref<16x32xf32, #tpu.memory_space<vmem>>, vector<1x32xf32>
    tpu.vector_store %arg17[%c8, %c0_53], %52 {strides = array<i32>} : memref<16x32xf32, #tpu.memory_space<vmem>>, vector<1x32xf32>,
    %c1_54 = arith.constant 1 : index
    %c1_55 = arith.constant 1 : index
    %54 = memref.load %arg1[%c1_54, %c1_55] : memref<8x2xi32, #tpu.memory_space<smem>>
    %55 = arith.index_cast %54 : i32 to index
    %c0_56 = arith.constant 0 : index
    %56 = vector.load %arg2[%55, %c0_56] : memref<50x32xf32, #tpu.memory_space<vmem>>, vector<1x32xf32>
    %c1_57 = arith.constant 1 : index
    %c0_58 = arith.constant 0 : index
    %57 = vector.load %arg3[%c1_57, %c0_58] : memref<8x32xf32, #tpu.memory_space<vmem>>, vector<1x32xf32>
    %58 = arith.addf %56, %57 : vector<1x32xf32>
    %c9 = arith.constant 9 : index
    %c0_59 = arith.constant 0 : index
    %59 = vector.load %arg17[%c9, %c0_59] : memref<16x32xf32, #tpu.memory_space<vmem>>, vector<1x32xf32>
    tpu.vector_store %arg17[%c9, %c0_59], %58 {strides = array<i32>} : memref<16x32xf32, #tpu.memory_space<vmem>>, vector<1x32xf32>,
    %c2_60 = arith.constant 2 : index
    %c1_61 = arith.constant 1 : index
    %60 = memref.load %arg1[%c2_60, %c1_61] : memref<8x2xi32, #tpu.memory_space<smem>>
    %61 = arith.index_cast %60 : i32 to index
    %c0_62 = arith.constant 0 : index
    %62 = vector.load %arg2[%61, %c0_62] : memref<50x32xf32, #tpu.memory_space<vmem>>, vector<1x32xf32>
    %c2_63 = arith.constant 2 : index
    %c0_64 = arith.constant 0 : index
    %63 = vector.load %arg3[%c2_63, %c0_64] : memref<8x32xf32, #tpu.memory_space<vmem>>, vector<1x32xf32>
    %64 = arith.addf %62, %63 : vector<1x32xf32>
    %c10 = arith.constant 10 : index
    %c0_65 = arith.constant 0 : index
    %65 = vector.load %arg17[%c10, %c0_65] : memref<16x32xf32, #tpu.memory_space<vmem>>, vector<1x32xf32>
    tpu.vector_store %arg17[%c10, %c0_65], %64 {strides = array<i32>} : memref<16x32xf32, #tpu.memory_space<vmem>>, vector<1x32xf32>,
    %c3_66 = arith.constant 3 : index
    %c1_67 = arith.constant 1 : index
    %66 = memref.load %arg1[%c3_66, %c1_67] : memref<8x2xi32, #tpu.memory_space<smem>>
    %67 = arith.index_cast %66 : i32 to index
    %c0_68 = arith.constant 0 : index
    %68 = vector.load %arg2[%67, %c0_68] : memref<50x32xf32, #tpu.memory_space<vmem>>, vector<1x32xf32>
    %c3_69 = arith.constant 3 : index
    %c0_70 = arith.constant 0 : index
    %69 = vector.load %arg3[%c3_69, %c0_70] : memref<8x32xf32, #tpu.memory_space<vmem>>, vector<1x32xf32>
    %70 = arith.addf %68, %69 : vector<1x32xf32>
    %c11 = arith.constant 11 : index
    %c0_71 = arith.constant 0 : index
    %71 = vector.load %arg17[%c11, %c0_71] : memref<16x32xf32, #tpu.memory_space<vmem>>, vector<1x32xf32>
    tpu.vector_store %arg17[%c11, %c0_71], %70 {strides = array<i32>} : memref<16x32xf32, #tpu.memory_space<vmem>>, vector<1x32xf32>,
    %c4_72 = arith.constant 4 : index
    %c1_73 = arith.constant 1 : index
    %72 = memref.load %arg1[%c4_72, %c1_73] : memref<8x2xi32, #tpu.memory_space<smem>>
    %73 = arith.index_cast %72 : i32 to index
    %c0_74 = arith.constant 0 : index
    %74 = vector.load %arg2[%73, %c0_74] : memref<50x32xf32, #tpu.memory_space<vmem>>, vector<1x32xf32>
    %c4_75 = arith.constant 4 : index
    %c0_76 = arith.constant 0 : index
    %75 = vector.load %arg3[%c4_75, %c0_76] : memref<8x32xf32, #tpu.memory_space<vmem>>, vector<1x32xf32>
    %76 = arith.addf %74, %75 : vector<1x32xf32>
    %c12 = arith.constant 12 : index
    %c0_77 = arith.constant 0 : index
    %77 = vector.load %arg17[%c12, %c0_77] : memref<16x32xf32, #tpu.memory_space<vmem>>, vector<1x32xf32>
    tpu.vector_store %arg17[%c12, %c0_77], %76 {strides = array<i32>} : memref<16x32xf32, #tpu.memory_space<vmem>>, vector<1x32xf32>,
    %c5_78 = arith.constant 5 : index
    %c1_79 = arith.constant 1 : index
    %78 = memref.load %arg1[%c5_78, %c1_79] : memref<8x2xi32, #tpu.memory_space<smem>>
    %79 = arith.index_cast %78 : i32 to index
    %c0_80 = arith.constant 0 : index
    %80 = vector.load %arg2[%79, %c0_80] : memref<50x32xf32, #tpu.memory_space<vmem>>, vector<1x32xf32>
    %c5_81 = arith.constant 5 : index
    %c0_82 = arith.constant 0 : index
    %81 = vector.load %arg3[%c5_81, %c0_82] : memref<8x32xf32, #tpu.memory_space<vmem>>, vector<1x32xf32>
    %82 = arith.addf %80, %81 : vector<1x32xf32>
    %c13 = arith.constant 13 : index
    %c0_83 = arith.constant 0 : index
    %83 = vector.load %arg17[%c13, %c0_83] : memref<16x32xf32, #tpu.memory_space<vmem>>, vector<1x32xf32>
    tpu.vector_store %arg17[%c13, %c0_83], %82 {strides = array<i32>} : memref<16x32xf32, #tpu.memory_space<vmem>>, vector<1x32xf32>,
    %c6_84 = arith.constant 6 : index
    %c1_85 = arith.constant 1 : index
    %84 = memref.load %arg1[%c6_84, %c1_85] : memref<8x2xi32, #tpu.memory_space<smem>>
    %85 = arith.index_cast %84 : i32 to index
    %c0_86 = arith.constant 0 : index
    %86 = vector.load %arg2[%85, %c0_86] : memref<50x32xf32, #tpu.memory_space<vmem>>, vector<1x32xf32>
    %c6_87 = arith.constant 6 : index
    %c0_88 = arith.constant 0 : index
    %87 = vector.load %arg3[%c6_87, %c0_88] : memref<8x32xf32, #tpu.memory_space<vmem>>, vector<1x32xf32>
    %88 = arith.addf %86, %87 : vector<1x32xf32>
    %c14 = arith.constant 14 : index
    %c0_89 = arith.constant 0 : index
    %89 = vector.load %arg17[%c14, %c0_89] : memref<16x32xf32, #tpu.memory_space<vmem>>, vector<1x32xf32>
    tpu.vector_store %arg17[%c14, %c0_89], %88 {strides = array<i32>} : memref<16x32xf32, #tpu.memory_space<vmem>>, vector<1x32xf32>,
    %c7_90 = arith.constant 7 : index
    %c1_91 = arith.constant 1 : index
    %90 = memref.load %arg1[%c7_90, %c1_91] : memref<8x2xi32, #tpu.memory_space<smem>>
    %91 = arith.index_cast %90 : i32 to index
    %c0_92 = arith.constant 0 : index
    %92 = vector.load %arg2[%91, %c0_92] : memref<50x32xf32, #tpu.memory_space<vmem>>, vector<1x32xf32>
    %c7_93 = arith.constant 7 : index
    %c0_94 = arith.constant 0 : index
    %93 = vector.load %arg3[%c7_93, %c0_94] : memref<8x32xf32, #tpu.memory_space<vmem>>, vector<1x32xf32>
    %94 = arith.addf %92, %93 : vector<1x32xf32>
    %c15 = arith.constant 15 : index
    %c0_95 = arith.constant 0 : index
    %95 = vector.load %arg17[%c15, %c0_95] : memref<16x32xf32, #tpu.memory_space<vmem>>, vector<1x32xf32>
    tpu.vector_store %arg17[%c15, %c0_95], %94 {strides = array<i32>} : memref<16x32xf32, #tpu.memory_space<vmem>>, vector<1x32xf32>,
    %c0_96 = arith.constant 0 : index
    %c0_97 = arith.constant 0 : index
    %96 = vector.load %arg17[%c0_96, %c0_97] : memref<16x32xf32, #tpu.memory_space<vmem>>, vector<16x32xf32>
    %97 = arith.truncf %96 : vector<16x32xf32> to vector<16x32xbf16>
    %cst = arith.constant 0.000000e+00 : f32
    %98 = vector.broadcast %cst : f32 to vector<16x32xf32>
    %c0_98 = arith.constant 0 : index
    %c0_99 = arith.constant 0 : index
    %c0_100 = arith.constant 0 : index
    %c0_101 = arith.constant 0 : index
    %c0_102 = arith.constant 0 : index
    %99 = vector.load %arg4[%c0_98, %c0_99, %c0_100, %c0_101, %c0_102] : memref<2x3x4x32x8xbf16, #tpu.memory_space<vmem>>, vector<1x1x1x32x8xbf16>
    %100 = vector.shape_cast %99 : vector<1x1x1x32x8xbf16> to vector<32x8xbf16>
    %cst_103 = arith.constant dense<0.000000e+00> : vector<16x8xf32>
    %101 = tpu.matmul %97, %100, %cst_103 {dimension_numbers = #tpu.dot_dimension_numbers<[1], [0], [0], [1], [0, 0, 1, 1], [], []>} : vector<16x32xbf16>, vector<32x8xbf16>, vector<16x8xf32> -> vector<16x8xf32>
    %c0_104 = arith.constant 0 : index
    %c0_105 = arith.constant 0 : index
    %c0_106 = arith.constant 0 : index
    %c0_107 = arith.constant 0 : index
    %c0_108 = arith.constant 0 : index
    %102 = vector.load %arg5[%c0_104, %c0_105, %c0_106, %c0_107, %c0_108] : memref<2x3x4x1x8xf32, #tpu.memory_space<vmem>>, vector<1x1x1x1x8xf32>
    %103 = vector.shape_cast %102 : vector<1x1x1x1x8xf32> to vector<1x8xf32>
    %104 = vector.broadcast %103 : vector<1x8xf32> to vector<16x8xf32>
    %105 = arith.addf %101, %104 : vector<16x8xf32>
    %106 = vector.shape_cast %105 : vector<16x8xf32> to vector<2x8x8xf32>
    %c0_109 = arith.constant 0 : index
    %c1_110 = arith.constant 1 : index
    %c0_111 = arith.constant 0 : index
    %c0_112 = arith.constant 0 : index
    %c0_113 = arith.constant 0 : index
    %107 = vector.load %arg4[%c0_109, %c1_110, %c0_111, %c0_112, %c0_113] : memref<2x3x4x32x8xbf16, #tpu.memory_space<vmem>>, vector<1x1x1x32x8xbf16>
    %108 = vector.shape_cast %107 : vector<1x1x1x32x8xbf16> to vector<32x8xbf16>
    %cst_114 = arith.constant dense<0.000000e+00> : vector<16x8xf32>
    %109 = tpu.matmul %97, %108, %cst_114 {dimension_numbers = #tpu.dot_dimension_numbers<[1], [0], [0], [1], [0, 0, 1, 1], [], []>} : vector<16x32xbf16>, vector<32x8xbf16>, vector<16x8xf32> -> vector<16x8xf32>
    %c0_115 = arith.constant 0 : index
    %c1_116 = arith.constant 1 : index
    %c0_117 = arith.constant 0 : index
    %c0_118 = arith.constant 0 : index
    %c0_119 = arith.constant 0 : index
    %110 = vector.load %arg5[%c0_115, %c1_116, %c0_117, %c0_118, %c0_119] : memref<2x3x4x1x8xf32, #tpu.memory_space<vmem>>, vector<1x1x1x1x8xf32>
    %111 = vector.shape_cast %110 : vector<1x1x1x1x8xf32> to vector<1x8xf32>
    %112 = vector.broadcast %111 : vector<1x8xf32> to vector<16x8xf32>
    %113 = arith.addf %109, %112 : vector<16x8xf32>
    %114 = vector.shape_cast %113 : vector<16x8xf32> to vector<2x8x8xf32>
    %c0_120 = arith.constant 0 : index
    %c2_121 = arith.constant 2 : index
    %c0_122 = arith.constant 0 : index
    %c0_123 = arith.constant 0 : index
    %c0_124 = arith.constant 0 : index
    %115 = vector.load %arg4[%c0_120, %c2_121, %c0_122, %c0_123, %c0_124] : memref<2x3x4x32x8xbf16, #tpu.memory_space<vmem>>, vector<1x1x1x32x8xbf16>
    %116 = vector.shape_cast %115 : vector<1x1x1x32x8xbf16> to vector<32x8xbf16>
    %cst_125 = arith.constant dense<0.000000e+00> : vector<16x8xf32>
    %117 = tpu.matmul %97, %116, %cst_125 {dimension_numbers = #tpu.dot_dimension_numbers<[1], [0], [0], [1], [0, 0, 1, 1], [], []>} : vector<16x32xbf16>, vector<32x8xbf16>, vector<16x8xf32> -> vector<16x8xf32>
    %c0_126 = arith.constant 0 : index
    %c2_127 = arith.constant 2 : index
    %c0_128 = arith.constant 0 : index
    %c0_129 = arith.constant 0 : index
    %c0_130 = arith.constant 0 : index
    %118 = vector.load %arg5[%c0_126, %c2_127, %c0_128, %c0_129, %c0_130] : memref<2x3x4x1x8xf32, #tpu.memory_space<vmem>>, vector<1x1x1x1x8xf32>
    %119 = vector.shape_cast %118 : vector<1x1x1x1x8xf32> to vector<1x8xf32>
    %120 = vector.broadcast %119 : vector<1x8xf32> to vector<16x8xf32>
    %121 = arith.addf %117, %120 : vector<16x8xf32>
    %122 = vector.shape_cast %121 : vector<16x8xf32> to vector<2x8x8xf32>
    %123 = arith.truncf %106 : vector<2x8x8xf32> to vector<2x8x8xbf16>
    %124 = arith.truncf %114 : vector<2x8x8xf32> to vector<2x8x8xbf16>
    "tpu.trace_start"() <{level = 10 : i32, message = "bqd,bkd->bqk"}> : () -> ()
    %cst_131 = arith.constant dense<0.000000e+00> : vector<2x8x8xf32>
    %125 = tpu.matmul %123, %124, %cst_131 {dimension_numbers = #tpu.dot_dimension_numbers<[2], [2], [1], [1], [0, 0, 0, 1, 1, 1], [0], [0]>} : vector<2x8x8xbf16>, vector<2x8x8xbf16>, vector<2x8x8xf32> -> vector<2x8x8xf32>
    "tpu.trace_stop"() : () -> ()
    %cst_132 = arith.constant 0.353553385 : f32
    %126 = vector.broadcast %cst_132 : f32 to vector<2x8x8xf32>
    %127 = arith.mulf %125, %126 : vector<2x8x8xf32>
    %cst_133 = arith.constant dense<0xFF800000> : vector<2x8xf32>
    %128 = vector.multi_reduction <maximumf>, %127, %cst_133 [2] : vector<2x8x8xf32> to vector<2x8xf32>
    %129 = vector.shape_cast %128 : vector<2x8xf32> to vector<2x8x1xf32>
    %130 = vector.broadcast %129 : vector<2x8x1xf32> to vector<2x8x8xf32>
    %131 = arith.subf %127, %130 : vector<2x8x8xf32>
    %132 = math.exp %131 : vector<2x8x8xf32>
    %cst_134 = arith.constant dense<0.000000e+00> : vector<2x8xf32>
    %133 = vector.multi_reduction <add>, %132, %cst_134 [2] : vector<2x8x8xf32> to vector<2x8xf32>
    %134 = vector.shape_cast %133 : vector<2x8xf32> to vector<2x8x1xf32>
    %135 = tpu.reciprocal %134 {approx = true} : vector<2x8x1xf32> -> vector<2x8x1xf32>
    %136 = vector.broadcast %135 : vector<2x8x1xf32> to vector<2x8x8xf32>
    %137 = arith.mulf %132, %136 : vector<2x8x8xf32>
    %138 = arith.truncf %137 : vector<2x8x8xf32> to vector<2x8x8xbf16>
    %139 = arith.truncf %122 : vector<2x8x8xf32> to vector<2x8x8xbf16>
    "tpu.trace_start"() <{level = 10 : i32, message = "bqk,bkd->bqd"}> : () -> ()
    %cst_135 = arith.constant dense<0.000000e+00> : vector<2x8x8xf32>
    %140 = tpu.matmul %138, %139, %cst_135 {dimension_numbers = #tpu.dot_dimension_numbers<[2], [1], [1], [2], [0, 0, 0, 1, 1, 2], [0], [0]>} : vector<2x8x8xbf16>, vector<2x8x8xbf16>, vector<2x8x8xf32> -> vector<2x8x8xf32>
    "tpu.trace_stop"() : () -> ()
    %141 = vector.shape_cast %140 : vector<2x8x8xf32> to vector<16x8xf32>
    %142 = arith.truncf %141 : vector<16x8xf32> to vector<16x8xbf16>
    %c0_136 = arith.constant 0 : index
    %c0_137 = arith.constant 0 : index
    %c0_138 = arith.constant 0 : index
    %c0_139 = arith.constant 0 : index
    %143 = vector.load %arg6[%c0_136, %c0_137, %c0_138, %c0_139] : memref<2x4x8x32xbf16, #tpu.memory_space<vmem>>, vector<1x1x8x32xbf16>
    %144 = vector.shape_cast %143 : vector<1x1x8x32xbf16> to vector<8x32xbf16>
    %cst_140 = arith.constant dense<0.000000e+00> : vector<16x32xf32>
    %145 = tpu.matmul %142, %144, %cst_140 {dimension_numbers = #tpu.dot_dimension_numbers<[1], [0], [0], [1], [0, 0, 1, 1], [], []>} : vector<16x8xbf16>, vector<8x32xbf16>, vector<16x32xf32> -> vector<16x32xf32>
    %146 = arith.addf %98, %145 : vector<16x32xf32>
    %c0_141 = arith.constant 0 : index
    %c0_142 = arith.constant 0 : index
    %c1_143 = arith.constant 1 : index
    %c0_144 = arith.constant 0 : index
    %c0_145 = arith.constant 0 : index
    %147 = vector.load %arg4[%c0_141, %c0_142, %c1_143, %c0_144, %c0_145] : memref<2x3x4x32x8xbf16, #tpu.memory_space<vmem>>, vector<1x1x1x32x8xbf16>
    %148 = vector.shape_cast %147 : vector<1x1x1x32x8xbf16> to vector<32x8xbf16>
    %cst_146 = arith.constant dense<0.000000e+00> : vector<16x8xf32>
    %149 = tpu.matmul %97, %148, %cst_146 {dimension_numbers = #tpu.dot_dimension_numbers<[1], [0], [0], [1], [0, 0, 1, 1], [], []>} : vector<16x32xbf16>, vector<32x8xbf16>, vector<16x8xf32> -> vector<16x8xf32>
    %c0_147 = arith.constant 0 : index
    %c0_148 = arith.constant 0 : index
    %c1_149 = arith.constant 1 : index
    %c0_150 = arith.constant 0 : index
    %c0_151 = arith.constant 0 : index
    %150 = vector.load %arg5[%c0_147, %c0_148, %c1_149, %c0_150, %c0_151] : memref<2x3x4x1x8xf32, #tpu.memory_space<vmem>>, vector<1x1x1x1x8xf32>
    %151 = vector.shape_cast %150 : vector<1x1x1x1x8xf32> to vector<1x8xf32>
    %152 = vector.broadcast %151 : vector<1x8xf32> to vector<16x8xf32>
    %153 = arith.addf %149, %152 : vector<16x8xf32>
    %154 = vector.shape_cast %153 : vector<16x8xf32> to vector<2x8x8xf32>
    %c0_152 = arith.constant 0 : index
    %c1_153 = arith.constant 1 : index
    %c1_154 = arith.constant 1 : index
    %c0_155 = arith.constant 0 : index
    %c0_156 = arith.constant 0 : index
    %155 = vector.load %arg4[%c0_152, %c1_153, %c1_154, %c0_155, %c0_156] : memref<2x3x4x32x8xbf16, #tpu.memory_space<vmem>>, vector<1x1x1x32x8xbf16>
    %156 = vector.shape_cast %155 : vector<1x1x1x32x8xbf16> to vector<32x8xbf16>
    %cst_157 = arith.constant dense<0.000000e+00> : vector<16x8xf32>
    %157 = tpu.matmul %97, %156, %cst_157 {dimension_numbers = #tpu.dot_dimension_numbers<[1], [0], [0], [1], [0, 0, 1, 1], [], []>} : vector<16x32xbf16>, vector<32x8xbf16>, vector<16x8xf32> -> vector<16x8xf32>
    %c0_158 = arith.constant 0 : index
    %c1_159 = arith.constant 1 : index
    %c1_160 = arith.constant 1 : index
    %c0_161 = arith.constant 0 : index
    %c0_162 = arith.constant 0 : index
    %158 = vector.load %arg5[%c0_158, %c1_159, %c1_160, %c0_161, %c0_162] : memref<2x3x4x1x8xf32, #tpu.memory_space<vmem>>, vector<1x1x1x1x8xf32>
    %159 = vector.shape_cast %158 : vector<1x1x1x1x8xf32> to vector<1x8xf32>
    %160 = vector.broadcast %159 : vector<1x8xf32> to vector<16x8xf32>
    %161 = arith.addf %157, %160 : vector<16x8xf32>
    %162 = vector.shape_cast %161 : vector<16x8xf32> to vector<2x8x8xf32>
    %c0_163 = arith.constant 0 : index
    %c2_164 = arith.constant 2 : index
    %c1_165 = arith.constant 1 : index
    %c0_166 = arith.constant 0 : index
    %c0_167 = arith.constant 0 : index
    %163 = vector.load %arg4[%c0_163, %c2_164, %c1_165, %c0_166, %c0_167] : memref<2x3x4x32x8xbf16, #tpu.memory_space<vmem>>, vector<1x1x1x32x8xbf16>
    %164 = vector.shape_cast %163 : vector<1x1x1x32x8xbf16> to vector<32x8xbf16>
    %cst_168 = arith.constant dense<0.000000e+00> : vector<16x8xf32>
    %165 = tpu.matmul %97, %164, %cst_168 {dimension_numbers = #tpu.dot_dimension_numbers<[1], [0], [0], [1], [0, 0, 1, 1], [], []>} : vector<16x32xbf16>, vector<32x8xbf16>, vector<16x8xf32> -> vector<16x8xf32>
    %c0_169 = arith.constant 0 : index
    %c2_170 = arith.constant 2 : index
    %c1_171 = arith.constant 1 : index
    %c0_172 = arith.constant 0 : index
    %c0_173 = arith.constant 0 : index
    %166 = vector.load %arg5[%c0_169, %c2_170, %c1_171, %c0_172, %c0_173] : memref<2x3x4x1x8xf32, #tpu.memory_space<vmem>>, vector<1x1x1x1x8xf32>
    %167 = vector.shape_cast %166 : vector<1x1x1x1x8xf32> to vector<1x8xf32>
    %168 = vector.broadcast %167 : vector<1x8xf32> to vector<16x8xf32>
    %169 = arith.addf %165, %168 : vector<16x8xf32>
    %170 = vector.shape_cast %169 : vector<16x8xf32> to vector<2x8x8xf32>
    %171 = arith.truncf %154 : vector<2x8x8xf32> to vector<2x8x8xbf16>
    %172 = arith.truncf %162 : vector<2x8x8xf32> to vector<2x8x8xbf16>
    "tpu.trace_start"() <{level = 10 : i32, message = "bqd,bkd->bqk"}> : () -> ()
    %cst_174 = arith.constant dense<0.000000e+00> : vector<2x8x8xf32>
    %173 = tpu.matmul %171, %172, %cst_174 {dimension_numbers = #tpu.dot_dimension_numbers<[2], [2], [1], [1], [0, 0, 0, 1, 1, 1], [0], [0]>} : vector<2x8x8xbf16>, vector<2x8x8xbf16>, vector<2x8x8xf32> -> vector<2x8x8xf32>
    "tpu.trace_stop"() : () -> ()
    %cst_175 = arith.constant 0.353553385 : f32
    %174 = vector.broadcast %cst_175 : f32 to vector<2x8x8xf32>
    %175 = arith.mulf %173, %174 : vector<2x8x8xf32>
    %cst_176 = arith.constant dense<0xFF800000> : vector<2x8xf32>
    %176 = vector.multi_reduction <maximumf>, %175, %cst_176 [2] : vector<2x8x8xf32> to vector<2x8xf32>
    %177 = vector.shape_cast %176 : vector<2x8xf32> to vector<2x8x1xf32>
    %178 = vector.broadcast %177 : vector<2x8x1xf32> to vector<2x8x8xf32>
    %179 = arith.subf %175, %178 : vector<2x8x8xf32>
    %180 = math.exp %179 : vector<2x8x8xf32>
    %cst_177 = arith.constant dense<0.000000e+00> : vector<2x8xf32>
    %181 = vector.multi_reduction <add>, %180, %cst_177 [2] : vector<2x8x8xf32> to vector<2x8xf32>
    %182 = vector.shape_cast %181 : vector<2x8xf32> to vector<2x8x1xf32>
    %183 = tpu.reciprocal %182 {approx = true} : vector<2x8x1xf32> -> vector<2x8x1xf32>
    %184 = vector.broadcast %183 : vector<2x8x1xf32> to vector<2x8x8xf32>
    %185 = arith.mulf %180, %184 : vector<2x8x8xf32>
    %186 = arith.truncf %185 : vector<2x8x8xf32> to vector<2x8x8xbf16>
    %187 = arith.truncf %170 : vector<2x8x8xf32> to vector<2x8x8xbf16>
    "tpu.trace_start"() <{level = 10 : i32, message = "bqk,bkd->bqd"}> : () -> ()
    %cst_178 = arith.constant dense<0.000000e+00> : vector<2x8x8xf32>
    %188 = tpu.matmul %186, %187, %cst_178 {dimension_numbers = #tpu.dot_dimension_numbers<[2], [1], [1], [2], [0, 0, 0, 1, 1, 2], [0], [0]>} : vector<2x8x8xbf16>, vector<2x8x8xbf16>, vector<2x8x8xf32> -> vector<2x8x8xf32>
    "tpu.trace_stop"() : () -> ()
    %189 = vector.shape_cast %188 : vector<2x8x8xf32> to vector<16x8xf32>
    %190 = arith.truncf %189 : vector<16x8xf32> to vector<16x8xbf16>
    %c0_179 = arith.constant 0 : index
    %c1_180 = arith.constant 1 : index
    %c0_181 = arith.constant 0 : index
    %c0_182 = arith.constant 0 : index
    %191 = vector.load %arg6[%c0_179, %c1_180, %c0_181, %c0_182] : memref<2x4x8x32xbf16, #tpu.memory_space<vmem>>, vector<1x1x8x32xbf16>
    %192 = vector.shape_cast %191 : vector<1x1x8x32xbf16> to vector<8x32xbf16>
    %cst_183 = arith.constant dense<0.000000e+00> : vector<16x32xf32>
    %193 = tpu.matmul %190, %192, %cst_183 {dimension_numbers = #tpu.dot_dimension_numbers<[1], [0], [0], [1], [0, 0, 1, 1], [], []>} : vector<16x8xbf16>, vector<8x32xbf16>, vector<16x32xf32> -> vector<16x32xf32>
    %194 = arith.addf %146, %193 : vector<16x32xf32>
    %c0_184 = arith.constant 0 : index
    %c0_185 = arith.constant 0 : index
    %c2_186 = arith.constant 2 : index
    %c0_187 = arith.constant 0 : index
    %c0_188 = arith.constant 0 : index
    %195 = vector.load %arg4[%c0_184, %c0_185, %c2_186, %c0_187, %c0_188] : memref<2x3x4x32x8xbf16, #tpu.memory_space<vmem>>, vector<1x1x1x32x8xbf16>
    %196 = vector.shape_cast %195 : vector<1x1x1x32x8xbf16> to vector<32x8xbf16>
    %cst_189 = arith.constant dense<0.000000e+00> : vector<16x8xf32>
    %197 = tpu.matmul %97, %196, %cst_189 {dimension_numbers = #tpu.dot_dimension_numbers<[1], [0], [0], [1], [0, 0, 1, 1], [], []>} : vector<16x32xbf16>, vector<32x8xbf16>, vector<16x8xf32> -> vector<16x8xf32>
    %c0_190 = arith.constant 0 : index
    %c0_191 = arith.constant 0 : index
    %c2_192 = arith.constant 2 : index
    %c0_193 = arith.constant 0 : index
    %c0_194 = arith.constant 0 : index
    %198 = vector.load %arg5[%c0_190, %c0_191, %c2_192, %c0_193, %c0_194] : memref<2x3x4x1x8xf32, #tpu.memory_space<vmem>>, vector<1x1x1x1x8xf32>
    %199 = vector.shape_cast %198 : vector<1x1x1x1x8xf32> to vector<1x8xf32>
    %200 = vector.broadcast %199 : vector<1x8xf32> to vector<16x8xf32>
    %201 = arith.addf %197, %200 : vector<16x8xf32>
    %202 = vector.shape_cast %201 : vector<16x8xf32> to vector<2x8x8xf32>
    %c0_195 = arith.constant 0 : index
    %c1_196 = arith.constant 1 : index
    %c2_197 = arith.constant 2 : index
    %c0_198 = arith.constant 0 : index
    %c0_199 = arith.constant 0 : index
    %203 = vector.load %arg4[%c0_195, %c1_196, %c2_197, %c0_198, %c0_199] : memref<2x3x4x32x8xbf16, #tpu.memory_space<vmem>>, vector<1x1x1x32x8xbf16>
    %204 = vector.shape_cast %203 : vector<1x1x1x32x8xbf16> to vector<32x8xbf16>
    %cst_200 = arith.constant dense<0.000000e+00> : vector<16x8xf32>
    %205 = tpu.matmul %97, %204, %cst_200 {dimension_numbers = #tpu.dot_dimension_numbers<[1], [0], [0], [1], [0, 0, 1, 1], [], []>} : vector<16x32xbf16>, vector<32x8xbf16>, vector<16x8xf32> -> vector<16x8xf32>
    %c0_201 = arith.constant 0 : index
    %c1_202 = arith.constant 1 : index
    %c2_203 = arith.constant 2 : index
    %c0_204 = arith.constant 0 : index
    %c0_205 = arith.constant 0 : index
    %206 = vector.load %arg5[%c0_201, %c1_202, %c2_203, %c0_204, %c0_205] : memref<2x3x4x1x8xf32, #tpu.memory_space<vmem>>, vector<1x1x1x1x8xf32>
    %207 = vector.shape_cast %206 : vector<1x1x1x1x8xf32> to vector<1x8xf32>
    %208 = vector.broadcast %207 : vector<1x8xf32> to vector<16x8xf32>
    %209 = arith.addf %205, %208 : vector<16x8xf32>
    %210 = vector.shape_cast %209 : vector<16x8xf32> to vector<2x8x8xf32>
    %c0_206 = arith.constant 0 : index
    %c2_207 = arith.constant 2 : index
    %c2_208 = arith.constant 2 : index
    %c0_209 = arith.constant 0 : index
    %c0_210 = arith.constant 0 : index
    %211 = vector.load %arg4[%c0_206, %c2_207, %c2_208, %c0_209, %c0_210] : memref<2x3x4x32x8xbf16, #tpu.memory_space<vmem>>, vector<1x1x1x32x8xbf16>
    %212 = vector.shape_cast %211 : vector<1x1x1x32x8xbf16> to vector<32x8xbf16>
    %cst_211 = arith.constant dense<0.000000e+00> : vector<16x8xf32>
    %213 = tpu.matmul %97, %212, %cst_211 {dimension_numbers = #tpu.dot_dimension_numbers<[1], [0], [0], [1], [0, 0, 1, 1], [], []>} : vector<16x32xbf16>, vector<32x8xbf16>, vector<16x8xf32> -> vector<16x8xf32>
    %c0_212 = arith.constant 0 : index
    %c2_213 = arith.constant 2 : index
    %c2_214 = arith.constant 2 : index
    %c0_215 = arith.constant 0 : index
    %c0_216 = arith.constant 0 : index
    %214 = vector.load %arg5[%c0_212, %c2_213, %c2_214, %c0_215, %c0_216] : memref<2x3x4x1x8xf32, #tpu.memory_space<vmem>>, vector<1x1x1x1x8xf32>
    %215 = vector.shape_cast %214 : vector<1x1x1x1x8xf32> to vector<1x8xf32>
    %216 = vector.broadcast %215 : vector<1x8xf32> to vector<16x8xf32>
    %217 = arith.addf %213, %216 : vector<16x8xf32>
    %218 = vector.shape_cast %217 : vector<16x8xf32> to vector<2x8x8xf32>
    %219 = arith.truncf %202 : vector<2x8x8xf32> to vector<2x8x8xbf16>
    %220 = arith.truncf %210 : vector<2x8x8xf32> to vector<2x8x8xbf16>
    "tpu.trace_start"() <{level = 10 : i32, message = "bqd,bkd->bqk"}> : () -> ()
    %cst_217 = arith.constant dense<0.000000e+00> : vector<2x8x8xf32>
    %221 = tpu.matmul %219, %220, %cst_217 {dimension_numbers = #tpu.dot_dimension_numbers<[2], [2], [1], [1], [0, 0, 0, 1, 1, 1], [0], [0]>} : vector<2x8x8xbf16>, vector<2x8x8xbf16>, vector<2x8x8xf32> -> vector<2x8x8xf32>
    "tpu.trace_stop"() : () -> ()
    %cst_218 = arith.constant 0.353553385 : f32
    %222 = vector.broadcast %cst_218 : f32 to vector<2x8x8xf32>
    %223 = arith.mulf %221, %222 : vector<2x8x8xf32>
    %cst_219 = arith.constant dense<0xFF800000> : vector<2x8xf32>
    %224 = vector.multi_reduction <maximumf>, %223, %cst_219 [2] : vector<2x8x8xf32> to vector<2x8xf32>
    %225 = vector.shape_cast %224 : vector<2x8xf32> to vector<2x8x1xf32>
    %226 = vector.broadcast %225 : vector<2x8x1xf32> to vector<2x8x8xf32>
    %227 = arith.subf %223, %226 : vector<2x8x8xf32>
    %228 = math.exp %227 : vector<2x8x8xf32>
    %cst_220 = arith.constant dense<0.000000e+00> : vector<2x8xf32>
    %229 = vector.multi_reduction <add>, %228, %cst_220 [2] : vector<2x8x8xf32> to vector<2x8xf32>
    %230 = vector.shape_cast %229 : vector<2x8xf32> to vector<2x8x1xf32>
    %231 = tpu.reciprocal %230 {approx = true} : vector<2x8x1xf32> -> vector<2x8x1xf32>
    %232 = vector.broadcast %231 : vector<2x8x1xf32> to vector<2x8x8xf32>
    %233 = arith.mulf %228, %232 : vector<2x8x8xf32>
    %234 = arith.truncf %233 : vector<2x8x8xf32> to vector<2x8x8xbf16>
    %235 = arith.truncf %218 : vector<2x8x8xf32> to vector<2x8x8xbf16>
    "tpu.trace_start"() <{level = 10 : i32, message = "bqk,bkd->bqd"}> : () -> ()
    %cst_221 = arith.constant dense<0.000000e+00> : vector<2x8x8xf32>
    %236 = tpu.matmul %234, %235, %cst_221 {dimension_numbers = #tpu.dot_dimension_numbers<[2], [1], [1], [2], [0, 0, 0, 1, 1, 2], [0], [0]>} : vector<2x8x8xbf16>, vector<2x8x8xbf16>, vector<2x8x8xf32> -> vector<2x8x8xf32>
    "tpu.trace_stop"() : () -> ()
    %237 = vector.shape_cast %236 : vector<2x8x8xf32> to vector<16x8xf32>
    %238 = arith.truncf %237 : vector<16x8xf32> to vector<16x8xbf16>
    %c0_222 = arith.constant 0 : index
    %c2_223 = arith.constant 2 : index
    %c0_224 = arith.constant 0 : index
    %c0_225 = arith.constant 0 : index
    %239 = vector.load %arg6[%c0_222, %c2_223, %c0_224, %c0_225] : memref<2x4x8x32xbf16, #tpu.memory_space<vmem>>, vector<1x1x8x32xbf16>
    %240 = vector.shape_cast %239 : vector<1x1x8x32xbf16> to vector<8x32xbf16>
    %cst_226 = arith.constant dense<0.000000e+00> : vector<16x32xf32>
    %241 = tpu.matmul %238, %240, %cst_226 {dimension_numbers = #tpu.dot_dimension_numbers<[1], [0], [0], [1], [0, 0, 1, 1], [], []>} : vector<16x8xbf16>, vector<8x32xbf16>, vector<16x32xf32> -> vector<16x32xf32>
    %242 = arith.addf %194, %241 : vector<16x32xf32>
    %c0_227 = arith.constant 0 : index
    %c0_228 = arith.constant 0 : index
    %c3_229 = arith.constant 3 : index
    %c0_230 = arith.constant 0 : index
    %c0_231 = arith.constant 0 : index
    %243 = vector.load %arg4[%c0_227, %c0_228, %c3_229, %c0_230, %c0_231] : memref<2x3x4x32x8xbf16, #tpu.memory_space<vmem>>, vector<1x1x1x32x8xbf16>
    %244 = vector.shape_cast %243 : vector<1x1x1x32x8xbf16> to vector<32x8xbf16>
    %cst_232 = arith.constant dense<0.000000e+00> : vector<16x8xf32>
    %245 = tpu.matmul %97, %244, %cst_232 {dimension_numbers = #tpu.dot_dimension_numbers<[1], [0], [0], [1], [0, 0, 1, 1], [], []>} : vector<16x32xbf16>, vector<32x8xbf16>, vector<16x8xf32> -> vector<16x8xf32>
    %c0_233 = arith.constant 0 : index
    %c0_234 = arith.constant 0 : index
    %c3_235 = arith.constant 3 : index
    %c0_236 = arith.constant 0 : index
    %c0_237 = arith.constant 0 : index
    %246 = vector.load %arg5[%c0_233, %c0_234, %c3_235, %c0_236, %c0_237] : memref<2x3x4x1x8xf32, #tpu.memory_space<vmem>>, vector<1x1x1x1x8xf32>
    %247 = vector.shape_cast %246 : vector<1x1x1x1x8xf32> to vector<1x8xf32>
    %248 = vector.broadcast %247 : vector<1x8xf32> to vector<16x8xf32>
    %249 = arith.addf %245, %248 : vector<16x8xf32>
    %250 = vector.shape_cast %249 : vector<16x8xf32> to vector<2x8x8xf32>
    %c0_238 = arith.constant 0 : index
    %c1_239 = arith.constant 1 : index
    %c3_240 = arith.constant 3 : index
    %c0_241 = arith.constant 0 : index
    %c0_242 = arith.constant 0 : index
    %251 = vector.load %arg4[%c0_238, %c1_239, %c3_240, %c0_241, %c0_242] : memref<2x3x4x32x8xbf16, #tpu.memory_space<vmem>>, vector<1x1x1x32x8xbf16>
    %252 = vector.shape_cast %251 : vector<1x1x1x32x8xbf16> to vector<32x8xbf16>
    %cst_243 = arith.constant dense<0.000000e+00> : vector<16x8xf32>
    %253 = tpu.matmul %97, %252, %cst_243 {dimension_numbers = #tpu.dot_dimension_numbers<[1], [0], [0], [1], [0, 0, 1, 1], [], []>} : vector<16x32xbf16>, vector<32x8xbf16>, vector<16x8xf32> -> vector<16x8xf32>
    %c0_244 = arith.constant 0 : index
    %c1_245 = arith.constant 1 : index
    %c3_246 = arith.constant 3 : index
    %c0_247 = arith.constant 0 : index
    %c0_248 = arith.constant 0 : index
    %254 = vector.load %arg5[%c0_244, %c1_245, %c3_246, %c0_247, %c0_248] : memref<2x3x4x1x8xf32, #tpu.memory_space<vmem>>, vector<1x1x1x1x8xf32>
    %255 = vector.shape_cast %254 : vector<1x1x1x1x8xf32> to vector<1x8xf32>
    %256 = vector.broadcast %255 : vector<1x8xf32> to vector<16x8xf32>
    %257 = arith.addf %253, %256 : vector<16x8xf32>
    %258 = vector.shape_cast %257 : vector<16x8xf32> to vector<2x8x8xf32>
    %c0_249 = arith.constant 0 : index
    %c2_250 = arith.constant 2 : index
    %c3_251 = arith.constant 3 : index
    %c0_252 = arith.constant 0 : index
    %c0_253 = arith.constant 0 : index
    %259 = vector.load %arg4[%c0_249, %c2_250, %c3_251, %c0_252, %c0_253] : memref<2x3x4x32x8xbf16, #tpu.memory_space<vmem>>, vector<1x1x1x32x8xbf16>
    %260 = vector.shape_cast %259 : vector<1x1x1x32x8xbf16> to vector<32x8xbf16>
    %cst_254 = arith.constant dense<0.000000e+00> : vector<16x8xf32>
    %261 = tpu.matmul %97, %260, %cst_254 {dimension_numbers = #tpu.dot_dimension_numbers<[1], [0], [0], [1], [0, 0, 1, 1], [], []>} : vector<16x32xbf16>, vector<32x8xbf16>, vector<16x8xf32> -> vector<16x8xf32>
    %c0_255 = arith.constant 0 : index
    %c2_256 = arith.constant 2 : index
    %c3_257 = arith.constant 3 : index
    %c0_258 = arith.constant 0 : index
    %c0_259 = arith.constant 0 : index
    %262 = vector.load %arg5[%c0_255, %c2_256, %c3_257, %c0_258, %c0_259] : memref<2x3x4x1x8xf32, #tpu.memory_space<vmem>>, vector<1x1x1x1x8xf32>
    %263 = vector.shape_cast %262 : vector<1x1x1x1x8xf32> to vector<1x8xf32>
    %264 = vector.broadcast %263 : vector<1x8xf32> to vector<16x8xf32>
    %265 = arith.addf %261, %264 : vector<16x8xf32>
    %266 = vector.shape_cast %265 : vector<16x8xf32> to vector<2x8x8xf32>
    %267 = arith.truncf %250 : vector<2x8x8xf32> to vector<2x8x8xbf16>
    %268 = arith.truncf %258 : vector<2x8x8xf32> to vector<2x8x8xbf16>
    "tpu.trace_start"() <{level = 10 : i32, message = "bqd,bkd->bqk"}> : () -> ()
    %cst_260 = arith.constant dense<0.000000e+00> : vector<2x8x8xf32>
    %269 = tpu.matmul %267, %268, %cst_260 {dimension_numbers = #tpu.dot_dimension_numbers<[2], [2], [1], [1], [0, 0, 0, 1, 1, 1], [0], [0]>} : vector<2x8x8xbf16>, vector<2x8x8xbf16>, vector<2x8x8xf32> -> vector<2x8x8xf32>
    "tpu.trace_stop"() : () -> ()
    %cst_261 = arith.constant 0.353553385 : f32
    %270 = vector.broadcast %cst_261 : f32 to vector<2x8x8xf32>
    %271 = arith.mulf %269, %270 : vector<2x8x8xf32>
    %cst_262 = arith.constant dense<0xFF800000> : vector<2x8xf32>
    %272 = vector.multi_reduction <maximumf>, %271, %cst_262 [2] : vector<2x8x8xf32> to vector<2x8xf32>
    %273 = vector.shape_cast %272 : vector<2x8xf32> to vector<2x8x1xf32>
    %274 = vector.broadcast %273 : vector<2x8x1xf32> to vector<2x8x8xf32>
    %275 = arith.subf %271, %274 : vector<2x8x8xf32>
    %276 = math.exp %275 : vector<2x8x8xf32>
    %cst_263 = arith.constant dense<0.000000e+00> : vector<2x8xf32>
    %277 = vector.multi_reduction <add>, %276, %cst_263 [2] : vector<2x8x8xf32> to vector<2x8xf32>
    %278 = vector.shape_cast %277 : vector<2x8xf32> to vector<2x8x1xf32>
    %279 = tpu.reciprocal %278 {approx = true} : vector<2x8x1xf32> -> vector<2x8x1xf32>
    %280 = vector.broadcast %279 : vector<2x8x1xf32> to vector<2x8x8xf32>
    %281 = arith.mulf %276, %280 : vector<2x8x8xf32>
    %282 = arith.truncf %281 : vector<2x8x8xf32> to vector<2x8x8xbf16>
    %283 = arith.truncf %266 : vector<2x8x8xf32> to vector<2x8x8xbf16>
    "tpu.trace_start"() <{level = 10 : i32, message = "bqk,bkd->bqd"}> : () -> ()
    %cst_264 = arith.constant dense<0.000000e+00> : vector<2x8x8xf32>
    %284 = tpu.matmul %282, %283, %cst_264 {dimension_numbers = #tpu.dot_dimension_numbers<[2], [1], [1], [2], [0, 0, 0, 1, 1, 2], [0], [0]>} : vector<2x8x8xbf16>, vector<2x8x8xbf16>, vector<2x8x8xf32> -> vector<2x8x8xf32>
    "tpu.trace_stop"() : () -> ()
    %285 = vector.shape_cast %284 : vector<2x8x8xf32> to vector<16x8xf32>
    %286 = arith.truncf %285 : vector<16x8xf32> to vector<16x8xbf16>
    %c0_265 = arith.constant 0 : index
    %c3_266 = arith.constant 3 : index
    %c0_267 = arith.constant 0 : index
    %c0_268 = arith.constant 0 : index
    %287 = vector.load %arg6[%c0_265, %c3_266, %c0_267, %c0_268] : memref<2x4x8x32xbf16, #tpu.memory_space<vmem>>, vector<1x1x8x32xbf16>
    %288 = vector.shape_cast %287 : vector<1x1x8x32xbf16> to vector<8x32xbf16>
    %cst_269 = arith.constant dense<0.000000e+00> : vector<16x32xf32>
    %289 = tpu.matmul %286, %288, %cst_269 {dimension_numbers = #tpu.dot_dimension_numbers<[1], [0], [0], [1], [0, 0, 1, 1], [], []>} : vector<16x8xbf16>, vector<8x32xbf16>, vector<16x32xf32> -> vector<16x32xf32>
    %290 = arith.addf %242, %289 : vector<16x32xf32>
    %c0_270 = arith.constant 0 : index
    %c0_271 = arith.constant 0 : index
    %c0_272 = arith.constant 0 : index
    %291 = vector.load %arg7[%c0_270, %c0_271, %c0_272] : memref<2x1x32xf32, #tpu.memory_space<vmem>>, vector<1x1x32xf32>
    %292 = vector.shape_cast %291 : vector<1x1x32xf32> to vector<1x32xf32>
    %293 = vector.broadcast %292 : vector<1x32xf32> to vector<16x32xf32>
    %294 = arith.addf %290, %293 : vector<16x32xf32>
    %295 = arith.addf %96, %294 : vector<16x32xf32>
    %c0_273 = arith.constant 0 : index
    %c0_274 = arith.constant 0 : index
    %c0_275 = arith.constant 0 : index
    %c0_276 = arith.constant 0 : index
    %296 = vector.load %arg12[%c0_273, %c0_274, %c0_275, %c0_276] : memref<2x2x1x32xf32, #tpu.memory_space<vmem>>, vector<1x1x1x32xf32>
    %297 = vector.shape_cast %296 : vector<1x1x1x32xf32> to vector<1x32xf32>
    %c0_277 = arith.constant 0 : index
    %c0_278 = arith.constant 0 : index
    %c0_279 = arith.constant 0 : index
    %c0_280 = arith.constant 0 : index
    %298 = vector.load %arg13[%c0_277, %c0_278, %c0_279, %c0_280] : memref<2x2x1x32xf32, #tpu.memory_space<vmem>>, vector<1x1x1x32xf32>
    %299 = vector.shape_cast %298 : vector<1x1x1x32xf32> to vector<1x32xf32>
    %cst_281 = arith.constant dense<0.000000e+00> : vector<16xf32>
    %300 = vector.multi_reduction <add>, %295, %cst_281 [1] : vector<16x32xf32> to vector<16xf32>
    %301 = vector.shape_cast %300 : vector<16xf32> to vector<16x1xf32>
    %cst_282 = arith.constant 3.200000e+01 : f32
    %302 = vector.broadcast %cst_282 : f32 to vector<16x1xf32>
    %303 = arith.divf %301, %302 : vector<16x1xf32>
    %304 = vector.broadcast %303 : vector<16x1xf32> to vector<16x32xf32>
    %305 = arith.subf %295, %304 : vector<16x32xf32>
    %306 = arith.mulf %305, %305 : vector<16x32xf32>
    %cst_283 = arith.constant dense<0.000000e+00> : vector<16xf32>
    %307 = vector.multi_reduction <add>, %306, %cst_283 [1] : vector<16x32xf32> to vector<16xf32>
    %308 = vector.shape_cast %307 : vector<16xf32> to vector<16x1xf32>
    %cst_284 = arith.constant 3.200000e+01 : f32
    %309 = vector.broadcast %cst_284 : f32 to vector<16x1xf32>
    %310 = arith.divf %308, %309 : vector<16x1xf32>
    %cst_285 = arith.constant 9.99999974E-6 : f32
    %311 = vector.broadcast %cst_285 : f32 to vector<16x1xf32>
    %312 = arith.addf %310, %311 : vector<16x1xf32>
    %313 = math.rsqrt %312 : vector<16x1xf32>
    %314 = vector.broadcast %313 : vector<16x1xf32> to vector<16x32xf32>
    %315 = arith.mulf %305, %314 : vector<16x32xf32>
    %316 = vector.broadcast %297 : vector<1x32xf32> to vector<16x32xf32>
    %317 = arith.mulf %315, %316 : vector<16x32xf32>
    %318 = vector.broadcast %299 : vector<1x32xf32> to vector<16x32xf32>
    %319 = arith.addf %317, %318 : vector<16x32xf32>
    %320 = arith.truncf %319 : vector<16x32xf32> to vector<16x32xbf16>
    %c0_286 = arith.constant 0 : index
    %c0_287 = arith.constant 0 : index
    %c0_288 = arith.constant 0 : index
    %321 = vector.load %arg8[%c0_286, %c0_287, %c0_288] : memref<2x32x64xbf16, #tpu.memory_space<vmem>>, vector<1x32x64xbf16>
    %322 = vector.shape_cast %321 : vector<1x32x64xbf16> to vector<32x64xbf16>
    %cst_289 = arith.constant dense<0.000000e+00> : vector<16x64xf32>
    %323 = tpu.matmul %320, %322, %cst_289 {dimension_numbers = #tpu.dot_dimension_numbers<[1], [0], [0], [1], [0, 0, 1, 1], [], []>} : vector<16x32xbf16>, vector<32x64xbf16>, vector<16x64xf32> -> vector<16x64xf32>
    %c0_290 = arith.constant 0 : index
    %c0_291 = arith.constant 0 : index
    %c0_292 = arith.constant 0 : index
    %324 = vector.load %arg9[%c0_290, %c0_291, %c0_292] : memref<2x1x64xf32, #tpu.memory_space<vmem>>, vector<1x1x64xf32>
    %325 = vector.shape_cast %324 : vector<1x1x64xf32> to vector<1x64xf32>
    %326 = vector.broadcast %325 : vector<1x64xf32> to vector<16x64xf32>
    %327 = arith.addf %323, %326 : vector<16x64xf32>
    %cst_293 = arith.constant 0.000000e+00 : f32
    %328 = vector.broadcast %cst_293 : f32 to vector<16x64xf32>
    %329 = arith.maximumf %327, %328 : vector<16x64xf32>
    %330 = arith.truncf %329 : vector<16x64xf32> to vector<16x64xbf16>
    %c0_294 = arith.constant 0 : index
    %c0_295 = arith.constant 0 : index
    %c0_296 = arith.constant 0 : index
    %331 = vector.load %arg10[%c0_294, %c0_295, %c0_296] : memref<2x64x32xbf16, #tpu.memory_space<vmem>>, vector<1x64x32xbf16>
    %332 = vector.shape_cast %331 : vector<1x64x32xbf16> to vector<64x32xbf16>
    %cst_297 = arith.constant dense<0.000000e+00> : vector<16x32xf32>
    %333 = tpu.matmul %330, %332, %cst_297 {dimension_numbers = #tpu.dot_dimension_numbers<[1], [0], [0], [1], [0, 0, 1, 1], [], []>} : vector<16x64xbf16>, vector<64x32xbf16>, vector<16x32xf32> -> vector<16x32xf32>
    %c0_298 = arith.constant 0 : index
    %c0_299 = arith.constant 0 : index
    %c0_300 = arith.constant 0 : index
    %334 = vector.load %arg11[%c0_298, %c0_299, %c0_300] : memref<2x1x32xf32, #tpu.memory_space<vmem>>, vector<1x1x32xf32>
    %335 = vector.shape_cast %334 : vector<1x1x32xf32> to vector<1x32xf32>
    %336 = vector.broadcast %335 : vector<1x32xf32> to vector<16x32xf32>
    %337 = arith.addf %333, %336 : vector<16x32xf32>
    %338 = arith.addf %319, %337 : vector<16x32xf32>
    %c0_301 = arith.constant 0 : index
    %c1_302 = arith.constant 1 : index
    %c0_303 = arith.constant 0 : index
    %c0_304 = arith.constant 0 : index
    %339 = vector.load %arg12[%c0_301, %c1_302, %c0_303, %c0_304] : memref<2x2x1x32xf32, #tpu.memory_space<vmem>>, vector<1x1x1x32xf32>
    %340 = vector.shape_cast %339 : vector<1x1x1x32xf32> to vector<1x32xf32>
    %c0_305 = arith.constant 0 : index
    %c1_306 = arith.constant 1 : index
    %c0_307 = arith.constant 0 : index
    %c0_308 = arith.constant 0 : index
    %341 = vector.load %arg13[%c0_305, %c1_306, %c0_307, %c0_308] : memref<2x2x1x32xf32, #tpu.memory_space<vmem>>, vector<1x1x1x32xf32>
    %342 = vector.shape_cast %341 : vector<1x1x1x32xf32> to vector<1x32xf32>
    %cst_309 = arith.constant dense<0.000000e+00> : vector<16xf32>
    %343 = vector.multi_reduction <add>, %338, %cst_309 [1] : vector<16x32xf32> to vector<16xf32>
    %344 = vector.shape_cast %343 : vector<16xf32> to vector<16x1xf32>
    %cst_310 = arith.constant 3.200000e+01 : f32
    %345 = vector.broadcast %cst_310 : f32 to vector<16x1xf32>
    %346 = arith.divf %344, %345 : vector<16x1xf32>
    %347 = vector.broadcast %346 : vector<16x1xf32> to vector<16x32xf32>
    %348 = arith.subf %338, %347 : vector<16x32xf32>
    %349 = arith.mulf %348, %348 : vector<16x32xf32>
    %cst_311 = arith.constant dense<0.000000e+00> : vector<16xf32>
    %350 = vector.multi_reduction <add>, %349, %cst_311 [1] : vector<16x32xf32> to vector<16xf32>
    %351 = vector.shape_cast %350 : vector<16xf32> to vector<16x1xf32>
    %cst_312 = arith.constant 3.200000e+01 : f32
    %352 = vector.broadcast %cst_312 : f32 to vector<16x1xf32>
    %353 = arith.divf %351, %352 : vector<16x1xf32>
    %cst_313 = arith.constant 9.99999974E-6 : f32
    %354 = vector.broadcast %cst_313 : f32 to vector<16x1xf32>
    %355 = arith.addf %353, %354 : vector<16x1xf32>
    %356 = math.rsqrt %355 : vector<16x1xf32>
    %357 = vector.broadcast %356 : vector<16x1xf32> to vector<16x32xf32>
    %358 = arith.mulf %348, %357 : vector<16x32xf32>
    %359 = vector.broadcast %340 : vector<1x32xf32> to vector<16x32xf32>
    %360 = arith.mulf %358, %359 : vector<16x32xf32>
    %361 = vector.broadcast %342 : vector<1x32xf32> to vector<16x32xf32>
    %362 = arith.addf %360, %361 : vector<16x32xf32>
    %363 = arith.truncf %362 : vector<16x32xf32> to vector<16x32xbf16>
    %cst_314 = arith.constant 0.000000e+00 : f32
    %364 = vector.broadcast %cst_314 : f32 to vector<16x32xf32>
    %c1_315 = arith.constant 1 : index
    %c0_316 = arith.constant 0 : index
    %c0_317 = arith.constant 0 : index
    %c0_318 = arith.constant 0 : index
    %c0_319 = arith.constant 0 : index
    %365 = vector.load %arg4[%c1_315, %c0_316, %c0_317, %c0_318, %c0_319] : memref<2x3x4x32x8xbf16, #tpu.memory_space<vmem>>, vector<1x1x1x32x8xbf16>
    %366 = vector.shape_cast %365 : vector<1x1x1x32x8xbf16> to vector<32x8xbf16>
    %cst_320 = arith.constant dense<0.000000e+00> : vector<16x8xf32>
    %367 = tpu.matmul %363, %366, %cst_320 {dimension_numbers = #tpu.dot_dimension_numbers<[1], [0], [0], [1], [0, 0, 1, 1], [], []>} : vector<16x32xbf16>, vector<32x8xbf16>, vector<16x8xf32> -> vector<16x8xf32>
    %c1_321 = arith.constant 1 : index
    %c0_322 = arith.constant 0 : index
    %c0_323 = arith.constant 0 : index
    %c0_324 = arith.constant 0 : index
    %c0_325 = arith.constant 0 : index
    %368 = vector.load %arg5[%c1_321, %c0_322, %c0_323, %c0_324, %c0_325] : memref<2x3x4x1x8xf32, #tpu.memory_space<vmem>>, vector<1x1x1x1x8xf32>
    %369 = vector.shape_cast %368 : vector<1x1x1x1x8xf32> to vector<1x8xf32>
    %370 = vector.broadcast %369 : vector<1x8xf32> to vector<16x8xf32>
    %371 = arith.addf %367, %370 : vector<16x8xf32>
    %372 = vector.shape_cast %371 : vector<16x8xf32> to vector<2x8x8xf32>
    %c1_326 = arith.constant 1 : index
    %c1_327 = arith.constant 1 : index
    %c0_328 = arith.constant 0 : index
    %c0_329 = arith.constant 0 : index
    %c0_330 = arith.constant 0 : index
    %373 = vector.load %arg4[%c1_326, %c1_327, %c0_328, %c0_329, %c0_330] : memref<2x3x4x32x8xbf16, #tpu.memory_space<vmem>>, vector<1x1x1x32x8xbf16>
    %374 = vector.shape_cast %373 : vector<1x1x1x32x8xbf16> to vector<32x8xbf16>
    %cst_331 = arith.constant dense<0.000000e+00> : vector<16x8xf32>
    %375 = tpu.matmul %363, %374, %cst_331 {dimension_numbers = #tpu.dot_dimension_numbers<[1], [0], [0], [1], [0, 0, 1, 1], [], []>} : vector<16x32xbf16>, vector<32x8xbf16>, vector<16x8xf32> -> vector<16x8xf32>
    %c1_332 = arith.constant 1 : index
    %c1_333 = arith.constant 1 : index
    %c0_334 = arith.constant 0 : index
    %c0_335 = arith.constant 0 : index
    %c0_336 = arith.constant 0 : index
    %376 = vector.load %arg5[%c1_332, %c1_333, %c0_334, %c0_335, %c0_336] : memref<2x3x4x1x8xf32, #tpu.memory_space<vmem>>, vector<1x1x1x1x8xf32>
    %377 = vector.shape_cast %376 : vector<1x1x1x1x8xf32> to vector<1x8xf32>
    %378 = vector.broadcast %377 : vector<1x8xf32> to vector<16x8xf32>
    %379 = arith.addf %375, %378 : vector<16x8xf32>
    %380 = vector.shape_cast %379 : vector<16x8xf32> to vector<2x8x8xf32>
    %c1_337 = arith.constant 1 : index
    %c2_338 = arith.constant 2 : index
    %c0_339 = arith.constant 0 : index
    %c0_340 = arith.constant 0 : index
    %c0_341 = arith.constant 0 : index
    %381 = vector.load %arg4[%c1_337, %c2_338, %c0_339, %c0_340, %c0_341] : memref<2x3x4x32x8xbf16, #tpu.memory_space<vmem>>, vector<1x1x1x32x8xbf16>
    %382 = vector.shape_cast %381 : vector<1x1x1x32x8xbf16> to vector<32x8xbf16>
    %cst_342 = arith.constant dense<0.000000e+00> : vector<16x8xf32>
    %383 = tpu.matmul %363, %382, %cst_342 {dimension_numbers = #tpu.dot_dimension_numbers<[1], [0], [0], [1], [0, 0, 1, 1], [], []>} : vector<16x32xbf16>, vector<32x8xbf16>, vector<16x8xf32> -> vector<16x8xf32>
    %c1_343 = arith.constant 1 : index
    %c2_344 = arith.constant 2 : index
    %c0_345 = arith.constant 0 : index
    %c0_346 = arith.constant 0 : index
    %c0_347 = arith.constant 0 : index
    %384 = vector.load %arg5[%c1_343, %c2_344, %c0_345, %c0_346, %c0_347] : memref<2x3x4x1x8xf32, #tpu.memory_space<vmem>>, vector<1x1x1x1x8xf32>
    %385 = vector.shape_cast %384 : vector<1x1x1x1x8xf32> to vector<1x8xf32>
    %386 = vector.broadcast %385 : vector<1x8xf32> to vector<16x8xf32>
    %387 = arith.addf %383, %386 : vector<16x8xf32>
    %388 = vector.shape_cast %387 : vector<16x8xf32> to vector<2x8x8xf32>
    %389 = arith.truncf %372 : vector<2x8x8xf32> to vector<2x8x8xbf16>
    %390 = arith.truncf %380 : vector<2x8x8xf32> to vector<2x8x8xbf16>
    "tpu.trace_start"() <{level = 10 : i32, message = "bqd,bkd->bqk"}> : () -> ()
    %cst_348 = arith.constant dense<0.000000e+00> : vector<2x8x8xf32>
    %391 = tpu.matmul %389, %390, %cst_348 {dimension_numbers = #tpu.dot_dimension_numbers<[2], [2], [1], [1], [0, 0, 0, 1, 1, 1], [0], [0]>} : vector<2x8x8xbf16>, vector<2x8x8xbf16>, vector<2x8x8xf32> -> vector<2x8x8xf32>
    "tpu.trace_stop"() : () -> ()
    %cst_349 = arith.constant 0.353553385 : f32
    %392 = vector.broadcast %cst_349 : f32 to vector<2x8x8xf32>
    %393 = arith.mulf %391, %392 : vector<2x8x8xf32>
    %cst_350 = arith.constant dense<0xFF800000> : vector<2x8xf32>
    %394 = vector.multi_reduction <maximumf>, %393, %cst_350 [2] : vector<2x8x8xf32> to vector<2x8xf32>
    %395 = vector.shape_cast %394 : vector<2x8xf32> to vector<2x8x1xf32>
    %396 = vector.broadcast %395 : vector<2x8x1xf32> to vector<2x8x8xf32>
    %397 = arith.subf %393, %396 : vector<2x8x8xf32>
    %398 = math.exp %397 : vector<2x8x8xf32>
    %cst_351 = arith.constant dense<0.000000e+00> : vector<2x8xf32>
    %399 = vector.multi_reduction <add>, %398, %cst_351 [2] : vector<2x8x8xf32> to vector<2x8xf32>
    %400 = vector.shape_cast %399 : vector<2x8xf32> to vector<2x8x1xf32>
    %401 = tpu.reciprocal %400 {approx = true} : vector<2x8x1xf32> -> vector<2x8x1xf32>
    %402 = vector.broadcast %401 : vector<2x8x1xf32> to vector<2x8x8xf32>
    %403 = arith.mulf %398, %402 : vector<2x8x8xf32>
    %404 = arith.truncf %403 : vector<2x8x8xf32> to vector<2x8x8xbf16>
    %405 = arith.truncf %388 : vector<2x8x8xf32> to vector<2x8x8xbf16>
    "tpu.trace_start"() <{level = 10 : i32, message = "bqk,bkd->bqd"}> : () -> ()
    %cst_352 = arith.constant dense<0.000000e+00> : vector<2x8x8xf32>
    %406 = tpu.matmul %404, %405, %cst_352 {dimension_numbers = #tpu.dot_dimension_numbers<[2], [1], [1], [2], [0, 0, 0, 1, 1, 2], [0], [0]>} : vector<2x8x8xbf16>, vector<2x8x8xbf16>, vector<2x8x8xf32> -> vector<2x8x8xf32>
    "tpu.trace_stop"() : () -> ()
    %407 = vector.shape_cast %406 : vector<2x8x8xf32> to vector<16x8xf32>
    %408 = arith.truncf %407 : vector<16x8xf32> to vector<16x8xbf16>
    %c1_353 = arith.constant 1 : index
    %c0_354 = arith.constant 0 : index
    %c0_355 = arith.constant 0 : index
    %c0_356 = arith.constant 0 : index
    %409 = vector.load %arg6[%c1_353, %c0_354, %c0_355, %c0_356] : memref<2x4x8x32xbf16, #tpu.memory_space<vmem>>, vector<1x1x8x32xbf16>
    %410 = vector.shape_cast %409 : vector<1x1x8x32xbf16> to vector<8x32xbf16>
    %cst_357 = arith.constant dense<0.000000e+00> : vector<16x32xf32>
    %411 = tpu.matmul %408, %410, %cst_357 {dimension_numbers = #tpu.dot_dimension_numbers<[1], [0], [0], [1], [0, 0, 1, 1], [], []>} : vector<16x8xbf16>, vector<8x32xbf16>, vector<16x32xf32> -> vector<16x32xf32>
    %412 = arith.addf %364, %411 : vector<16x32xf32>
    %c1_358 = arith.constant 1 : index
    %c0_359 = arith.constant 0 : index
    %c1_360 = arith.constant 1 : index
    %c0_361 = arith.constant 0 : index
    %c0_362 = arith.constant 0 : index
    %413 = vector.load %arg4[%c1_358, %c0_359, %c1_360, %c0_361, %c0_362] : memref<2x3x4x32x8xbf16, #tpu.memory_space<vmem>>, vector<1x1x1x32x8xbf16>
    %414 = vector.shape_cast %413 : vector<1x1x1x32x8xbf16> to vector<32x8xbf16>
    %cst_363 = arith.constant dense<0.000000e+00> : vector<16x8xf32>
    %415 = tpu.matmul %363, %414, %cst_363 {dimension_numbers = #tpu.dot_dimension_numbers<[1], [0], [0], [1], [0, 0, 1, 1], [], []>} : vector<16x32xbf16>, vector<32x8xbf16>, vector<16x8xf32> -> vector<16x8xf32>
    %c1_364 = arith.constant 1 : index
    %c0_365 = arith.constant 0 : index
    %c1_366 = arith.constant 1 : index
    %c0_367 = arith.constant 0 : index
    %c0_368 = arith.constant 0 : index
    %416 = vector.load %arg5[%c1_364, %c0_365, %c1_366, %c0_367, %c0_368] : memref<2x3x4x1x8xf32, #tpu.memory_space<vmem>>, vector<1x1x1x1x8xf32>
    %417 = vector.shape_cast %416 : vector<1x1x1x1x8xf32> to vector<1x8xf32>
    %418 = vector.broadcast %417 : vector<1x8xf32> to vector<16x8xf32>
    %419 = arith.addf %415, %418 : vector<16x8xf32>
    %420 = vector.shape_cast %419 : vector<16x8xf32> to vector<2x8x8xf32>
    %c1_369 = arith.constant 1 : index
    %c1_370 = arith.constant 1 : index
    %c1_371 = arith.constant 1 : index
    %c0_372 = arith.constant 0 : index
    %c0_373 = arith.constant 0 : index
    %421 = vector.load %arg4[%c1_369, %c1_370, %c1_371, %c0_372, %c0_373] : memref<2x3x4x32x8xbf16, #tpu.memory_space<vmem>>, vector<1x1x1x32x8xbf16>
    %422 = vector.shape_cast %421 : vector<1x1x1x32x8xbf16> to vector<32x8xbf16>
    %cst_374 = arith.constant dense<0.000000e+00> : vector<16x8xf32>
    %423 = tpu.matmul %363, %422, %cst_374 {dimension_numbers = #tpu.dot_dimension_numbers<[1], [0], [0], [1], [0, 0, 1, 1], [], []>} : vector<16x32xbf16>, vector<32x8xbf16>, vector<16x8xf32> -> vector<16x8xf32>
    %c1_375 = arith.constant 1 : index
    %c1_376 = arith.constant 1 : index
    %c1_377 = arith.constant 1 : index
    %c0_378 = arith.constant 0 : index
    %c0_379 = arith.constant 0 : index
    %424 = vector.load %arg5[%c1_375, %c1_376, %c1_377, %c0_378, %c0_379] : memref<2x3x4x1x8xf32, #tpu.memory_space<vmem>>, vector<1x1x1x1x8xf32>
    %425 = vector.shape_cast %424 : vector<1x1x1x1x8xf32> to vector<1x8xf32>
    %426 = vector.broadcast %425 : vector<1x8xf32> to vector<16x8xf32>
    %427 = arith.addf %423, %426 : vector<16x8xf32>
    %428 = vector.shape_cast %427 : vector<16x8xf32> to vector<2x8x8xf32>
    %c1_380 = arith.constant 1 : index
    %c2_381 = arith.constant 2 : index
    %c1_382 = arith.constant 1 : index
    %c0_383 = arith.constant 0 : index
    %c0_384 = arith.constant 0 : index
    %429 = vector.load %arg4[%c1_380, %c2_381, %c1_382, %c0_383, %c0_384] : memref<2x3x4x32x8xbf16, #tpu.memory_space<vmem>>, vector<1x1x1x32x8xbf16>
    %430 = vector.shape_cast %429 : vector<1x1x1x32x8xbf16> to vector<32x8xbf16>
    %cst_385 = arith.constant dense<0.000000e+00> : vector<16x8xf32>
    %431 = tpu.matmul %363, %430, %cst_385 {dimension_numbers = #tpu.dot_dimension_numbers<[1], [0], [0], [1], [0, 0, 1, 1], [], []>} : vector<16x32xbf16>, vector<32x8xbf16>, vector<16x8xf32> -> vector<16x8xf32>
    %c1_386 = arith.constant 1 : index
    %c2_387 = arith.constant 2 : index
    %c1_388 = arith.constant 1 : index
    %c0_389 = arith.constant 0 : index
    %c0_390 = arith.constant 0 : index
    %432 = vector.load %arg5[%c1_386, %c2_387, %c1_388, %c0_389, %c0_390] : memref<2x3x4x1x8xf32, #tpu.memory_space<vmem>>, vector<1x1x1x1x8xf32>
    %433 = vector.shape_cast %432 : vector<1x1x1x1x8xf32> to vector<1x8xf32>
    %434 = vector.broadcast %433 : vector<1x8xf32> to vector<16x8xf32>
    %435 = arith.addf %431, %434 : vector<16x8xf32>
    %436 = vector.shape_cast %435 : vector<16x8xf32> to vector<2x8x8xf32>
    %437 = arith.truncf %420 : vector<2x8x8xf32> to vector<2x8x8xbf16>
    %438 = arith.truncf %428 : vector<2x8x8xf32> to vector<2x8x8xbf16>
    "tpu.trace_start"() <{level = 10 : i32, message = "bqd,bkd->bqk"}> : () -> ()
    %cst_391 = arith.constant dense<0.000000e+00> : vector<2x8x8xf32>
    %439 = tpu.matmul %437, %438, %cst_391 {dimension_numbers = #tpu.dot_dimension_numbers<[2], [2], [1], [1], [0, 0, 0, 1, 1, 1], [0], [0]>} : vector<2x8x8xbf16>, vector<2x8x8xbf16>, vector<2x8x8xf32> -> vector<2x8x8xf32>
    "tpu.trace_stop"() : () -> ()
    %cst_392 = arith.constant 0.353553385 : f32
    %440 = vector.broadcast %cst_392 : f32 to vector<2x8x8xf32>
    %441 = arith.mulf %439, %440 : vector<2x8x8xf32>
    %cst_393 = arith.constant dense<0xFF800000> : vector<2x8xf32>
    %442 = vector.multi_reduction <maximumf>, %441, %cst_393 [2] : vector<2x8x8xf32> to vector<2x8xf32>
    %443 = vector.shape_cast %442 : vector<2x8xf32> to vector<2x8x1xf32>
    %444 = vector.broadcast %443 : vector<2x8x1xf32> to vector<2x8x8xf32>
    %445 = arith.subf %441, %444 : vector<2x8x8xf32>
    %446 = math.exp %445 : vector<2x8x8xf32>
    %cst_394 = arith.constant dense<0.000000e+00> : vector<2x8xf32>
    %447 = vector.multi_reduction <add>, %446, %cst_394 [2] : vector<2x8x8xf32> to vector<2x8xf32>
    %448 = vector.shape_cast %447 : vector<2x8xf32> to vector<2x8x1xf32>
    %449 = tpu.reciprocal %448 {approx = true} : vector<2x8x1xf32> -> vector<2x8x1xf32>
    %450 = vector.broadcast %449 : vector<2x8x1xf32> to vector<2x8x8xf32>
    %451 = arith.mulf %446, %450 : vector<2x8x8xf32>
    %452 = arith.truncf %451 : vector<2x8x8xf32> to vector<2x8x8xbf16>
    %453 = arith.truncf %436 : vector<2x8x8xf32> to vector<2x8x8xbf16>
    "tpu.trace_start"() <{level = 10 : i32, message = "bqk,bkd->bqd"}> : () -> ()
    %cst_395 = arith.constant dense<0.000000e+00> : vector<2x8x8xf32>
    %454 = tpu.matmul %452, %453, %cst_395 {dimension_numbers = #tpu.dot_dimension_numbers<[2], [1], [1], [2], [0, 0, 0, 1, 1, 2], [0], [0]>} : vector<2x8x8xbf16>, vector<2x8x8xbf16>, vector<2x8x8xf32> -> vector<2x8x8xf32>
    "tpu.trace_stop"() : () -> ()
    %455 = vector.shape_cast %454 : vector<2x8x8xf32> to vector<16x8xf32>
    %456 = arith.truncf %455 : vector<16x8xf32> to vector<16x8xbf16>
    %c1_396 = arith.constant 1 : index
    %c1_397 = arith.constant 1 : index
    %c0_398 = arith.constant 0 : index
    %c0_399 = arith.constant 0 : index
    %457 = vector.load %arg6[%c1_396, %c1_397, %c0_398, %c0_399] : memref<2x4x8x32xbf16, #tpu.memory_space<vmem>>, vector<1x1x8x32xbf16>
    %458 = vector.shape_cast %457 : vector<1x1x8x32xbf16> to vector<8x32xbf16>
    %cst_400 = arith.constant dense<0.000000e+00> : vector<16x32xf32>
    %459 = tpu.matmul %456, %458, %cst_400 {dimension_numbers = #tpu.dot_dimension_numbers<[1], [0], [0], [1], [0, 0, 1, 1], [], []>} : vector<16x8xbf16>, vector<8x32xbf16>, vector<16x32xf32> -> vector<16x32xf32>
    %460 = arith.addf %412, %459 : vector<16x32xf32>
    %c1_401 = arith.constant 1 : index
    %c0_402 = arith.constant 0 : index
    %c2_403 = arith.constant 2 : index
    %c0_404 = arith.constant 0 : index
    %c0_405 = arith.constant 0 : index
    %461 = vector.load %arg4[%c1_401, %c0_402, %c2_403, %c0_404, %c0_405] : memref<2x3x4x32x8xbf16, #tpu.memory_space<vmem>>, vector<1x1x1x32x8xbf16>
    %462 = vector.shape_cast %461 : vector<1x1x1x32x8xbf16> to vector<32x8xbf16>
    %cst_406 = arith.constant dense<0.000000e+00> : vector<16x8xf32>
    %463 = tpu.matmul %363, %462, %cst_406 {dimension_numbers = #tpu.dot_dimension_numbers<[1], [0], [0], [1], [0, 0, 1, 1], [], []>} : vector<16x32xbf16>, vector<32x8xbf16>, vector<16x8xf32> -> vector<16x8xf32>
    %c1_407 = arith.constant 1 : index
    %c0_408 = arith.constant 0 : index
    %c2_409 = arith.constant 2 : index
    %c0_410 = arith.constant 0 : index
    %c0_411 = arith.constant 0 : index
    %464 = vector.load %arg5[%c1_407, %c0_408, %c2_409, %c0_410, %c0_411] : memref<2x3x4x1x8xf32, #tpu.memory_space<vmem>>, vector<1x1x1x1x8xf32>
    %465 = vector.shape_cast %464 : vector<1x1x1x1x8xf32> to vector<1x8xf32>
    %466 = vector.broadcast %465 : vector<1x8xf32> to vector<16x8xf32>
    %467 = arith.addf %463, %466 : vector<16x8xf32>
    %468 = vector.shape_cast %467 : vector<16x8xf32> to vector<2x8x8xf32>
    %c1_412 = arith.constant 1 : index
    %c1_413 = arith.constant 1 : index
    %c2_414 = arith.constant 2 : index
    %c0_415 = arith.constant 0 : index
    %c0_416 = arith.constant 0 : index
    %469 = vector.load %arg4[%c1_412, %c1_413, %c2_414, %c0_415, %c0_416] : memref<2x3x4x32x8xbf16, #tpu.memory_space<vmem>>, vector<1x1x1x32x8xbf16>
    %470 = vector.shape_cast %469 : vector<1x1x1x32x8xbf16> to vector<32x8xbf16>
    %cst_417 = arith.constant dense<0.000000e+00> : vector<16x8xf32>
    %471 = tpu.matmul %363, %470, %cst_417 {dimension_numbers = #tpu.dot_dimension_numbers<[1], [0], [0], [1], [0, 0, 1, 1], [], []>} : vector<16x32xbf16>, vector<32x8xbf16>, vector<16x8xf32> -> vector<16x8xf32>
    %c1_418 = arith.constant 1 : index
    %c1_419 = arith.constant 1 : index
    %c2_420 = arith.constant 2 : index
    %c0_421 = arith.constant 0 : index
    %c0_422 = arith.constant 0 : index
    %472 = vector.load %arg5[%c1_418, %c1_419, %c2_420, %c0_421, %c0_422] : memref<2x3x4x1x8xf32, #tpu.memory_space<vmem>>, vector<1x1x1x1x8xf32>
    %473 = vector.shape_cast %472 : vector<1x1x1x1x8xf32> to vector<1x8xf32>
    %474 = vector.broadcast %473 : vector<1x8xf32> to vector<16x8xf32>
    %475 = arith.addf %471, %474 : vector<16x8xf32>
    %476 = vector.shape_cast %475 : vector<16x8xf32> to vector<2x8x8xf32>
    %c1_423 = arith.constant 1 : index
    %c2_424 = arith.constant 2 : index
    %c2_425 = arith.constant 2 : index
    %c0_426 = arith.constant 0 : index
    %c0_427 = arith.constant 0 : index
    %477 = vector.load %arg4[%c1_423, %c2_424, %c2_425, %c0_426, %c0_427] : memref<2x3x4x32x8xbf16, #tpu.memory_space<vmem>>, vector<1x1x1x32x8xbf16>
    %478 = vector.shape_cast %477 : vector<1x1x1x32x8xbf16> to vector<32x8xbf16>
    %cst_428 = arith.constant dense<0.000000e+00> : vector<16x8xf32>
    %479 = tpu.matmul %363, %478, %cst_428 {dimension_numbers = #tpu.dot_dimension_numbers<[1], [0], [0], [1], [0, 0, 1, 1], [], []>} : vector<16x32xbf16>, vector<32x8xbf16>, vector<16x8xf32> -> vector<16x8xf32>
    %c1_429 = arith.constant 1 : index
    %c2_430 = arith.constant 2 : index
    %c2_431 = arith.constant 2 : index
    %c0_432 = arith.constant 0 : index
    %c0_433 = arith.constant 0 : index
    %480 = vector.load %arg5[%c1_429, %c2_430, %c2_431, %c0_432, %c0_433] : memref<2x3x4x1x8xf32, #tpu.memory_space<vmem>>, vector<1x1x1x1x8xf32>
    %481 = vector.shape_cast %480 : vector<1x1x1x1x8xf32> to vector<1x8xf32>
    %482 = vector.broadcast %481 : vector<1x8xf32> to vector<16x8xf32>
    %483 = arith.addf %479, %482 : vector<16x8xf32>
    %484 = vector.shape_cast %483 : vector<16x8xf32> to vector<2x8x8xf32>
    %485 = arith.truncf %468 : vector<2x8x8xf32> to vector<2x8x8xbf16>
    %486 = arith.truncf %476 : vector<2x8x8xf32> to vector<2x8x8xbf16>
    "tpu.trace_start"() <{level = 10 : i32, message = "bqd,bkd->bqk"}> : () -> ()
    %cst_434 = arith.constant dense<0.000000e+00> : vector<2x8x8xf32>
    %487 = tpu.matmul %485, %486, %cst_434 {dimension_numbers = #tpu.dot_dimension_numbers<[2], [2], [1], [1], [0, 0, 0, 1, 1, 1], [0], [0]>} : vector<2x8x8xbf16>, vector<2x8x8xbf16>, vector<2x8x8xf32> -> vector<2x8x8xf32>
    "tpu.trace_stop"() : () -> ()
    %cst_435 = arith.constant 0.353553385 : f32
    %488 = vector.broadcast %cst_435 : f32 to vector<2x8x8xf32>
    %489 = arith.mulf %487, %488 : vector<2x8x8xf32>
    %cst_436 = arith.constant dense<0xFF800000> : vector<2x8xf32>
    %490 = vector.multi_reduction <maximumf>, %489, %cst_436 [2] : vector<2x8x8xf32> to vector<2x8xf32>
    %491 = vector.shape_cast %490 : vector<2x8xf32> to vector<2x8x1xf32>
    %492 = vector.broadcast %491 : vector<2x8x1xf32> to vector<2x8x8xf32>
    %493 = arith.subf %489, %492 : vector<2x8x8xf32>
    %494 = math.exp %493 : vector<2x8x8xf32>
    %cst_437 = arith.constant dense<0.000000e+00> : vector<2x8xf32>
    %495 = vector.multi_reduction <add>, %494, %cst_437 [2] : vector<2x8x8xf32> to vector<2x8xf32>
    %496 = vector.shape_cast %495 : vector<2x8xf32> to vector<2x8x1xf32>
    %497 = tpu.reciprocal %496 {approx = true} : vector<2x8x1xf32> -> vector<2x8x1xf32>
    %498 = vector.broadcast %497 : vector<2x8x1xf32> to vector<2x8x8xf32>
    %499 = arith.mulf %494, %498 : vector<2x8x8xf32>
    %500 = arith.truncf %499 : vector<2x8x8xf32> to vector<2x8x8xbf16>
    %501 = arith.truncf %484 : vector<2x8x8xf32> to vector<2x8x8xbf16>
    "tpu.trace_start"() <{level = 10 : i32, message = "bqk,bkd->bqd"}> : () -> ()
    %cst_438 = arith.constant dense<0.000000e+00> : vector<2x8x8xf32>
    %502 = tpu.matmul %500, %501, %cst_438 {dimension_numbers = #tpu.dot_dimension_numbers<[2], [1], [1], [2], [0, 0, 0, 1, 1, 2], [0], [0]>} : vector<2x8x8xbf16>, vector<2x8x8xbf16>, vector<2x8x8xf32> -> vector<2x8x8xf32>
    "tpu.trace_stop"() : () -> ()
    %503 = vector.shape_cast %502 : vector<2x8x8xf32> to vector<16x8xf32>
    %504 = arith.truncf %503 : vector<16x8xf32> to vector<16x8xbf16>
    %c1_439 = arith.constant 1 : index
    %c2_440 = arith.constant 2 : index
    %c0_441 = arith.constant 0 : index
    %c0_442 = arith.constant 0 : index
    %505 = vector.load %arg6[%c1_439, %c2_440, %c0_441, %c0_442] : memref<2x4x8x32xbf16, #tpu.memory_space<vmem>>, vector<1x1x8x32xbf16>
    %506 = vector.shape_cast %505 : vector<1x1x8x32xbf16> to vector<8x32xbf16>
    %cst_443 = arith.constant dense<0.000000e+00> : vector<16x32xf32>
    %507 = tpu.matmul %504, %506, %cst_443 {dimension_numbers = #tpu.dot_dimension_numbers<[1], [0], [0], [1], [0, 0, 1, 1], [], []>} : vector<16x8xbf16>, vector<8x32xbf16>, vector<16x32xf32> -> vector<16x32xf32>
    %508 = arith.addf %460, %507 : vector<16x32xf32>
    %c1_444 = arith.constant 1 : index
    %c0_445 = arith.constant 0 : index
    %c3_446 = arith.constant 3 : index
    %c0_447 = arith.constant 0 : index
    %c0_448 = arith.constant 0 : index
    %509 = vector.load %arg4[%c1_444, %c0_445, %c3_446, %c0_447, %c0_448] : memref<2x3x4x32x8xbf16, #tpu.memory_space<vmem>>, vector<1x1x1x32x8xbf16>
    %510 = vector.shape_cast %509 : vector<1x1x1x32x8xbf16> to vector<32x8xbf16>
    %cst_449 = arith.constant dense<0.000000e+00> : vector<16x8xf32>
    %511 = tpu.matmul %363, %510, %cst_449 {dimension_numbers = #tpu.dot_dimension_numbers<[1], [0], [0], [1], [0, 0, 1, 1], [], []>} : vector<16x32xbf16>, vector<32x8xbf16>, vector<16x8xf32> -> vector<16x8xf32>
    %c1_450 = arith.constant 1 : index
    %c0_451 = arith.constant 0 : index
    %c3_452 = arith.constant 3 : index
    %c0_453 = arith.constant 0 : index
    %c0_454 = arith.constant 0 : index
    %512 = vector.load %arg5[%c1_450, %c0_451, %c3_452, %c0_453, %c0_454] : memref<2x3x4x1x8xf32, #tpu.memory_space<vmem>>, vector<1x1x1x1x8xf32>
    %513 = vector.shape_cast %512 : vector<1x1x1x1x8xf32> to vector<1x8xf32>
    %514 = vector.broadcast %513 : vector<1x8xf32> to vector<16x8xf32>
    %515 = arith.addf %511, %514 : vector<16x8xf32>
    %516 = vector.shape_cast %515 : vector<16x8xf32> to vector<2x8x8xf32>
    %c1_455 = arith.constant 1 : index
    %c1_456 = arith.constant 1 : index
    %c3_457 = arith.constant 3 : index
    %c0_458 = arith.constant 0 : index
    %c0_459 = arith.constant 0 : index
    %517 = vector.load %arg4[%c1_455, %c1_456, %c3_457, %c0_458, %c0_459] : memref<2x3x4x32x8xbf16, #tpu.memory_space<vmem>>, vector<1x1x1x32x8xbf16>
    %518 = vector.shape_cast %517 : vector<1x1x1x32x8xbf16> to vector<32x8xbf16>
    %cst_460 = arith.constant dense<0.000000e+00> : vector<16x8xf32>
    %519 = tpu.matmul %363, %518, %cst_460 {dimension_numbers = #tpu.dot_dimension_numbers<[1], [0], [0], [1], [0, 0, 1, 1], [], []>} : vector<16x32xbf16>, vector<32x8xbf16>, vector<16x8xf32> -> vector<16x8xf32>
    %c1_461 = arith.constant 1 : index
    %c1_462 = arith.constant 1 : index
    %c3_463 = arith.constant 3 : index
    %c0_464 = arith.constant 0 : index
    %c0_465 = arith.constant 0 : index
    %520 = vector.load %arg5[%c1_461, %c1_462, %c3_463, %c0_464, %c0_465] : memref<2x3x4x1x8xf32, #tpu.memory_space<vmem>>, vector<1x1x1x1x8xf32>
    %521 = vector.shape_cast %520 : vector<1x1x1x1x8xf32> to vector<1x8xf32>
    %522 = vector.broadcast %521 : vector<1x8xf32> to vector<16x8xf32>
    %523 = arith.addf %519, %522 : vector<16x8xf32>
    %524 = vector.shape_cast %523 : vector<16x8xf32> to vector<2x8x8xf32>
    %c1_466 = arith.constant 1 : index
    %c2_467 = arith.constant 2 : index
    %c3_468 = arith.constant 3 : index
    %c0_469 = arith.constant 0 : index
    %c0_470 = arith.constant 0 : index
    %525 = vector.load %arg4[%c1_466, %c2_467, %c3_468, %c0_469, %c0_470] : memref<2x3x4x32x8xbf16, #tpu.memory_space<vmem>>, vector<1x1x1x32x8xbf16>
    %526 = vector.shape_cast %525 : vector<1x1x1x32x8xbf16> to vector<32x8xbf16>
    %cst_471 = arith.constant dense<0.000000e+00> : vector<16x8xf32>
    %527 = tpu.matmul %363, %526, %cst_471 {dimension_numbers = #tpu.dot_dimension_numbers<[1], [0], [0], [1], [0, 0, 1, 1], [], []>} : vector<16x32xbf16>, vector<32x8xbf16>, vector<16x8xf32> -> vector<16x8xf32>
    %c1_472 = arith.constant 1 : index
    %c2_473 = arith.constant 2 : index
    %c3_474 = arith.constant 3 : index
    %c0_475 = arith.constant 0 : index
    %c0_476 = arith.constant 0 : index
    %528 = vector.load %arg5[%c1_472, %c2_473, %c3_474, %c0_475, %c0_476] : memref<2x3x4x1x8xf32, #tpu.memory_space<vmem>>, vector<1x1x1x1x8xf32>
    %529 = vector.shape_cast %528 : vector<1x1x1x1x8xf32> to vector<1x8xf32>
    %530 = vector.broadcast %529 : vector<1x8xf32> to vector<16x8xf32>
    %531 = arith.addf %527, %530 : vector<16x8xf32>
    %532 = vector.shape_cast %531 : vector<16x8xf32> to vector<2x8x8xf32>
    %533 = arith.truncf %516 : vector<2x8x8xf32> to vector<2x8x8xbf16>
    %534 = arith.truncf %524 : vector<2x8x8xf32> to vector<2x8x8xbf16>
    "tpu.trace_start"() <{level = 10 : i32, message = "bqd,bkd->bqk"}> : () -> ()
    %cst_477 = arith.constant dense<0.000000e+00> : vector<2x8x8xf32>
    %535 = tpu.matmul %533, %534, %cst_477 {dimension_numbers = #tpu.dot_dimension_numbers<[2], [2], [1], [1], [0, 0, 0, 1, 1, 1], [0], [0]>} : vector<2x8x8xbf16>, vector<2x8x8xbf16>, vector<2x8x8xf32> -> vector<2x8x8xf32>
    "tpu.trace_stop"() : () -> ()
    %cst_478 = arith.constant 0.353553385 : f32
    %536 = vector.broadcast %cst_478 : f32 to vector<2x8x8xf32>
    %537 = arith.mulf %535, %536 : vector<2x8x8xf32>
    %cst_479 = arith.constant dense<0xFF800000> : vector<2x8xf32>
    %538 = vector.multi_reduction <maximumf>, %537, %cst_479 [2] : vector<2x8x8xf32> to vector<2x8xf32>
    %539 = vector.shape_cast %538 : vector<2x8xf32> to vector<2x8x1xf32>
    %540 = vector.broadcast %539 : vector<2x8x1xf32> to vector<2x8x8xf32>
    %541 = arith.subf %537, %540 : vector<2x8x8xf32>
    %542 = math.exp %541 : vector<2x8x8xf32>
    %cst_480 = arith.constant dense<0.000000e+00> : vector<2x8xf32>
    %543 = vector.multi_reduction <add>, %542, %cst_480 [2] : vector<2x8x8xf32> to vector<2x8xf32>
    %544 = vector.shape_cast %543 : vector<2x8xf32> to vector<2x8x1xf32>
    %545 = tpu.reciprocal %544 {approx = true} : vector<2x8x1xf32> -> vector<2x8x1xf32>
    %546 = vector.broadcast %545 : vector<2x8x1xf32> to vector<2x8x8xf32>
    %547 = arith.mulf %542, %546 : vector<2x8x8xf32>
    %548 = arith.truncf %547 : vector<2x8x8xf32> to vector<2x8x8xbf16>
    %549 = arith.truncf %532 : vector<2x8x8xf32> to vector<2x8x8xbf16>
    "tpu.trace_start"() <{level = 10 : i32, message = "bqk,bkd->bqd"}> : () -> ()
    %cst_481 = arith.constant dense<0.000000e+00> : vector<2x8x8xf32>
    %550 = tpu.matmul %548, %549, %cst_481 {dimension_numbers = #tpu.dot_dimension_numbers<[2], [1], [1], [2], [0, 0, 0, 1, 1, 2], [0], [0]>} : vector<2x8x8xbf16>, vector<2x8x8xbf16>, vector<2x8x8xf32> -> vector<2x8x8xf32>
    "tpu.trace_stop"() : () -> ()
    %551 = vector.shape_cast %550 : vector<2x8x8xf32> to vector<16x8xf32>
    %552 = arith.truncf %551 : vector<16x8xf32> to vector<16x8xbf16>
    %c1_482 = arith.constant 1 : index
    %c3_483 = arith.constant 3 : index
    %c0_484 = arith.constant 0 : index
    %c0_485 = arith.constant 0 : index
    %553 = vector.load %arg6[%c1_482, %c3_483, %c0_484, %c0_485] : memref<2x4x8x32xbf16, #tpu.memory_space<vmem>>, vector<1x1x8x32xbf16>
    %554 = vector.shape_cast %553 : vector<1x1x8x32xbf16> to vector<8x32xbf16>
    %cst_486 = arith.constant dense<0.000000e+00> : vector<16x32xf32>
    %555 = tpu.matmul %552, %554, %cst_486 {dimension_numbers = #tpu.dot_dimension_numbers<[1], [0], [0], [1], [0, 0, 1, 1], [], []>} : vector<16x8xbf16>, vector<8x32xbf16>, vector<16x32xf32> -> vector<16x32xf32>
    %556 = arith.addf %508, %555 : vector<16x32xf32>
    %c1_487 = arith.constant 1 : index
    %c0_488 = arith.constant 0 : index
    %c0_489 = arith.constant 0 : index
    %557 = vector.load %arg7[%c1_487, %c0_488, %c0_489] : memref<2x1x32xf32, #tpu.memory_space<vmem>>, vector<1x1x32xf32>
    %558 = vector.shape_cast %557 : vector<1x1x32xf32> to vector<1x32xf32>
    %559 = vector.broadcast %558 : vector<1x32xf32> to vector<16x32xf32>
    %560 = arith.addf %556, %559 : vector<16x32xf32>
    %561 = arith.addf %362, %560 : vector<16x32xf32>
    %c1_490 = arith.constant 1 : index
    %c0_491 = arith.constant 0 : index
    %c0_492 = arith.constant 0 : index
    %c0_493 = arith.constant 0 : index
    %562 = vector.load %arg12[%c1_490, %c0_491, %c0_492, %c0_493] : memref<2x2x1x32xf32, #tpu.memory_space<vmem>>, vector<1x1x1x32xf32>
    %563 = vector.shape_cast %562 : vector<1x1x1x32xf32> to vector<1x32xf32>
    %c1_494 = arith.constant 1 : index
    %c0_495 = arith.constant 0 : index
    %c0_496 = arith.constant 0 : index
    %c0_497 = arith.constant 0 : index
    %564 = vector.load %arg13[%c1_494, %c0_495, %c0_496, %c0_497] : memref<2x2x1x32xf32, #tpu.memory_space<vmem>>, vector<1x1x1x32xf32>
    %565 = vector.shape_cast %564 : vector<1x1x1x32xf32> to vector<1x32xf32>
    %cst_498 = arith.constant dense<0.000000e+00> : vector<16xf32>
    %566 = vector.multi_reduction <add>, %561, %cst_498 [1] : vector<16x32xf32> to vector<16xf32>
    %567 = vector.shape_cast %566 : vector<16xf32> to vector<16x1xf32>
    %cst_499 = arith.constant 3.200000e+01 : f32
    %568 = vector.broadcast %cst_499 : f32 to vector<16x1xf32>
    %569 = arith.divf %567, %568 : vector<16x1xf32>
    %570 = vector.broadcast %569 : vector<16x1xf32> to vector<16x32xf32>
    %571 = arith.subf %561, %570 : vector<16x32xf32>
    %572 = arith.mulf %571, %571 : vector<16x32xf32>
    %cst_500 = arith.constant dense<0.000000e+00> : vector<16xf32>
    %573 = vector.multi_reduction <add>, %572, %cst_500 [1] : vector<16x32xf32> to vector<16xf32>
    %574 = vector.shape_cast %573 : vector<16xf32> to vector<16x1xf32>
    %cst_501 = arith.constant 3.200000e+01 : f32
    %575 = vector.broadcast %cst_501 : f32 to vector<16x1xf32>
    %576 = arith.divf %574, %575 : vector<16x1xf32>
    %cst_502 = arith.constant 9.99999974E-6 : f32
    %577 = vector.broadcast %cst_502 : f32 to vector<16x1xf32>
    %578 = arith.addf %576, %577 : vector<16x1xf32>
    %579 = math.rsqrt %578 : vector<16x1xf32>
    %580 = vector.broadcast %579 : vector<16x1xf32> to vector<16x32xf32>
    %581 = arith.mulf %571, %580 : vector<16x32xf32>
    %582 = vector.broadcast %563 : vector<1x32xf32> to vector<16x32xf32>
    %583 = arith.mulf %581, %582 : vector<16x32xf32>
    %584 = vector.broadcast %565 : vector<1x32xf32> to vector<16x32xf32>
    %585 = arith.addf %583, %584 : vector<16x32xf32>
    %586 = arith.truncf %585 : vector<16x32xf32> to vector<16x32xbf16>
    %c1_503 = arith.constant 1 : index
    %c0_504 = arith.constant 0 : index
    %c0_505 = arith.constant 0 : index
    %587 = vector.load %arg8[%c1_503, %c0_504, %c0_505] : memref<2x32x64xbf16, #tpu.memory_space<vmem>>, vector<1x32x64xbf16>
    %588 = vector.shape_cast %587 : vector<1x32x64xbf16> to vector<32x64xbf16>
    %cst_506 = arith.constant dense<0.000000e+00> : vector<16x64xf32>
    %589 = tpu.matmul %586, %588, %cst_506 {dimension_numbers = #tpu.dot_dimension_numbers<[1], [0], [0], [1], [0, 0, 1, 1], [], []>} : vector<16x32xbf16>, vector<32x64xbf16>, vector<16x64xf32> -> vector<16x64xf32>
    %c1_507 = arith.constant 1 : index
    %c0_508 = arith.constant 0 : index
    %c0_509 = arith.constant 0 : index
    %590 = vector.load %arg9[%c1_507, %c0_508, %c0_509] : memref<2x1x64xf32, #tpu.memory_space<vmem>>, vector<1x1x64xf32>
    %591 = vector.shape_cast %590 : vector<1x1x64xf32> to vector<1x64xf32>
    %592 = vector.broadcast %591 : vector<1x64xf32> to vector<16x64xf32>
    %593 = arith.addf %589, %592 : vector<16x64xf32>
    %cst_510 = arith.constant 0.000000e+00 : f32
    %594 = vector.broadcast %cst_510 : f32 to vector<16x64xf32>
    %595 = arith.maximumf %593, %594 : vector<16x64xf32>
    %596 = arith.truncf %595 : vector<16x64xf32> to vector<16x64xbf16>
    %c1_511 = arith.constant 1 : index
    %c0_512 = arith.constant 0 : index
    %c0_513 = arith.constant 0 : index
    %597 = vector.load %arg10[%c1_511, %c0_512, %c0_513] : memref<2x64x32xbf16, #tpu.memory_space<vmem>>, vector<1x64x32xbf16>
    %598 = vector.shape_cast %597 : vector<1x64x32xbf16> to vector<64x32xbf16>
    %cst_514 = arith.constant dense<0.000000e+00> : vector<16x32xf32>
    %599 = tpu.matmul %596, %598, %cst_514 {dimension_numbers = #tpu.dot_dimension_numbers<[1], [0], [0], [1], [0, 0, 1, 1], [], []>} : vector<16x64xbf16>, vector<64x32xbf16>, vector<16x32xf32> -> vector<16x32xf32>
    %c1_515 = arith.constant 1 : index
    %c0_516 = arith.constant 0 : index
    %c0_517 = arith.constant 0 : index
    %600 = vector.load %arg11[%c1_515, %c0_516, %c0_517] : memref<2x1x32xf32, #tpu.memory_space<vmem>>, vector<1x1x32xf32>
    %601 = vector.shape_cast %600 : vector<1x1x32xf32> to vector<1x32xf32>
    %602 = vector.broadcast %601 : vector<1x32xf32> to vector<16x32xf32>
    %603 = arith.addf %599, %602 : vector<16x32xf32>
    %604 = arith.addf %585, %603 : vector<16x32xf32>
    %c1_518 = arith.constant 1 : index
    %c1_519 = arith.constant 1 : index
    %c0_520 = arith.constant 0 : index
    %c0_521 = arith.constant 0 : index
    %605 = vector.load %arg12[%c1_518, %c1_519, %c0_520, %c0_521] : memref<2x2x1x32xf32, #tpu.memory_space<vmem>>, vector<1x1x1x32xf32>
    %606 = vector.shape_cast %605 : vector<1x1x1x32xf32> to vector<1x32xf32>
    %c1_522 = arith.constant 1 : index
    %c1_523 = arith.constant 1 : index
    %c0_524 = arith.constant 0 : index
    %c0_525 = arith.constant 0 : index
    %607 = vector.load %arg13[%c1_522, %c1_523, %c0_524, %c0_525] : memref<2x2x1x32xf32, #tpu.memory_space<vmem>>, vector<1x1x1x32xf32>
    %608 = vector.shape_cast %607 : vector<1x1x1x32xf32> to vector<1x32xf32>
    %cst_526 = arith.constant dense<0.000000e+00> : vector<16xf32>
    %609 = vector.multi_reduction <add>, %604, %cst_526 [1] : vector<16x32xf32> to vector<16xf32>
    %610 = vector.shape_cast %609 : vector<16xf32> to vector<16x1xf32>
    %cst_527 = arith.constant 3.200000e+01 : f32
    %611 = vector.broadcast %cst_527 : f32 to vector<16x1xf32>
    %612 = arith.divf %610, %611 : vector<16x1xf32>
    %613 = vector.broadcast %612 : vector<16x1xf32> to vector<16x32xf32>
    %614 = arith.subf %604, %613 : vector<16x32xf32>
    %615 = arith.mulf %614, %614 : vector<16x32xf32>
    %cst_528 = arith.constant dense<0.000000e+00> : vector<16xf32>
    %616 = vector.multi_reduction <add>, %615, %cst_528 [1] : vector<16x32xf32> to vector<16xf32>
    %617 = vector.shape_cast %616 : vector<16xf32> to vector<16x1xf32>
    %cst_529 = arith.constant 3.200000e+01 : f32
    %618 = vector.broadcast %cst_529 : f32 to vector<16x1xf32>
    %619 = arith.divf %617, %618 : vector<16x1xf32>
    %cst_530 = arith.constant 9.99999974E-6 : f32
    %620 = vector.broadcast %cst_530 : f32 to vector<16x1xf32>
    %621 = arith.addf %619, %620 : vector<16x1xf32>
    %622 = math.rsqrt %621 : vector<16x1xf32>
    %623 = vector.broadcast %622 : vector<16x1xf32> to vector<16x32xf32>
    %624 = arith.mulf %614, %623 : vector<16x32xf32>
    %625 = vector.broadcast %606 : vector<1x32xf32> to vector<16x32xf32>
    %626 = arith.mulf %624, %625 : vector<16x32xf32>
    %627 = vector.broadcast %608 : vector<1x32xf32> to vector<16x32xf32>
    %628 = arith.addf %626, %627 : vector<16x32xf32>
    %629 = vector.extract_strided_slice %628 {offsets = [0, 0], sizes = [8, 32], strides = [1, 1]} : vector<16x32xf32> to vector<8x32xf32>
    %630 = vector.extract_strided_slice %628 {offsets = [8, 0], sizes = [8, 32], strides = [1, 1]} : vector<16x32xf32> to vector<8x32xf32>
    %631 = arith.addf %629, %630 : vector<8x32xf32>
    %cst_531 = arith.constant 5.000000e-01 : f32
    %632 = vector.broadcast %cst_531 : f32 to vector<8x32xf32>
    %633 = arith.mulf %631, %632 : vector<8x32xf32>
    %634 = arith.truncf %633 : vector<8x32xf32> to vector<8x32xbf16>
    %c0_532 = arith.constant 0 : index
    %c0_533 = arith.constant 0 : index
    %635 = vector.load %arg14[%c0_532, %c0_533] : memref<32x128xbf16, #tpu.memory_space<vmem>>, vector<32x128xbf16>
    %cst_534 = arith.constant dense<0.000000e+00> : vector<8x128xf32>
    %636 = tpu.matmul %634, %635, %cst_534 {dimension_numbers = #tpu.dot_dimension_numbers<[1], [0], [0], [1], [0, 0, 1, 1], [], []>} : vector<8x32xbf16>, vector<32x128xbf16>, vector<8x128xf32> -> vector<8x128xf32>
    %c0_535 = arith.constant 0 : index
    %c0_536 = arith.constant 0 : index
    %637 = vector.load %arg15[%c0_535, %c0_536] : memref<1x128xf32, #tpu.memory_space<vmem>>, vector<1x128xf32>
    %638 = vector.broadcast %637 : vector<1x128xf32> to vector<8x128xf32>
    %639 = arith.addf %636, %638 : vector<8x128xf32>
    %c0_537 = arith.constant 0 : index
    %c0_538 = arith.constant 0 : index
    %640 = vector.load %arg16[%c0_537, %c0_538] : memref<8x128xf32, #tpu.memory_space<vmem>>, vector<8x128xf32>
    tpu.vector_store %arg16[%c0_537, %c0_538], %639 {strides = array<i32>} : memref<8x128xf32, #tpu.memory_space<vmem>>, vector<8x128xf32>,
    return
  }
  func.func @transform_0(%arg0: i32, %arg1: memref<8x2xi32, #tpu.memory_space<smem>>) -> (i32, i32) {
    %c0_i32 = arith.constant 0 : i32
    %c0_i32_0 = arith.constant 0 : i32
    %c0_i32_1 = arith.constant 0 : i32
    return %c0_i32, %c0_i32_0 : i32, i32
  }
  func.func @transform_1(%arg0: i32, %arg1: memref<8x2xi32, #tpu.memory_space<smem>>) -> (i32, i32) {
    %c0_i32 = arith.constant 0 : i32
    %c0_i32_0 = arith.constant 0 : i32
    %c0_i32_1 = arith.constant 0 : i32
    return %c0_i32, %c0_i32_0 : i32, i32
  }
  func.func @transform_2(%arg0: i32, %arg1: memref<8x2xi32, #tpu.memory_space<smem>>) -> (i32, i32, i32, i32, i32) {
    %c0_i32 = arith.constant 0 : i32
    %c0_i32_0 = arith.constant 0 : i32
    %c0_i32_1 = arith.constant 0 : i32
    %c0_i32_2 = arith.constant 0 : i32
    %c0_i32_3 = arith.constant 0 : i32
    %c0_i32_4 = arith.constant 0 : i32
    return %c0_i32, %c0_i32_0, %c0_i32_1, %c0_i32_2, %c0_i32_3 : i32, i32, i32, i32, i32
  }
  func.func @transform_3(%arg0: i32, %arg1: memref<8x2xi32, #tpu.memory_space<smem>>) -> (i32, i32, i32, i32, i32) {
    %c0_i32 = arith.constant 0 : i32
    %c0_i32_0 = arith.constant 0 : i32
    %c0_i32_1 = arith.constant 0 : i32
    %c0_i32_2 = arith.constant 0 : i32
    %c0_i32_3 = arith.constant 0 : i32
    %c0_i32_4 = arith.constant 0 : i32
    return %c0_i32, %c0_i32_0, %c0_i32_1, %c0_i32_2, %c0_i32_3 : i32, i32, i32, i32, i32
  }
  func.func @transform_4(%arg0: i32, %arg1: memref<8x2xi32, #tpu.memory_space<smem>>) -> (i32, i32, i32, i32) {
    %c0_i32 = arith.constant 0 : i32
    %c0_i32_0 = arith.constant 0 : i32
    %c0_i32_1 = arith.constant 0 : i32
    %c0_i32_2 = arith.constant 0 : i32
    %c0_i32_3 = arith.constant 0 : i32
    return %c0_i32, %c0_i32_0, %c0_i32_1, %c0_i32_2 : i32, i32, i32, i32
  }
  func.func @transform_5(%arg0: i32, %arg1: memref<8x2xi32, #tpu.memory_space<smem>>) -> (i32, i32, i32) {
    %c0_i32 = arith.constant 0 : i32
    %c0_i32_0 = arith.constant 0 : i32
    %c0_i32_1 = arith.constant 0 : i32
    %c0_i32_2 = arith.constant 0 : i32
    return %c0_i32, %c0_i32_0, %c0_i32_1 : i32, i32, i32
  }
  func.func @transform_6(%arg0: i32, %arg1: memref<8x2xi32, #tpu.memory_space<smem>>) -> (i32, i32, i32) {
    %c0_i32 = arith.constant 0 : i32
    %c0_i32_0 = arith.constant 0 : i32
    %c0_i32_1 = arith.constant 0 : i32
    %c0_i32_2 = arith.constant 0 : i32
    return %c0_i32, %c0_i32_0, %c0_i32_1 : i32, i32, i32
  }
  func.func @transform_7(%arg0: i32, %arg1: memref<8x2xi32, #tpu.memory_space<smem>>) -> (i32, i32, i32) {
    %c0_i32 = arith.constant 0 : i32
    %c0_i32_0 = arith.constant 0 : i32
    %c0_i32_1 = arith.constant 0 : i32
    %c0_i32_2 = arith.constant 0 : i32
    return %c0_i32, %c0_i32_0, %c0_i32_1 : i32, i32, i32
  }
  func.func @transform_8(%arg0: i32, %arg1: memref<8x2xi32, #tpu.memory_space<smem>>) -> (i32, i32, i32) {
    %c0_i32 = arith.constant 0 : i32
    %c0_i32_0 = arith.constant 0 : i32
    %c0_i32_1 = arith.constant 0 : i32
    %c0_i32_2 = arith.constant 0 : i32
    return %c0_i32, %c0_i32_0, %c0_i32_1 : i32, i32, i32
  }
  func.func @transform_9(%arg0: i32, %arg1: memref<8x2xi32, #tpu.memory_space<smem>>) -> (i32, i32, i32) {
    %c0_i32 = arith.constant 0 : i32
    %c0_i32_0 = arith.constant 0 : i32
    %c0_i32_1 = arith.constant 0 : i32
    %c0_i32_2 = arith.constant 0 : i32
    return %c0_i32, %c0_i32_0, %c0_i32_1 : i32, i32, i32
  }
  func.func @transform_10(%arg0: i32, %arg1: memref<8x2xi32, #tpu.memory_space<smem>>) -> (i32, i32, i32, i32) {
    %c0_i32 = arith.constant 0 : i32
    %c0_i32_0 = arith.constant 0 : i32
    %c0_i32_1 = arith.constant 0 : i32
    %c0_i32_2 = arith.constant 0 : i32
    %c0_i32_3 = arith.constant 0 : i32
    return %c0_i32, %c0_i32_0, %c0_i32_1, %c0_i32_2 : i32, i32, i32, i32
  }
  func.func @transform_11(%arg0: i32, %arg1: memref<8x2xi32, #tpu.memory_space<smem>>) -> (i32, i32, i32, i32) {
    %c0_i32 = arith.constant 0 : i32
    %c0_i32_0 = arith.constant 0 : i32
    %c0_i32_1 = arith.constant 0 : i32
    %c0_i32_2 = arith.constant 0 : i32
    %c0_i32_3 = arith.constant 0 : i32
    return %c0_i32, %c0_i32_0, %c0_i32_1, %c0_i32_2 : i32, i32, i32, i32
  }
  func.func @transform_12(%arg0: i32, %arg1: memref<8x2xi32, #tpu.memory_space<smem>>) -> (i32, i32) {
    %c0_i32 = arith.constant 0 : i32
    %c0_i32_0 = arith.constant 0 : i32
    %c0_i32_1 = arith.constant 0 : i32
    return %c0_i32, %c0_i32_0 : i32, i32
  }
  func.func @transform_13(%arg0: i32, %arg1: memref<8x2xi32, #tpu.memory_space<smem>>) -> (i32, i32) {
    %c0_i32 = arith.constant 0 : i32
    %c0_i32_0 = arith.constant 0 : i32
    %c0_i32_1 = arith.constant 0 : i32
    return %c0_i32, %c0_i32_0 : i32, i32
  }
  func.func @transform_14(%arg0: i32, %arg1: memref<8x2xi32, #tpu.memory_space<smem>>) -> (i32, i32) {
    %c0_i32 = arith.constant 0 : i32
    %c0_i32_0 = arith.constant 0 : i32
    %c0_i32_1 = arith.constant 0 : i32
    return %c0_i32, %c0_i32_0 : i32, i32
  }
}

</mosaic_0001>

<llo_original>
// kernel: masked_lm_forward.1
$region0: #{masked_lm_forward.1}
  #allocation0 [shape = 'u32[]', space=smem, size = 0x4, offset = 0x4, fixed_abs, tag = 'smem constant byte address 0x4 - core index']
  #allocation1 [shape = 'u32[144,128]{1,0:T(1,128)}', space=vmem, size = 0x12000, scoped, tag = 'internal scratch']
  #allocation2 [shape = 'f32[16,32]{1,0:T(8,128)}', space=vmem, size = 0x2000, scoped, tag = 'scratch operand']
  #allocation3 [shape = 's32[1]{0}', space=sflag, size = 0x4, scoped, tag = 'scoped memory for masked_lm_forward.1']
  #allocation4 [shape = 'u8[4096]{0}', space=smem, size = 0x1000, scoped, tag = 'prefetched SMEM operand 0']
  %s0 = inlined_call_operand.vmem [shape: s32[8,2], index: 0, kind: input, shape index: {}]
  %s1 = inlined_call_operand.vmem [shape: f32[50,32], index: 1, kind: input, shape index: {}]
  %s2 = inlined_call_operand.vmem [shape: f32[8,32], index: 2, kind: input, shape index: {}]
  %s3 = inlined_call_operand.vmem [shape: bf16[2,3,4,32,8], index: 3, kind: input, shape index: {}]
  %s4 = inlined_call_operand.vmem [shape: f32[2,3,4,1,8], index: 4, kind: input, shape index: {}]
  %s5 = inlined_call_operand.vmem [shape: bf16[2,4,8,32], index: 5, kind: input, shape index: {}]
  %s6 = inlined_call_operand.vmem [shape: f32[2,1,32], index: 6, kind: input, shape index: {}]
  %s7 = inlined_call_operand.vmem [shape: bf16[2,32,64], index: 7, kind: input, shape index: {}]
  %s8 = inlined_call_operand.vmem [shape: f32[2,1,64], index: 8, kind: input, shape index: {}]
  %s9 = inlined_call_operand.vmem [shape: bf16[2,64,32], index: 9, kind: input, shape index: {}]
  %s10 = inlined_call_operand.vmem [shape: f32[2,1,32], index: 10, kind: input, shape index: {}]
  %s11 = inlined_call_operand.vmem [shape: f32[2,2,1,32], index: 11, kind: input, shape index: {}]
  %s12 = inlined_call_operand.vmem [shape: f32[2,2,1,32], index: 12, kind: input, shape index: {}]
  %s13 = inlined_call_operand.vmem [shape: bf16[32,128], index: 13, kind: input, shape index: {}]
  %s14 = inlined_call_operand.vmem [shape: f32[1,128], index: 14, kind: input, shape index: {}]
  %s15 = inlined_call_operand.hbm [shape: f32[8,128], index: 15, kind: output, shape index: {}]
  %s16 = sld [smem:[#allocation0]]
  $region66: #{masked_lm_forward.1} parent=0
    _
  %s18 = ssub.s32 1, %s16
  %s19 = scalar_select 0, %s18, %s16
  %s20 = sshll.u32 %s0, 4
  %s21 = int_to_ptr.vmem [resolvable:$true] %s20
  %23 = dma.vmem_to_smem %s21, 128, [#allocation4], [#allocation3]
  %24 = dma.done [#allocation3], 128
  %25 = sfence
  $region1: #{masked_lm_forward.1} parent=0
    #allocation5 [shape = 'u8[4096]{0}', space=vmem, size = 0x1000, scoped, tag = 'output window, operand 0, single buffered']
    #allocation6 [shape = 's32[1]{0}', space=sflag, size = 0x4, scoped, tag = 'scoped memory for masked_lm_forward.1']
    %26 = vsyncpa [#allocation6], 0
    // Predicated region
    $region2: #{masked_lm_forward.1} parent=1 // pred_check
      _
    $region3: #{masked_lm_forward.1} parent=1 // pred_check_branch
      %28 = sbr.rel (0) target = $region5
    $region4: #{masked_lm_forward.1} parent=1 // pred_region
      _
    $region5: #{masked_lm_forward.1} parent=1 // pred_fallthru
      _
    // Predicated region
    $region6: #{masked_lm_forward.1} parent=1 // pred_check
      _
    $region7: #{masked_lm_forward.1} parent=1 // pred_check_branch
      %30 = sbr.rel (0) target = $region9
    $region8: #{masked_lm_forward.1} parent=1 // pred_region
      _
    $region9: #{masked_lm_forward.1} parent=1 // pred_fallthru
      _
    // Predicated region
    $region10: #{masked_lm_forward.1} parent=1 // pred_check
      _
    $region11: #{masked_lm_forward.1} parent=1 // pred_check_branch
      %32 = sbr.rel (0) target = $region13
    $region12: #{masked_lm_forward.1} parent=1 // pred_region
      _
    $region13: #{masked_lm_forward.1} parent=1 // pred_fallthru
      _
    // Predicated region
    $region14: #{masked_lm_forward.1} parent=1 // pred_check
      _
    $region15: #{masked_lm_forward.1} parent=1 // pred_check_branch
      %34 = sbr.rel (0) target = $region17
    $region16: #{masked_lm_forward.1} parent=1 // pred_region
      _
    $region17: #{masked_lm_forward.1} parent=1 // pred_fallthru
      _
    // Predicated region
    $region18: #{masked_lm_forward.1} parent=1 // pred_check
      _
    $region19: #{masked_lm_forward.1} parent=1 // pred_check_branch
      %36 = sbr.rel (0) target = $region21
    $region20: #{masked_lm_forward.1} parent=1 // pred_region
      _
    $region21: #{masked_lm_forward.1} parent=1 // pred_fallthru
      _
    // Predicated region
    $region22: #{masked_lm_forward.1} parent=1 // pred_check
      _
    $region23: #{masked_lm_forward.1} parent=1 // pred_check_branch
      %38 = sbr.rel (0) target = $region25
    $region24: #{masked_lm_forward.1} parent=1 // pred_region
      _
    $region25: #{masked_lm_forward.1} parent=1 // pred_fallthru
      _
    // Predicated region
    $region26: #{masked_lm_forward.1} parent=1 // pred_check
      _
    $region27: #{masked_lm_forward.1} parent=1 // pred_check_branch
      %40 = sbr.rel (0) target = $region29
    $region28: #{masked_lm_forward.1} parent=1 // pred_region
      _
    $region29: #{masked_lm_forward.1} parent=1 // pred_fallthru
      _
    // Predicated region
    $region30: #{masked_lm_forward.1} parent=1 // pred_check
      _
    $region31: #{masked_lm_forward.1} parent=1 // pred_check_branch
      %42 = sbr.rel (0) target = $region33
    $region32: #{masked_lm_forward.1} parent=1 // pred_region
      _
    $region33: #{masked_lm_forward.1} parent=1 // pred_fallthru
      _
    // Predicated region
    $region34: #{masked_lm_forward.1} parent=1 // pred_check
      _
    $region35: #{masked_lm_forward.1} parent=1 // pred_check_branch
      %44 = sbr.rel (0) target = $region37
    $region36: #{masked_lm_forward.1} parent=1 // pred_region
      _
    $region37: #{masked_lm_forward.1} parent=1 // pred_fallthru
      _
    // Predicated region
    $region38: #{masked_lm_forward.1} parent=1 // pred_check
      _
    $region39: #{masked_lm_forward.1} parent=1 // pred_check_branch
      %46 = sbr.rel (0) target = $region41
    $region40: #{masked_lm_forward.1} parent=1 // pred_region
      _
    $region41: #{masked_lm_forward.1} parent=1 // pred_fallthru
      _
    // Predicated region
    $region42: #{masked_lm_forward.1} parent=1 // pred_check
      _
    $region43: #{masked_lm_forward.1} parent=1 // pred_check_branch
      %48 = sbr.rel (0) target = $region45
    $region44: #{masked_lm_forward.1} parent=1 // pred_region
      _
    $region45: #{masked_lm_forward.1} parent=1 // pred_fallthru
      _
    // Predicated region
    $region46: #{masked_lm_forward.1} parent=1 // pred_check
      _
    $region47: #{masked_lm_forward.1} parent=1 // pred_check_branch
      %50 = sbr.rel (0) target = $region49
    $region48: #{masked_lm_forward.1} parent=1 // pred_region
      _
    $region49: #{masked_lm_forward.1} parent=1 // pred_fallthru
      _
    // Predicated region
    $region50: #{masked_lm_forward.1} parent=1 // pred_check
      _
    $region51: #{masked_lm_forward.1} parent=1 // pred_check_branch
      %52 = sbr.rel (0) target = $region53
    $region52: #{masked_lm_forward.1} parent=1 // pred_region
      _
    $region53: #{masked_lm_forward.1} parent=1 // pred_fallthru
      _
    // Predicated region
    $region54: #{masked_lm_forward.1} parent=1 // pred_check
      _
    $region55: #{masked_lm_forward.1} parent=1 // pred_check_branch
      %54 = sbr.rel (0) target = $region57
    $region56: #{masked_lm_forward.1} parent=1 // pred_region
      _
    $region57: #{masked_lm_forward.1} parent=1 // pred_fallthru
      _
    %s56 = sld [smem:[#allocation4]]
    %s57 = scalar_lea.vmem %s1, %s56
    %v58 = vld [vmem:[%s57] sm:$0x1]
    %v59 = vld [vmem:[%s2] sm:$0x1]
    %v60 = vadd.f32 %v58, %v59
    %vm61 = vcmask 253952
    %62 = vst.msk [vmem:[#allocation2] sm:$0x1] %vm61, %v60
    %s63 = sld [smem:[#allocation4 + $0x80]]
    %s64 = scalar_lea.vmem %s1, %s63
    %v65 = vld [vmem:[%s64] sm:$0x1]
    %v66 = vld [vmem:[%s2 + $0x1] sm:$0x1]
    %v67 = vadd.f32 %v65, %v66
    %68 = vst.msk [vmem:[#allocation2 + $0x1] sm:$0x1] %vm61, %v67
    %s69 = sld [smem:[#allocation4 + $0x100]]
    %s70 = scalar_lea.vmem %s1, %s69
    %v71 = vld [vmem:[%s70] sm:$0x1]
    %v72 = vld [vmem:[%s2 + $0x2] sm:$0x1]
    %v73 = vadd.f32 %v71, %v72
    %74 = vst.msk [vmem:[#allocation2 + $0x2] sm:$0x1] %vm61, %v73
    %s75 = sld [smem:[#allocation4 + $0x180]]
    %s76 = scalar_lea.vmem %s1, %s75
    %v77 = vld [vmem:[%s76] sm:$0x1]
    %v78 = vld [vmem:[%s2 + $0x3] sm:$0x1]
    %v79 = vadd.f32 %v77, %v78
    %80 = vst.msk [vmem:[#allocation2 + $0x3] sm:$0x1] %vm61, %v79
    %s81 = sld [smem:[#allocation4 + $0x200]]
    %s82 = scalar_lea.vmem %s1, %s81
    %v83 = vld [vmem:[%s82] sm:$0x1]
    %v84 = vld [vmem:[%s2 + $0x4] sm:$0x1]
    %v85 = vadd.f32 %v83, %v84
    %86 = vst.msk [vmem:[#allocation2 + $0x4] sm:$0x1] %vm61, %v85
    %s87 = sld [smem:[#allocation4 + $0x280]]
    %s88 = scalar_lea.vmem %s1, %s87
    %v89 = vld [vmem:[%s88] sm:$0x1]
    %v90 = vld [vmem:[%s2 + $0x5] sm:$0x1]
    %v91 = vadd.f32 %v89, %v90
    %92 = vst.msk [vmem:[#allocation2 + $0x5] sm:$0x1] %vm61, %v91
    %s93 = sld [smem:[#allocation4 + $0x300]]
    %s94 = scalar_lea.vmem %s1, %s93
    %v95 = vld [vmem:[%s94] sm:$0x1]
    %v96 = vld [vmem:[%s2 + $0x6] sm:$0x1]
    %v97 = vadd.f32 %v95, %v96
    %98 = vst.msk [vmem:[#allocation2 + $0x6] sm:$0x1] %vm61, %v97
    %s99 = sld [smem:[#allocation4 + $0x380]]
    %s100 = scalar_lea.vmem %s1, %s99
    %v101 = vld [vmem:[%s100] sm:$0x1]
    %v102 = vld [vmem:[%s2 + $0x7] sm:$0x1]
    %v103 = vadd.f32 %v101, %v102
    %104 = vst.msk [vmem:[#allocation2 + $0x7] sm:$0x1] %vm61, %v103
    %s105 = sld [smem:[#allocation4 + $0x1]]
    %s106 = scalar_lea.vmem %s1, %s105
    %v107 = vld [vmem:[%s106] sm:$0x1]
    %v108 = vld [vmem:[%s2] sm:$0x1]
    %v109 = vadd.f32 %v107, %v108
    %110 = vst.msk [vmem:[#allocation2 + $0x8] sm:$0x1] %vm61, %v109
    %s111 = sld [smem:[#allocation4 + $0x81]]
    %s112 = scalar_lea.vmem %s1, %s111
    %v113 = vld [vmem:[%s112] sm:$0x1]
    %v114 = vld [vmem:[%s2 + $0x1] sm:$0x1]
    %v115 = vadd.f32 %v113, %v114
    %116 = vst.msk [vmem:[#allocation2 + $0x9] sm:$0x1] %vm61, %v115
    %s117 = sld [smem:[#allocation4 + $0x101]]
    %s118 = scalar_lea.vmem %s1, %s117
    %v119 = vld [vmem:[%s118] sm:$0x1]
    %v120 = vld [vmem:[%s2 + $0x2] sm:$0x1]
    %v121 = vadd.f32 %v119, %v120
    %122 = vst.msk [vmem:[#allocation2 + $0xa] sm:$0x1] %vm61, %v121
    %s123 = sld [smem:[#allocation4 + $0x181]]
    %s124 = scalar_lea.vmem %s1, %s123
    %v125 = vld [vmem:[%s124] sm:$0x1]
    %v126 = vld [vmem:[%s2 + $0x3] sm:$0x1]
    %v127 = vadd.f32 %v125, %v126
    %128 = vst.msk [vmem:[#allocation2 + $0xb] sm:$0x1] %vm61, %v127
    %s129 = sld [smem:[#allocation4 + $0x201]]
    %s130 = scalar_lea.vmem %s1, %s129
    %v131 = vld [vmem:[%s130] sm:$0x1]
    %v132 = vld [vmem:[%s2 + $0x4] sm:$0x1]
    %v133 = vadd.f32 %v131, %v132
    %134 = vst.msk [vmem:[#allocation2 + $0xc] sm:$0x1] %vm61, %v133
    %s135 = sld [smem:[#allocation4 + $0x281]]
    %s136 = scalar_lea.vmem %s1, %s135
    %v137 = vld [vmem:[%s136] sm:$0x1]
    %v138 = vld [vmem:[%s2 + $0x5] sm:$0x1]
    %v139 = vadd.f32 %v137, %v138
    %140 = vst.msk [vmem:[#allocation2 + $0xd] sm:$0x1] %vm61, %v139
    %s141 = sld [smem:[#allocation4 + $0x301]]
    %s142 = scalar_lea.vmem %s1, %s141
    %v143 = vld [vmem:[%s142] sm:$0x1]
    %v144 = vld [vmem:[%s2 + $0x6] sm:$0x1]
    %v145 = vadd.f32 %v143, %v144
    %146 = vst.msk [vmem:[#allocation2 + $0xe] sm:$0x1] %vm61, %v145
    %s147 = sld [smem:[#allocation4 + $0x381]]
    %s148 = scalar_lea.vmem %s1, %s147
    %v149 = vld [vmem:[%s148] sm:$0x1]
    %v150 = vld [vmem:[%s2 + $0x7] sm:$0x1]
    %v151 = vadd.f32 %v149, %v150
    %152 = vst.msk [vmem:[#allocation2 + $0xf] sm:$0x1] %vm61, %v151
    %v153 = vld [vmem:[#allocation2] sm:$0xff]
    %v154 = vld [vmem:[#allocation2 + $0x8] sm:$0xff]
    %v155 = vpack.c.bf16 %v154, %v153
    %v156 = vld [vmem:[%s3] sm:$0xf]
    %v157 = vld [vmem:[%s3 + $0x4] sm:$0xf]
    %v158 = vld [vmem:[%s3 + $0x8] sm:$0xf]
    %v159 = vld [vmem:[%s3 + $0xc] sm:$0xf]
    %v160 = vld [vmem:[%s4] sm:$0x1]
    %v162 = vlaneseq
    %v163 = vshrl.u32 %v162, 7
    %v164 = vsub.s32 0, %v163
    %v165 = vrot.slane %v160, %v164
    %v171 = vunpack.c.l.b16 %v156
    %v172 = vunpack.c.l.b16 %v157
    %v173 = vunpack.c.l.b16 %v158
    %v174 = vunpack.c.l.b16 %v159
    %v175 = vpack.c.b16 %v172, %v171
    %v176 = vpack.c.b16 %v174, %v173
    %vm179 = vcmask 261120
    %v181 = vsel %vm179, %v155, 0
    %183 = vmatprep.subr.bf16.mxu0 0
    %184 = vmatpush1.bf16.msra.mxu0 %v175
    %185 = vmatprep.subr.bf16.mxu0 0
    %186 = vmatpush1.bf16.msra.mxu0 %v176
    %187 = vmatprep.subr.bf16.mxu0 0
    %188 = vmatpush1.bf16.msra.mxu0 0
    %189 = vmatprep.subr.bf16.mxu0 0
    %190 = vmatpush1.bf16.msra.mxu0 0
    %191 = vmatprep.subr.bf16.mxu0 0
    %192 = vmatpush1.bf16.msra.mxu0 0
    %193 = vmatprep.subr.bf16.mxu0 0
    %194 = vmatpush1.bf16.msra.mxu0 0
    %195 = vmatprep.subr.bf16.mxu0 0
    %196 = vmatpush1.bf16.msra.mxu0 0
    %197 = vmatprep.subr.bf16.mxu0 0
    %198 = vmatpush1.bf16.msra.mxu0 0
    %199 = vmatprep.subr.bf16.mxu0 0
    %200 = vmatpush1.bf16.msra.mxu0 0
    %201 = vmatprep.subr.bf16.mxu0 0
    %202 = vmatpush1.bf16.msra.mxu0 0
    %203 = vmatprep.subr.bf16.mxu0 0
    %204 = vmatpush1.bf16.msra.mxu0 0
    %205 = vmatprep.subr.bf16.mxu0 0
    %206 = vmatpush1.bf16.msra.mxu0 0
    %207 = vmatprep.subr.bf16.mxu0 0
    %208 = vmatpush1.bf16.msra.mxu0 0
    %209 = vmatprep.subr.bf16.mxu0 0
    %210 = vmatpush1.bf16.msra.mxu0 0
    %211 = vmatprep.subr.bf16.mxu0 0
    %212 = vmatpush1.bf16.msra.mxu0 0
    %213 = vmatprep.subr.bf16.mxu0 0
    %214 = vmatpush1.bf16.msra.mxu0 0
    %215 = vmatprep.mubr.bf16.mxu0 0
    %216 = vmatmul.mubr.bf16.gmra.mrb[0].mxu0 %v181
    %v217 = vpop.f32.mrb[0].mxu0
    %v218 = vadd.f32 %v165, %v217
    %v219 = vpop.f32.mrb[0].mxu0
    %v220 = vpop.f32.mrb[0].mxu0
    %v221 = vadd.f32 %v165, %v220
    %v222 = vpop.f32.mrb[0].mxu0
    %223 = vdwg.mxu0
    %s224 = scalar_lea.vmem %s3, 64
    %v225 = vld [vmem:[%s224] sm:$0xf]
    %v226 = vld [vmem:[%s224 + $0x4] sm:$0xf]
    %v227 = vld [vmem:[%s224 + $0x8] sm:$0xf]
    %v228 = vld [vmem:[%s224 + $0xc] sm:$0xf]
    %s229 = scalar_lea.vmem %s4, 4
    %v230 = vld [vmem:[%s229] sm:$0x1]
    %v232 = vlaneseq
    %v233 = vshrl.u32 %v232, 7
    %v234 = vsub.s32 0, %v233
    %v235 = vrot.slane %v230, %v234
    %v241 = vunpack.c.l.b16 %v225
    %v242 = vunpack.c.l.b16 %v226
    %v243 = vunpack.c.l.b16 %v227
    %v244 = vunpack.c.l.b16 %v228
    %v245 = vpack.c.b16 %v242, %v241
    %v246 = vpack.c.b16 %v244, %v243
    %249 = vmatprep.subr.bf16.mxu0 0
    %250 = vmatpush1.bf16.msra.mxu0 %v245
    %251 = vmatprep.subr.bf16.mxu0 0
    %252 = vmatpush1.bf16.msra.mxu0 %v246
    %253 = vmatprep.subr.bf16.mxu0 0
    %254 = vmatpush1.bf16.msra.mxu0 0
    %255 = vmatprep.subr.bf16.mxu0 0
    %256 = vmatpush1.bf16.msra.mxu0 0
    %257 = vmatprep.subr.bf16.mxu0 0
    %258 = vmatpush1.bf16.msra.mxu0 0
    %259 = vmatprep.subr.bf16.mxu0 0
    %260 = vmatpush1.bf16.msra.mxu0 0
    %261 = vmatprep.subr.bf16.mxu0 0
    %262 = vmatpush1.bf16.msra.mxu0 0
    %263 = vmatprep.subr.bf16.mxu0 0
    %264 = vmatpush1.bf16.msra.mxu0 0
    %265 = vmatprep.subr.bf16.mxu0 0
    %266 = vmatpush1.bf16.msra.mxu0 0
    %267 = vmatprep.subr.bf16.mxu0 0
    %268 = vmatpush1.bf16.msra.mxu0 0
    %269 = vmatprep.subr.bf16.mxu0 0
    %270 = vmatpush1.bf16.msra.mxu0 0
    %271 = vmatprep.subr.bf16.mxu0 0
    %272 = vmatpush1.bf16.msra.mxu0 0
    %273 = vmatprep.subr.bf16.mxu0 0
    %274 = vmatpush1.bf16.msra.mxu0 0
    %275 = vmatprep.subr.bf16.mxu0 0
    %276 = vmatpush1.bf16.msra.mxu0 0
    %277 = vmatprep.subr.bf16.mxu0 0
    %278 = vmatpush1.bf16.msra.mxu0 0
    %279 = vmatprep.subr.bf16.mxu0 0
    %280 = vmatpush1.bf16.msra.mxu0 0
    %281 = vmatprep.mubr.bf16.mxu0 0
    %282 = vmatmul.mubr.bf16.gmra.mrb[0].mxu0 %v181
    %v283 = vpop.f32.mrb[0].mxu0
    %v284 = vadd.f32 %v235, %v283
    %v285 = vpop.f32.mrb[0].mxu0
    %v286 = vpop.f32.mrb[0].mxu0
    %v287 = vadd.f32 %v235, %v286
    %v288 = vpop.f32.mrb[0].mxu0
    %289 = vdwg.mxu0
    %s290 = scalar_lea.vmem %s3, 128
    %v291 = vld [vmem:[%s290] sm:$0xf]
    %v292 = vld [vmem:[%s290 + $0x4] sm:$0xf]
    %v293 = vld [vmem:[%s290 + $0x8] sm:$0xf]
    %v294 = vld [vmem:[%s290 + $0xc] sm:$0xf]
    %s295 = scalar_lea.vmem %s4, 8
    %v296 = vld [vmem:[%s295] sm:$0x1]
    %v298 = vlaneseq
    %v299 = vshrl.u32 %v298, 7
    %v300 = vsub.s32 0, %v299
    %v301 = vrot.slane %v296, %v300
    %v307 = vunpack.c.l.b16 %v291
    %v308 = vunpack.c.l.b16 %v292
    %v309 = vunpack.c.l.b16 %v293
    %v310 = vunpack.c.l.b16 %v294
    %v311 = vpack.c.b16 %v308, %v307
    %v312 = vpack.c.b16 %v310, %v309
    %315 = vmatprep.subr.bf16.mxu0 0
    %316 = vmatpush1.bf16.msra.mxu0 %v311
    %317 = vmatprep.subr.bf16.mxu0 0
    %318 = vmatpush1.bf16.msra.mxu0 %v312
    %319 = vmatprep.subr.bf16.mxu0 0
    %320 = vmatpush1.bf16.msra.mxu0 0
    %321 = vmatprep.subr.bf16.mxu0 0
    %322 = vmatpush1.bf16.msra.mxu0 0
    %323 = vmatprep.subr.bf16.mxu0 0
    %324 = vmatpush1.bf16.msra.mxu0 0
    %325 = vmatprep.subr.bf16.mxu0 0
    %326 = vmatpush1.bf16.msra.mxu0 0
    %327 = vmatprep.subr.bf16.mxu0 0
    %328 = vmatpush1.bf16.msra.mxu0 0
    %329 = vmatprep.subr.bf16.mxu0 0
    %330 = vmatpush1.bf16.msra.mxu0 0
    %331 = vmatprep.subr.bf16.mxu0 0
    %332 = vmatpush1.bf16.msra.mxu0 0
    %333 = vmatprep.subr.bf16.mxu0 0
    %334 = vmatpush1.bf16.msra.mxu0 0
    %335 = vmatprep.subr.bf16.mxu0 0
    %336 = vmatpush1.bf16.msra.mxu0 0
    %337 = vmatprep.subr.bf16.mxu0 0
    %338 = vmatpush1.bf16.msra.mxu0 0
    %339 = vmatprep.subr.bf16.mxu0 0
    %340 = vmatpush1.bf16.msra.mxu0 0
    %341 = vmatprep.subr.bf16.mxu0 0
    %342 = vmatpush1.bf16.msra.mxu0 0
    %343 = vmatprep.subr.bf16.mxu0 0
    %344 = vmatpush1.bf16.msra.mxu0 0
    %345 = vmatprep.subr.bf16.mxu0 0
    %346 = vmatpush1.bf16.msra.mxu0 0
    %347 = vmatprep.mubr.bf16.mxu0 0
    %348 = vmatmul.mubr.bf16.gmra.mrb[0].mxu0 %v181
    %v349 = vpop.f32.mrb[0].mxu0
    %v350 = vadd.f32 %v301, %v349
    %v351 = vpop.f32.mrb[0].mxu0
    %v352 = vpop.f32.mrb[0].mxu0
    %v353 = vadd.f32 %v301, %v352
    %v354 = vpop.f32.mrb[0].mxu0
    %355 = vdwg.mxu0
    %v356 = vpack.c.bf16 %v218, %v218
    %v357 = vpack.c.bf16 %v221, %v221
    %v358 = vpack.c.bf16 %v284, %v284
    %v359 = vpack.c.bf16 %v287, %v287
    %vm360 = vcmask 64512
    %v362 = vsel %vm360, %v356, 0
    %v365 = vsel %vm360, %v358, 0
    %367 = vmatprep.subr.bf16.mxu0 0
    %368 = vmatpush1.bf16.xpose.msra.mxu0 %v365
    %369 = vmatprep.subr.bf16.mxu0 0
    %370 = vmatpush1.bf16.xpose.msra.mxu0 0
    %371 = vmatprep.subr.bf16.mxu0 0
    %372 = vmatpush1.bf16.xpose.msra.mxu0 0
    %373 = vmatprep.subr.bf16.mxu0 0
    %374 = vmatpush1.bf16.xpose.msra.mxu0 0
    %375 = vmatprep.subr.bf16.mxu0 0
    %376 = vmatpush1.bf16.xpose.msra.mxu0 0
    %377 = vmatprep.subr.bf16.mxu0 0
    %378 = vmatpush1.bf16.xpose.msra.mxu0 0
    %379 = vmatprep.subr.bf16.mxu0 0
    %380 = vmatpush1.bf16.xpose.msra.mxu0 0
    %381 = vmatprep.subr.bf16.mxu0 0
    %382 = vmatpush1.bf16.xpose.msra.mxu0 0
    %383 = vmatprep.subr.bf16.mxu0 0
    %384 = vmatpush1.bf16.xpose.msra.mxu0 0
    %385 = vmatprep.subr.bf16.mxu0 0
    %386 = vmatpush1.bf16.xpose.msra.mxu0 0
    %387 = vmatprep.subr.bf16.mxu0 0
    %388 = vmatpush1.bf16.xpose.msra.mxu0 0
    %389 = vmatprep.subr.bf16.mxu0 0
    %390 = vmatpush1.bf16.xpose.msra.mxu0 0
    %391 = vmatprep.subr.bf16.mxu0 0
    %392 = vmatpush1.bf16.xpose.msra.mxu0 0
    %393 = vmatprep.subr.bf16.mxu0 0
    %394 = vmatpush1.bf16.xpose.msra.mxu0 0
    %395 = vmatprep.subr.bf16.mxu0 0
    %396 = vmatpush1.bf16.xpose.msra.mxu0 0
    %397 = vmatprep.subr.bf16.mxu0 0
    %398 = vmatpush1.bf16.xpose.msra.mxu0 0
    %399 = vmatprep.mubr.bf16.mxu0 0
    %400 = vmatmul.mubr.bf16.gmra.mrb[0].mxu0 %v362
    %v401 = vpop.f32.mrb[0].mxu0
    %v402 = vadd.f32 0.0, %v401
    %v403 = vpop.f32.mrb[0].mxu0
    %v404 = vpop.f32.mrb[0].mxu0
    %v405 = vpop.f32.mrb[0].mxu0
    %406 = vdwg.mxu0
    %v408 = vsel %vm360, %v357, 0
    %v411 = vsel %vm360, %v359, 0
    %413 = vmatprep.subr.bf16.mxu0 0
    %414 = vmatpush1.bf16.xpose.msra.mxu0 %v411
    %415 = vmatprep.subr.bf16.mxu0 0
    %416 = vmatpush1.bf16.xpose.msra.mxu0 0
    %417 = vmatprep.subr.bf16.mxu0 0
    %418 = vmatpush1.bf16.xpose.msra.mxu0 0
    %419 = vmatprep.subr.bf16.mxu0 0
    %420 = vmatpush1.bf16.xpose.msra.mxu0 0
    %421 = vmatprep.subr.bf16.mxu0 0
    %422 = vmatpush1.bf16.xpose.msra.mxu0 0
    %423 = vmatprep.subr.bf16.mxu0 0
    %424 = vmatpush1.bf16.xpose.msra.mxu0 0
    %425 = vmatprep.subr.bf16.mxu0 0
    %426 = vmatpush1.bf16.xpose.msra.mxu0 0
    %427 = vmatprep.subr.bf16.mxu0 0
    %428 = vmatpush1.bf16.xpose.msra.mxu0 0
    %429 = vmatprep.subr.bf16.mxu0 0
    %430 = vmatpush1.bf16.xpose.msra.mxu0 0
    %431 = vmatprep.subr.bf16.mxu0 0
    %432 = vmatpush1.bf16.xpose.msra.mxu0 0
    %433 = vmatprep.subr.bf16.mxu0 0
    %434 = vmatpush1.bf16.xpose.msra.mxu0 0
    %435 = vmatprep.subr.bf16.mxu0 0
    %436 = vmatpush1.bf16.xpose.msra.mxu0 0
    %437 = vmatprep.subr.bf16.mxu0 0
    %438 = vmatpush1.bf16.xpose.msra.mxu0 0
    %439 = vmatprep.subr.bf16.mxu0 0
    %440 = vmatpush1.bf16.xpose.msra.mxu0 0
    %441 = vmatprep.subr.bf16.mxu0 0
    %442 = vmatpush1.bf16.xpose.msra.mxu0 0
    %443 = vmatprep.subr.bf16.mxu0 0
    %444 = vmatpush1.bf16.xpose.msra.mxu0 0
    %445 = vmatprep.mubr.bf16.mxu0 0
    %446 = vmatmul.mubr.bf16.gmra.mrb[0].mxu0 %v408
    %v447 = vpop.f32.mrb[0].mxu0
    %v448 = vadd.f32 0.0, %v447
    %v449 = vpop.f32.mrb[0].mxu0
    %v450 = vpop.f32.mrb[0].mxu0
    %v451 = vpop.f32.mrb[0].mxu0
    %452 = vdwg.mxu0
    %v453 = vmul.f32 %v402, 0.35355338
    %v454 = vmul.f32 %v448, 0.35355338
    %v455 = vsel %vm360, %v453, -inf
    %456 = vmax.xlane.f32.xlu0 %v455
    %v457 = vpop.xlane.xlu0 %456
    %v458 = vsel %vm360, %v454, -inf
    %459 = vmax.xlane.f32.xlu0 %v458
    %v460 = vpop.xlane.xlu0 %459
    %v461 = vsub.f32 %v453, %v457
    %v462 = vsub.f32 %v454, %v460
    %v463 = vmul.f32 %v461, 1.442695
    %v464 = vpow.pop %v463
    %v465 = vmul.f32 %v462, 1.442695
    %v466 = vpow.pop %v465
    %v467 = vsel %vm360, %v464, 0.0
    %468 = vadd.xlane.f32.xlu0 %v467
    %v469 = vpop.xlane.xlu0 %468
    %v470 = vsel %vm360, %v466, 0.0
    %471 = vadd.xlane.f32.xlu0 %v470
    %v472 = vpop.xlane.xlu0 %471
    %v473 = vrcp.pop %v469
    %v474 = vrcp.pop %v472
    %v475 = vmul.f32 %v464, %v473
    %v476 = vmul.f32 %v466, %v474
    %v477 = vpack.c.bf16 %v475, %v475
    %v478 = vpack.c.bf16 %v476, %v476
    %v479 = vpack.c.bf16 %v350, %v350
    %v480 = vpack.c.bf16 %v353, %v353
    %v482 = vsel %vm360, %v477, 0
    %vm484 = vcmask 1043456
    %v486 = vsel %vm484, %v479, 0
    %488 = vmatprep.subr.bf16.mxu0 0
    %489 = vmatpush1.bf16.msra.mxu0 %v486
    %490 = vmatprep.subr.bf16.mxu0 0
    %491 = vmatpush1.bf16.msra.mxu0 0
    %492 = vmatprep.subr.bf16.mxu0 0
    %493 = vmatpush1.bf16.msra.mxu0 0
    %494 = vmatprep.subr.bf16.mxu0 0
    %495 = vmatpush1.bf16.msra.mxu0 0
    %496 = vmatprep.subr.bf16.mxu0 0
    %497 = vmatpush1.bf16.msra.mxu0 0
    %498 = vmatprep.subr.bf16.mxu0 0
    %499 = vmatpush1.bf16.msra.mxu0 0
    %500 = vmatprep.subr.bf16.mxu0 0
    %501 = vmatpush1.bf16.msra.mxu0 0
    %502 = vmatprep.subr.bf16.mxu0 0
    %503 = vmatpush1.bf16.msra.mxu0 0
    %504 = vmatprep.subr.bf16.mxu0 0
    %505 = vmatpush1.bf16.msra.mxu0 0
    %506 = vmatprep.subr.bf16.mxu0 0
    %507 = vmatpush1.bf16.msra.mxu0 0
    %508 = vmatprep.subr.bf16.mxu0 0
    %509 = vmatpush1.bf16.msra.mxu0 0
    %510 = vmatprep.subr.bf16.mxu0 0
    %511 = vmatpush1.bf16.msra.mxu0 0
    %512 = vmatprep.subr.bf16.mxu0 0
    %513 = vmatpush1.bf16.msra.mxu0 0
    %514 = vmatprep.subr.bf16.mxu0 0
    %515 = vmatpush1.bf16.msra.mxu0 0
    %516 = vmatprep.subr.bf16.mxu0 0
    %517 = vmatpush1.bf16.msra.mxu0 0
    %518 = vmatprep.subr.bf16.mxu0 0
    %519 = vmatpush1.bf16.msra.mxu0 0
    %520 = vmatprep.mubr.bf16.mxu0 0
    %521 = vmatmul.mubr.bf16.gmra.mrb[0].mxu0 %v482
    %v522 = vpop.f32.mrb[0].mxu0
    %v523 = vadd.f32 0.0, %v522
    %v524 = vpop.f32.mrb[0].mxu0
    %v525 = vpop.f32.mrb[0].mxu0
    %v526 = vpop.f32.mrb[0].mxu0
    %527 = vdwg.mxu0
    %v529 = vsel %vm360, %v478, 0
    %v532 = vsel %vm484, %v480, 0
    %534 = vmatprep.subr.bf16.mxu0 0
    %535 = vmatpush1.bf16.msra.mxu0 %v532
    %536 = vmatprep.subr.bf16.mxu0 0
    %537 = vmatpush1.bf16.msra.mxu0 0
    %538 = vmatprep.subr.bf16.mxu0 0
    %539 = vmatpush1.bf16.msra.mxu0 0
    %540 = vmatprep.subr.bf16.mxu0 0
    %541 = vmatpush1.bf16.msra.mxu0 0
    %542 = vmatprep.subr.bf16.mxu0 0
    %543 = vmatpush1.bf16.msra.mxu0 0
    %544 = vmatprep.subr.bf16.mxu0 0
    %545 = vmatpush1.bf16.msra.mxu0 0
    %546 = vmatprep.subr.bf16.mxu0 0
    %547 = vmatpush1.bf16.msra.mxu0 0
    %548 = vmatprep.subr.bf16.mxu0 0
    %549 = vmatpush1.bf16.msra.mxu0 0
    %550 = vmatprep.subr.bf16.mxu0 0
    %551 = vmatpush1.bf16.msra.mxu0 0
    %552 = vmatprep.subr.bf16.mxu0 0
    %553 = vmatpush1.bf16.msra.mxu0 0
    %554 = vmatprep.subr.bf16.mxu0 0
    %555 = vmatpush1.bf16.msra.mxu0 0
    %556 = vmatprep.subr.bf16.mxu0 0
    %557 = vmatpush1.bf16.msra.mxu0 0
    %558 = vmatprep.subr.bf16.mxu0 0
    %559 = vmatpush1.bf16.msra.mxu0 0
    %560 = vmatprep.subr.bf16.mxu0 0
    %561 = vmatpush1.bf16.msra.mxu0 0
    %562 = vmatprep.subr.bf16.mxu0 0
    %563 = vmatpush1.bf16.msra.mxu0 0
    %564 = vmatprep.subr.bf16.mxu0 0
    %565 = vmatpush1.bf16.msra.mxu0 0
    %566 = vmatprep.mubr.bf16.mxu0 0
    %567 = vmatmul.mubr.bf16.gmra.mrb[0].mxu0 %v529
    %v568 = vpop.f32.mrb[0].mxu0
    %v569 = vadd.f32 0.0, %v568
    %v570 = vpop.f32.mrb[0].mxu0
    %v571 = vpop.f32.mrb[0].mxu0
    %v572 = vpop.f32.mrb[0].mxu0
    %573 = vdwg.mxu0
    %v574 = vpack.c.bf16 %v569, %v523
    %v575 = vld [vmem:[%s5] sm:$0xf]
    %s576 = scalar_lea.vmem %s3, 16
    %v577 = vld [vmem:[%s576] sm:$0xf]
    %v578 = vld [vmem:[%s576 + $0x4] sm:$0xf]
    %v579 = vld [vmem:[%s576 + $0x8] sm:$0xf]
    %v580 = vld [vmem:[%s576 + $0xc] sm:$0xf]
    %s581 = scalar_lea.vmem %s4, 1
    %v582 = vld [vmem:[%s581] sm:$0x1]
    %v584 = vlaneseq
    %v585 = vshrl.u32 %v584, 7
    %v586 = vsub.s32 0, %v585
    %v587 = vrot.slane %v582, %v586
    %v593 = vunpack.c.l.b16 %v577
    %v594 = vunpack.c.l.b16 %v578
    %v595 = vunpack.c.l.b16 %v579
    %v596 = vunpack.c.l.b16 %v580
    %v597 = vpack.c.b16 %v594, %v593
    %v598 = vpack.c.b16 %v596, %v595
    %601 = vmatprep.subr.bf16.mxu0 0
    %602 = vmatpush1.bf16.msra.mxu0 %v597
    %603 = vmatprep.subr.bf16.mxu0 0
    %604 = vmatpush1.bf16.msra.mxu0 %v598
    %605 = vmatprep.subr.bf16.mxu0 0
    %606 = vmatpush1.bf16.msra.mxu0 0
    %607 = vmatprep.subr.bf16.mxu0 0
    %608 = vmatpush1.bf16.msra.mxu0 0
    %609 = vmatprep.subr.bf16.mxu0 0
    %610 = vmatpush1.bf16.msra.mxu0 0
    %611 = vmatprep.subr.bf16.mxu0 0
    %612 = vmatpush1.bf16.msra.mxu0 0
    %613 = vmatprep.subr.bf16.mxu0 0
    %614 = vmatpush1.bf16.msra.mxu0 0
    %615 = vmatprep.subr.bf16.mxu0 0
    %616 = vmatpush1.bf16.msra.mxu0 0
    %617 = vmatprep.subr.bf16.mxu0 0
    %618 = vmatpush1.bf16.msra.mxu0 0
    %619 = vmatprep.subr.bf16.mxu0 0
    %620 = vmatpush1.bf16.msra.mxu0 0
    %621 = vmatprep.subr.bf16.mxu0 0
    %622 = vmatpush1.bf16.msra.mxu0 0
    %623 = vmatprep.subr.bf16.mxu0 0
    %624 = vmatpush1.bf16.msra.mxu0 0
    %625 = vmatprep.subr.bf16.mxu0 0
    %626 = vmatpush1.bf16.msra.mxu0 0
    %627 = vmatprep.subr.bf16.mxu0 0
    %628 = vmatpush1.bf16.msra.mxu0 0
    %629 = vmatprep.subr.bf16.mxu0 0
    %630 = vmatpush1.bf16.msra.mxu0 0
    %631 = vmatprep.subr.bf16.mxu0 0
    %632 = vmatpush1.bf16.msra.mxu0 0
    %633 = vmatprep.mubr.bf16.mxu0 0
    %634 = vmatmul.mubr.bf16.gmra.mrb[0].mxu0 %v181
    %v635 = vpop.f32.mrb[0].mxu0
    %v636 = vadd.f32 %v587, %v635
    %v637 = vpop.f32.mrb[0].mxu0
    %v638 = vpop.f32.mrb[0].mxu0
    %v639 = vadd.f32 %v587, %v638
    %v640 = vpop.f32.mrb[0].mxu0
    %641 = vdwg.mxu0
    %s642 = scalar_lea.vmem %s3, 80
    %v643 = vld [vmem:[%s642] sm:$0xf]
    %v644 = vld [vmem:[%s642 + $0x4] sm:$0xf]
    %v645 = vld [vmem:[%s642 + $0x8] sm:$0xf]
    %v646 = vld [vmem:[%s642 + $0xc] sm:$0xf]
    %s647 = scalar_lea.vmem %s4, 5
    %v648 = vld [vmem:[%s647] sm:$0x1]
    %v650 = vlaneseq
    %v651 = vshrl.u32 %v650, 7
    %v652 = vsub.s32 0, %v651
    %v653 = vrot.slane %v648, %v652
    %v659 = vunpack.c.l.b16 %v643
    %v660 = vunpack.c.l.b16 %v644
    %v661 = vunpack.c.l.b16 %v645
    %v662 = vunpack.c.l.b16 %v646
    %v663 = vpack.c.b16 %v660, %v659
    %v664 = vpack.c.b16 %v662, %v661
    %667 = vmatprep.subr.bf16.mxu0 0
    %668 = vmatpush1.bf16.msra.mxu0 %v663
    %669 = vmatprep.subr.bf16.mxu0 0
    %670 = vmatpush1.bf16.msra.mxu0 %v664
    %671 = vmatprep.subr.bf16.mxu0 0
    %672 = vmatpush1.bf16.msra.mxu0 0
    %673 = vmatprep.subr.bf16.mxu0 0
    %674 = vmatpush1.bf16.msra.mxu0 0
    %675 = vmatprep.subr.bf16.mxu0 0
    %676 = vmatpush1.bf16.msra.mxu0 0
    %677 = vmatprep.subr.bf16.mxu0 0
    %678 = vmatpush1.bf16.msra.mxu0 0
    %679 = vmatprep.subr.bf16.mxu0 0
    %680 = vmatpush1.bf16.msra.mxu0 0
    %681 = vmatprep.subr.bf16.mxu0 0
    %682 = vmatpush1.bf16.msra.mxu0 0
    %683 = vmatprep.subr.bf16.mxu0 0
    %684 = vmatpush1.bf16.msra.mxu0 0
    %685 = vmatprep.subr.bf16.mxu0 0
    %686 = vmatpush1.bf16.msra.mxu0 0
    %687 = vmatprep.subr.bf16.mxu0 0
    %688 = vmatpush1.bf16.msra.mxu0 0
    %689 = vmatprep.subr.bf16.mxu0 0
    %690 = vmatpush1.bf16.msra.mxu0 0
    %691 = vmatprep.subr.bf16.mxu0 0
    %692 = vmatpush1.bf16.msra.mxu0 0
    %693 = vmatprep.subr.bf16.mxu0 0
    %694 = vmatpush1.bf16.msra.mxu0 0
    %695 = vmatprep.subr.bf16.mxu0 0
    %696 = vmatpush1.bf16.msra.mxu0 0
    %697 = vmatprep.subr.bf16.mxu0 0
    %698 = vmatpush1.bf16.msra.mxu0 0
    %699 = vmatprep.mubr.bf16.mxu0 0
    %700 = vmatmul.mubr.bf16.gmra.mrb[0].mxu0 %v181
    %v701 = vpop.f32.mrb[0].mxu0
    %v702 = vadd.f32 %v653, %v701
    %v703 = vpop.f32.mrb[0].mxu0
    %v704 = vpop.f32.mrb[0].mxu0
    %v705 = vadd.f32 %v653, %v704
    %v706 = vpop.f32.mrb[0].mxu0
    %707 = vdwg.mxu0
    %s708 = scalar_lea.vmem %s3, 144
    %v709 = vld [vmem:[%s708] sm:$0xf]
    %v710 = vld [vmem:[%s708 + $0x4] sm:$0xf]
    %v711 = vld [vmem:[%s708 + $0x8] sm:$0xf]
    %v712 = vld [vmem:[%s708 + $0xc] sm:$0xf]
    %s713 = scalar_lea.vmem %s4, 9
    %v714 = vld [vmem:[%s713] sm:$0x1]
    %v716 = vlaneseq
    %v717 = vshrl.u32 %v716, 7
    %v718 = vsub.s32 0, %v717
    %v719 = vrot.slane %v714, %v718
    %v725 = vunpack.c.l.b16 %v709
    %v726 = vunpack.c.l.b16 %v710
    %v727 = vunpack.c.l.b16 %v711
    %v728 = vunpack.c.l.b16 %v712
    %v729 = vpack.c.b16 %v726, %v725
    %v730 = vpack.c.b16 %v728, %v727
    %733 = vmatprep.subr.bf16.mxu0 0
    %734 = vmatpush1.bf16.msra.mxu0 %v729
    %735 = vmatprep.subr.bf16.mxu0 0
    %736 = vmatpush1.bf16.msra.mxu0 %v730
    %737 = vmatprep.subr.bf16.mxu0 0
    %738 = vmatpush1.bf16.msra.mxu0 0
    %739 = vmatprep.subr.bf16.mxu0 0
    %740 = vmatpush1.bf16.msra.mxu0 0
    %741 = vmatprep.subr.bf16.mxu0 0
    %742 = vmatpush1.bf16.msra.mxu0 0
    %743 = vmatprep.subr.bf16.mxu0 0
    %744 = vmatpush1.bf16.msra.mxu0 0
    %745 = vmatprep.subr.bf16.mxu0 0
    %746 = vmatpush1.bf16.msra.mxu0 0
    %747 = vmatprep.subr.bf16.mxu0 0
    %748 = vmatpush1.bf16.msra.mxu0 0
    %749 = vmatprep.subr.bf16.mxu0 0
    %750 = vmatpush1.bf16.msra.mxu0 0
    %751 = vmatprep.subr.bf16.mxu0 0
    %752 = vmatpush1.bf16.msra.mxu0 0
    %753 = vmatprep.subr.bf16.mxu0 0
    %754 = vmatpush1.bf16.msra.mxu0 0
    %755 = vmatprep.subr.bf16.mxu0 0
    %756 = vmatpush1.bf16.msra.mxu0 0
    %757 = vmatprep.subr.bf16.mxu0 0
    %758 = vmatpush1.bf16.msra.mxu0 0
    %759 = vmatprep.subr.bf16.mxu0 0
    %760 = vmatpush1.bf16.msra.mxu0 0
    %761 = vmatprep.subr.bf16.mxu0 0
    %762 = vmatpush1.bf16.msra.mxu0 0
    %763 = vmatprep.subr.bf16.mxu0 0
    %764 = vmatpush1.bf16.msra.mxu0 0
    %765 = vmatprep.mubr.bf16.mxu0 0
    %766 = vmatmul.mubr.bf16.gmra.mrb[0].mxu0 %v181
    %v767 = vpop.f32.mrb[0].mxu0
    %v768 = vadd.f32 %v719, %v767
    %v769 = vpop.f32.mrb[0].mxu0
    %v770 = vpop.f32.mrb[0].mxu0
    %v771 = vadd.f32 %v719, %v770
    %v772 = vpop.f32.mrb[0].mxu0
    %773 = vdwg.mxu0
    %v774 = vpack.c.bf16 %v636, %v636
    %v775 = vpack.c.bf16 %v639, %v639
    %v776 = vpack.c.bf16 %v702, %v702
    %v777 = vpack.c.bf16 %v705, %v705
    %v779 = vsel %vm360, %v774, 0
    %v782 = vsel %vm360, %v776, 0
    %784 = vmatprep.subr.bf16.mxu0 0
    %785 = vmatpush1.bf16.xpose.msra.mxu0 %v782
    %786 = vmatprep.subr.bf16.mxu0 0
    %787 = vmatpush1.bf16.xpose.msra.mxu0 0
    %788 = vmatprep.subr.bf16.mxu0 0
    %789 = vmatpush1.bf16.xpose.msra.mxu0 0
    %790 = vmatprep.subr.bf16.mxu0 0
    %791 = vmatpush1.bf16.xpose.msra.mxu0 0
    %792 = vmatprep.subr.bf16.mxu0 0
    %793 = vmatpush1.bf16.xpose.msra.mxu0 0
    %794 = vmatprep.subr.bf16.mxu0 0
    %795 = vmatpush1.bf16.xpose.msra.mxu0 0
    %796 = vmatprep.subr.bf16.mxu0 0
    %797 = vmatpush1.bf16.xpose.msra.mxu0 0
    %798 = vmatprep.subr.bf16.mxu0 0
    %799 = vmatpush1.bf16.xpose.msra.mxu0 0
    %800 = vmatprep.subr.bf16.mxu0 0
    %801 = vmatpush1.bf16.xpose.msra.mxu0 0
    %802 = vmatprep.subr.bf16.mxu0 0
    %803 = vmatpush1.bf16.xpose.msra.mxu0 0
    %804 = vmatprep.subr.bf16.mxu0 0
    %805 = vmatpush1.bf16.xpose.msra.mxu0 0
    %806 = vmatprep.subr.bf16.mxu0 0
    %807 = vmatpush1.bf16.xpose.msra.mxu0 0
    %808 = vmatprep.subr.bf16.mxu0 0
    %809 = vmatpush1.bf16.xpose.msra.mxu0 0
    %810 = vmatprep.subr.bf16.mxu0 0
    %811 = vmatpush1.bf16.xpose.msra.mxu0 0
    %812 = vmatprep.subr.bf16.mxu0 0
    %813 = vmatpush1.bf16.xpose.msra.mxu0 0
    %814 = vmatprep.subr.bf16.mxu0 0
    %815 = vmatpush1.bf16.xpose.msra.mxu0 0
    %816 = vmatprep.mubr.bf16.mxu0 0
    %817 = vmatmul.mubr.bf16.gmra.mrb[0].mxu0 %v779
    %v818 = vpop.f32.mrb[0].mxu0
    %v819 = vadd.f32 0.0, %v818
    %v820 = vpop.f32.mrb[0].mxu0
    %v821 = vpop.f32.mrb[0].mxu0
    %v822 = vpop.f32.mrb[0].mxu0
    %823 = vdwg.mxu0
    %v825 = vsel %vm360, %v775, 0
    %v828 = vsel %vm360, %v777, 0
    %830 = vmatprep.subr.bf16.mxu0 0
    %831 = vmatpush1.bf16.xpose.msra.mxu0 %v828
    %832 = vmatprep.subr.bf16.mxu0 0
    %833 = vmatpush1.bf16.xpose.msra.mxu0 0
    %834 = vmatprep.subr.bf16.mxu0 0
    %835 = vmatpush1.bf16.xpose.msra.mxu0 0
    %836 = vmatprep.subr.bf16.mxu0 0
    %837 = vmatpush1.bf16.xpose.msra.mxu0 0
    %838 = vmatprep.subr.bf16.mxu0 0
    %839 = vmatpush1.bf16.xpose.msra.mxu0 0
    %840 = vmatprep.subr.bf16.mxu0 0
    %841 = vmatpush1.bf16.xpose.msra.mxu0 0
    %842 = vmatprep.subr.bf16.mxu0 0
    %843 = vmatpush1.bf16.xpose.msra.mxu0 0
    %844 = vmatprep.subr.bf16.mxu0 0
    %845 = vmatpush1.bf16.xpose.msra.mxu0 0
    %846 = vmatprep.subr.bf16.mxu0 0
    %847 = vmatpush1.bf16.xpose.msra.mxu0 0
    %848 = vmatprep.subr.bf16.mxu0 0
    %849 = vmatpush1.bf16.xpose.msra.mxu0 0
    %850 = vmatprep.subr.bf16.mxu0 0
    %851 = vmatpush1.bf16.xpose.msra.mxu0 0
    %852 = vmatprep.subr.bf16.mxu0 0
    %853 = vmatpush1.bf16.xpose.msra.mxu0 0
    %854 = vmatprep.subr.bf16.mxu0 0
    %855 = vmatpush1.bf16.xpose.msra.mxu0 0
    %856 = vmatprep.subr.bf16.mxu0 0
    %857 = vmatpush1.bf16.xpose.msra.mxu0 0
    %858 = vmatprep.subr.bf16.mxu0 0
    %859 = vmatpush1.bf16.xpose.msra.mxu0 0
    %860 = vmatprep.subr.bf16.mxu0 0
    %861 = vmatpush1.bf16.xpose.msra.mxu0 0
    %862 = vmatprep.mubr.bf16.mxu0 0
    %863 = vmatmul.mubr.bf16.gmra.mrb[0].mxu0 %v825
    %v864 = vpop.f32.mrb[0].mxu0
    %v865 = vadd.f32 0.0, %v864
    %v866 = vpop.f32.mrb[0].mxu0
    %v867 = vpop.f32.mrb[0].mxu0
    %v868 = vpop.f32.mrb[0].mxu0
    %869 = vdwg.mxu0
    %v870 = vmul.f32 %v819, 0.35355338
    %v871 = vmul.f32 %v865, 0.35355338
    %v872 = vsel %vm360, %v870, -inf
    %873 = vmax.xlane.f32.xlu0 %v872
    %v874 = vpop.xlane.xlu0 %873
    %v875 = vsel %vm360, %v871, -inf
    %876 = vmax.xlane.f32.xlu0 %v875
    %v877 = vpop.xlane.xlu0 %876
    %v878 = vsub.f32 %v870, %v874
    %v879 = vsub.f32 %v871, %v877
    %v880 = vmul.f32 %v878, 1.442695
    %v881 = vpow.pop %v880
    %v882 = vmul.f32 %v879, 1.442695
    %v883 = vpow.pop %v882
    %v884 = vsel %vm360, %v881, 0.0
    %885 = vadd.xlane.f32.xlu0 %v884
    %v886 = vpop.xlane.xlu0 %885
    %v887 = vsel %vm360, %v883, 0.0
    %888 = vadd.xlane.f32.xlu0 %v887
    %v889 = vpop.xlane.xlu0 %888
    %v890 = vrcp.pop %v886
    %v891 = vrcp.pop %v889
    %v892 = vmul.f32 %v881, %v890
    %v893 = vmul.f32 %v883, %v891
    %v894 = vpack.c.bf16 %v892, %v892
    %v895 = vpack.c.bf16 %v893, %v893
    %v896 = vpack.c.bf16 %v768, %v768
    %v897 = vpack.c.bf16 %v771, %v771
    %v899 = vsel %vm360, %v894, 0
    %v902 = vsel %vm484, %v896, 0
    %904 = vmatprep.subr.bf16.mxu0 0
    %905 = vmatpush1.bf16.msra.mxu0 %v902
    %906 = vmatprep.subr.bf16.mxu0 0
    %907 = vmatpush1.bf16.msra.mxu0 0
    %908 = vmatprep.subr.bf16.mxu0 0
    %909 = vmatpush1.bf16.msra.mxu0 0
    %910 = vmatprep.subr.bf16.mxu0 0
    %911 = vmatpush1.bf16.msra.mxu0 0
    %912 = vmatprep.subr.bf16.mxu0 0
    %913 = vmatpush1.bf16.msra.mxu0 0
    %914 = vmatprep.subr.bf16.mxu0 0
    %915 = vmatpush1.bf16.msra.mxu0 0
    %916 = vmatprep.subr.bf16.mxu0 0
    %917 = vmatpush1.bf16.msra.mxu0 0
    %918 = vmatprep.subr.bf16.mxu0 0
    %919 = vmatpush1.bf16.msra.mxu0 0
    %920 = vmatprep.subr.bf16.mxu0 0
    %921 = vmatpush1.bf16.msra.mxu0 0
    %922 = vmatprep.subr.bf16.mxu0 0
    %923 = vmatpush1.bf16.msra.mxu0 0
    %924 = vmatprep.subr.bf16.mxu0 0
    %925 = vmatpush1.bf16.msra.mxu0 0
    %926 = vmatprep.subr.bf16.mxu0 0
    %927 = vmatpush1.bf16.msra.mxu0 0
    %928 = vmatprep.subr.bf16.mxu0 0
    %929 = vmatpush1.bf16.msra.mxu0 0
    %930 = vmatprep.subr.bf16.mxu0 0
    %931 = vmatpush1.bf16.msra.mxu0 0
    %932 = vmatprep.subr.bf16.mxu0 0
    %933 = vmatpush1.bf16.msra.mxu0 0
    %934 = vmatprep.subr.bf16.mxu0 0
    %935 = vmatpush1.bf16.msra.mxu0 0
    %936 = vmatprep.mubr.bf16.mxu0 0
    %937 = vmatmul.mubr.bf16.gmra.mrb[0].mxu0 %v899
    %v938 = vpop.f32.mrb[0].mxu0
    %v939 = vadd.f32 0.0, %v938
    %v940 = vpop.f32.mrb[0].mxu0
    %v941 = vpop.f32.mrb[0].mxu0
    %v942 = vpop.f32.mrb[0].mxu0
    %943 = vdwg.mxu0
    %v945 = vsel %vm360, %v895, 0
    %v948 = vsel %vm484, %v897, 0
    %950 = vmatprep.subr.bf16.mxu0 0
    %951 = vmatpush1.bf16.msra.mxu0 %v948
    %952 = vmatprep.subr.bf16.mxu0 0
    %953 = vmatpush1.bf16.msra.mxu0 0
    %954 = vmatprep.subr.bf16.mxu0 0
    %955 = vmatpush1.bf16.msra.mxu0 0
    %956 = vmatprep.subr.bf16.mxu0 0
    %957 = vmatpush1.bf16.msra.mxu0 0
    %958 = vmatprep.subr.bf16.mxu0 0
    %959 = vmatpush1.bf16.msra.mxu0 0
    %960 = vmatprep.subr.bf16.mxu0 0
    %961 = vmatpush1.bf16.msra.mxu0 0
    %962 = vmatprep.subr.bf16.mxu0 0
    %963 = vmatpush1.bf16.msra.mxu0 0
    %964 = vmatprep.subr.bf16.mxu0 0
    %965 = vmatpush1.bf16.msra.mxu0 0
    %966 = vmatprep.subr.bf16.mxu0 0
    %967 = vmatpush1.bf16.msra.mxu0 0
    %968 = vmatprep.subr.bf16.mxu0 0
    %969 = vmatpush1.bf16.msra.mxu0 0
    %970 = vmatprep.subr.bf16.mxu0 0
    %971 = vmatpush1.bf16.msra.mxu0 0
    %972 = vmatprep.subr.bf16.mxu0 0
    %973 = vmatpush1.bf16.msra.mxu0 0
    %974 = vmatprep.subr.bf16.mxu0 0
    %975 = vmatpush1.bf16.msra.mxu0 0
    %976 = vmatprep.subr.bf16.mxu0 0
    %977 = vmatpush1.bf16.msra.mxu0 0
    %978 = vmatprep.subr.bf16.mxu0 0
    %979 = vmatpush1.bf16.msra.mxu0 0
    %980 = vmatprep.subr.bf16.mxu0 0
    %981 = vmatpush1.bf16.msra.mxu0 0
    %982 = vmatprep.mubr.bf16.mxu0 0
    %983 = vmatmul.mubr.bf16.gmra.mrb[0].mxu0 %v945
    %v984 = vpop.f32.mrb[0].mxu0
    %v985 = vadd.f32 0.0, %v984
    %v986 = vpop.f32.mrb[0].mxu0
    %v987 = vpop.f32.mrb[0].mxu0
    %v988 = vpop.f32.mrb[0].mxu0
    %989 = vdwg.mxu0
    %v990 = vpack.c.bf16 %v985, %v939
    %s991 = scalar_lea.vmem %s5, 4
    %v992 = vld [vmem:[%s991] sm:$0xf]
    %v994 = vsel %vm360, %v990, 0
    %v997 = vsel %vm484, %v992, 0
    %999 = vmatprep.subr.bf16.mxu0 0
    %1000 = vmatpush1.bf16.msra.mxu0 %v997
    %1001 = vmatprep.subr.bf16.mxu0 0
    %1002 = vmatpush1.bf16.msra.mxu0 0
    %1003 = vmatprep.subr.bf16.mxu0 0
    %1004 = vmatpush1.bf16.msra.mxu0 0
    %1005 = vmatprep.subr.bf16.mxu0 0
    %1006 = vmatpush1.bf16.msra.mxu0 0
    %1007 = vmatprep.subr.bf16.mxu0 0
    %1008 = vmatpush1.bf16.msra.mxu0 0
    %1009 = vmatprep.subr.bf16.mxu0 0
    %1010 = vmatpush1.bf16.msra.mxu0 0
    %1011 = vmatprep.subr.bf16.mxu0 0
    %1012 = vmatpush1.bf16.msra.mxu0 0
    %1013 = vmatprep.subr.bf16.mxu0 0
    %1014 = vmatpush1.bf16.msra.mxu0 0
    %1015 = vmatprep.subr.bf16.mxu0 0
    %1016 = vmatpush1.bf16.msra.mxu0 0
    %1017 = vmatprep.subr.bf16.mxu0 0
    %1018 = vmatpush1.bf16.msra.mxu0 0
    %1019 = vmatprep.subr.bf16.mxu0 0
    %1020 = vmatpush1.bf16.msra.mxu0 0
    %1021 = vmatprep.subr.bf16.mxu0 0
    %1022 = vmatpush1.bf16.msra.mxu0 0
    %1023 = vmatprep.subr.bf16.mxu0 0
    %1024 = vmatpush1.bf16.msra.mxu0 0
    %1025 = vmatprep.subr.bf16.mxu0 0
    %1026 = vmatpush1.bf16.msra.mxu0 0
    %1027 = vmatprep.subr.bf16.mxu0 0
    %1028 = vmatpush1.bf16.msra.mxu0 0
    %1029 = vmatprep.subr.bf16.mxu0 0
    %1030 = vmatpush1.bf16.msra.mxu0 0
    %1031 = vmatprep.mubr.bf16.mxu0 0
    %1032 = vmatmul.mubr.bf16.gmra.mrb[0].mxu0 %v994
    %v1033 = vpop.f32.mrb[0].mxu0
    %v1034 = vadd.f32 0.0, %v1033
    %v1035 = vpop.f32.mrb[0].mxu0
    %v1036 = vpop.f32.mrb[0].mxu0
    %v1037 = vadd.f32 0.0, %v1036
    %v1038 = vpop.f32.mrb[0].mxu0
    %1039 = vdwg.mxu0
    %v1041 = vsel %vm360, %v574, 0
    %v1044 = vsel %vm484, %v575, 0
    %1046 = vmatprep.subr.bf16.mxu0 0
    %1047 = vmatpush1.bf16.msra.mxu0 %v1044
    %1048 = vmatprep.subr.bf16.mxu0 0
    %1049 = vmatpush1.bf16.msra.mxu0 0
    %1050 = vmatprep.subr.bf16.mxu0 0
    %1051 = vmatpush1.bf16.msra.mxu0 0
    %1052 = vmatprep.subr.bf16.mxu0 0
    %1053 = vmatpush1.bf16.msra.mxu0 0
    %1054 = vmatprep.subr.bf16.mxu0 0
    %1055 = vmatpush1.bf16.msra.mxu0 0
    %1056 = vmatprep.subr.bf16.mxu0 0
    %1057 = vmatpush1.bf16.msra.mxu0 0
    %1058 = vmatprep.subr.bf16.mxu0 0
    %1059 = vmatpush1.bf16.msra.mxu0 0
    %1060 = vmatprep.subr.bf16.mxu0 0
    %1061 = vmatpush1.bf16.msra.mxu0 0
    %1062 = vmatprep.subr.bf16.mxu0 0
    %1063 = vmatpush1.bf16.msra.mxu0 0
    %1064 = vmatprep.subr.bf16.mxu0 0
    %1065 = vmatpush1.bf16.msra.mxu0 0
    %1066 = vmatprep.subr.bf16.mxu0 0
    %1067 = vmatpush1.bf16.msra.mxu0 0
    %1068 = vmatprep.subr.bf16.mxu0 0
    %1069 = vmatpush1.bf16.msra.mxu0 0
    %1070 = vmatprep.subr.bf16.mxu0 0
    %1071 = vmatpush1.bf16.msra.mxu0 0
    %1072 = vmatprep.subr.bf16.mxu0 0
    %1073 = vmatpush1.bf16.msra.mxu0 0
    %1074 = vmatprep.subr.bf16.mxu0 0
    %1075 = vmatpush1.bf16.msra.mxu0 0
    %1076 = vmatprep.subr.bf16.mxu0 0
    %1077 = vmatpush1.bf16.msra.mxu0 0
    %1078 = vmatprep.mubr.bf16.mxu0 0
    %1079 = vmatmul.mubr.bf16.gmra.mrb[0].mxu0 %v1041
    %v1080 = vpop.f32.mrb[0].mxu0
    %v1081 = vadd.f32 %v1034, %v1080
    %v1082 = vpop.f32.mrb[0].mxu0
    %v1083 = vpop.f32.mrb[0].mxu0
    %v1084 = vadd.f32 %v1037, %v1083
    %v1085 = vpop.f32.mrb[0].mxu0
    %1086 = vdwg.mxu0
    %s1087 = scalar_lea.vmem %s3, 32
    %v1088 = vld [vmem:[%s1087] sm:$0xf]
    %v1089 = vld [vmem:[%s1087 + $0x4] sm:$0xf]
    %v1090 = vld [vmem:[%s1087 + $0x8] sm:$0xf]
    %v1091 = vld [vmem:[%s1087 + $0xc] sm:$0xf]
    %s1092 = scalar_lea.vmem %s4, 2
    %v1093 = vld [vmem:[%s1092] sm:$0x1]
    %v1095 = vlaneseq
    %v1096 = vshrl.u32 %v1095, 7
    %v1097 = vsub.s32 0, %v1096
    %v1098 = vrot.slane %v1093, %v1097
    %v1104 = vunpack.c.l.b16 %v1088
    %v1105 = vunpack.c.l.b16 %v1089
    %v1106 = vunpack.c.l.b16 %v1090
    %v1107 = vunpack.c.l.b16 %v1091
    %v1108 = vpack.c.b16 %v1105, %v1104
    %v1109 = vpack.c.b16 %v1107, %v1106
    %1112 = vmatprep.subr.bf16.mxu0 0
    %1113 = vmatpush1.bf16.msra.mxu0 %v1108
    %1114 = vmatprep.subr.bf16.mxu0 0
    %1115 = vmatpush1.bf16.msra.mxu0 %v1109
    %1116 = vmatprep.subr.bf16.mxu0 0
    %1117 = vmatpush1.bf16.msra.mxu0 0
    %1118 = vmatprep.subr.bf16.mxu0 0
    %1119 = vmatpush1.bf16.msra.mxu0 0
    %1120 = vmatprep.subr.bf16.mxu0 0
    %1121 = vmatpush1.bf16.msra.mxu0 0
    %1122 = vmatprep.subr.bf16.mxu0 0
    %1123 = vmatpush1.bf16.msra.mxu0 0
    %1124 = vmatprep.subr.bf16.mxu0 0
    %1125 = vmatpush1.bf16.msra.mxu0 0
    %1126 = vmatprep.subr.bf16.mxu0 0
    %1127 = vmatpush1.bf16.msra.mxu0 0
    %1128 = vmatprep.subr.bf16.mxu0 0
    %1129 = vmatpush1.bf16.msra.mxu0 0
    %1130 = vmatprep.subr.bf16.mxu0 0
    %1131 = vmatpush1.bf16.msra.mxu0 0
    %1132 = vmatprep.subr.bf16.mxu0 0
    %1133 = vmatpush1.bf16.msra.mxu0 0
    %1134 = vmatprep.subr.bf16.mxu0 0
    %1135 = vmatpush1.bf16.msra.mxu0 0
    %1136 = vmatprep.subr.bf16.mxu0 0
    %1137 = vmatpush1.bf16.msra.mxu0 0
    %1138 = vmatprep.subr.bf16.mxu0 0
    %1139 = vmatpush1.bf16.msra.mxu0 0
    %1140 = vmatprep.subr.bf16.mxu0 0
    %1141 = vmatpush1.bf16.msra.mxu0 0
    %1142 = vmatprep.subr.bf16.mxu0 0
    %1143 = vmatpush1.bf16.msra.mxu0 0
    %1144 = vmatprep.mubr.bf16.mxu0 0
    %1145 = vmatmul.mubr.bf16.gmra.mrb[0].mxu0 %v181
    %v1146 = vpop.f32.mrb[0].mxu0
    %v1147 = vadd.f32 %v1098, %v1146
    %v1148 = vpop.f32.mrb[0].mxu0
    %v1149 = vpop.f32.mrb[0].mxu0
    %v1150 = vadd.f32 %v1098, %v1149
    %v1151 = vpop.f32.mrb[0].mxu0
    %1152 = vdwg.mxu0
    %s1153 = scalar_lea.vmem %s3, 96
    %v1154 = vld [vmem:[%s1153] sm:$0xf]
    %v1155 = vld [vmem:[%s1153 + $0x4] sm:$0xf]
    %v1156 = vld [vmem:[%s1153 + $0x8] sm:$0xf]
    %v1157 = vld [vmem:[%s1153 + $0xc] sm:$0xf]
    %s1158 = scalar_lea.vmem %s4, 6
    %v1159 = vld [vmem:[%s1158] sm:$0x1]
    %v1161 = vlaneseq
    %v1162 = vshrl.u32 %v1161, 7
    %v1163 = vsub.s32 0, %v1162
    %v1164 = vrot.slane %v1159, %v1163
    %v1170 = vunpack.c.l.b16 %v1154
    %v1171 = vunpack.c.l.b16 %v1155
    %v1172 = vunpack.c.l.b16 %v1156
    %v1173 = vunpack.c.l.b16 %v1157
    %v1174 = vpack.c.b16 %v1171, %v1170
    %v1175 = vpack.c.b16 %v1173, %v1172
    %1178 = vmatprep.subr.bf16.mxu0 0
    %1179 = vmatpush1.bf16.msra.mxu0 %v1174
    %1180 = vmatprep.subr.bf16.mxu0 0
    %1181 = vmatpush1.bf16.msra.mxu0 %v1175
    %1182 = vmatprep.subr.bf16.mxu0 0
    %1183 = vmatpush1.bf16.msra.mxu0 0
    %1184 = vmatprep.subr.bf16.mxu0 0
    %1185 = vmatpush1.bf16.msra.mxu0 0
    %1186 = vmatprep.subr.bf16.mxu0 0
    %1187 = vmatpush1.bf16.msra.mxu0 0
    %1188 = vmatprep.subr.bf16.mxu0 0
    %1189 = vmatpush1.bf16.msra.mxu0 0
    %1190 = vmatprep.subr.bf16.mxu0 0
    %1191 = vmatpush1.bf16.msra.mxu0 0
    %1192 = vmatprep.subr.bf16.mxu0 0
    %1193 = vmatpush1.bf16.msra.mxu0 0
    %1194 = vmatprep.subr.bf16.mxu0 0
    %1195 = vmatpush1.bf16.msra.mxu0 0
    %1196 = vmatprep.subr.bf16.mxu0 0
    %1197 = vmatpush1.bf16.msra.mxu0 0
    %1198 = vmatprep.subr.bf16.mxu0 0
    %1199 = vmatpush1.bf16.msra.mxu0 0
    %1200 = vmatprep.subr.bf16.mxu0 0
    %1201 = vmatpush1.bf16.msra.mxu0 0
    %1202 = vmatprep.subr.bf16.mxu0 0
    %1203 = vmatpush1.bf16.msra.mxu0 0
    %1204 = vmatprep.subr.bf16.mxu0 0
    %1205 = vmatpush1.bf16.msra.mxu0 0
    %1206 = vmatprep.subr.bf16.mxu0 0
    %1207 = vmatpush1.bf16.msra.mxu0 0
    %1208 = vmatprep.subr.bf16.mxu0 0
    %1209 = vmatpush1.bf16.msra.mxu0 0
    %1210 = vmatprep.mubr.bf16.mxu0 0
    %1211 = vmatmul.mubr.bf16.gmra.mrb[0].mxu0 %v181
    %v1212 = vpop.f32.mrb[0].mxu0
    %v1213 = vadd.f32 %v1164, %v1212
    %v1214 = vpop.f32.mrb[0].mxu0
    %v1215 = vpop.f32.mrb[0].mxu0
    %v1216 = vadd.f32 %v1164, %v1215
    %v1217 = vpop.f32.mrb[0].mxu0
    %1218 = vdwg.mxu0
    %s1219 = scalar_lea.vmem %s3, 160
    %v1220 = vld [vmem:[%s1219] sm:$0xf]
    %v1221 = vld [vmem:[%s1219 + $0x4] sm:$0xf]
    %v1222 = vld [vmem:[%s1219 + $0x8] sm:$0xf]
    %v1223 = vld [vmem:[%s1219 + $0xc] sm:$0xf]
    %s1224 = scalar_lea.vmem %s4, 10
    %v1225 = vld [vmem:[%s1224] sm:$0x1]
    %v1227 = vlaneseq
    %v1228 = vshrl.u32 %v1227, 7
    %v1229 = vsub.s32 0, %v1228
    %v1230 = vrot.slane %v1225, %v1229
    %v1236 = vunpack.c.l.b16 %v1220
    %v1237 = vunpack.c.l.b16 %v1221
    %v1238 = vunpack.c.l.b16 %v1222
    %v1239 = vunpack.c.l.b16 %v1223
    %v1240 = vpack.c.b16 %v1237, %v1236
    %v1241 = vpack.c.b16 %v1239, %v1238
    %1244 = vmatprep.subr.bf16.mxu0 0
    %1245 = vmatpush1.bf16.msra.mxu0 %v1240
    %1246 = vmatprep.subr.bf16.mxu0 0
    %1247 = vmatpush1.bf16.msra.mxu0 %v1241
    %1248 = vmatprep.subr.bf16.mxu0 0
    %1249 = vmatpush1.bf16.msra.mxu0 0
    %1250 = vmatprep.subr.bf16.mxu0 0
    %1251 = vmatpush1.bf16.msra.mxu0 0
    %1252 = vmatprep.subr.bf16.mxu0 0
    %1253 = vmatpush1.bf16.msra.mxu0 0
    %1254 = vmatprep.subr.bf16.mxu0 0
    %1255 = vmatpush1.bf16.msra.mxu0 0
    %1256 = vmatprep.subr.bf16.mxu0 0
    %1257 = vmatpush1.bf16.msra.mxu0 0
    %1258 = vmatprep.subr.bf16.mxu0 0
    %1259 = vmatpush1.bf16.msra.mxu0 0
    %1260 = vmatprep.subr.bf16.mxu0 0
    %1261 = vmatpush1.bf16.msra.mxu0 0
    %1262 = vmatprep.subr.bf16.mxu0 0
    %1263 = vmatpush1.bf16.msra.mxu0 0
    %1264 = vmatprep.subr.bf16.mxu0 0
    %1265 = vmatpush1.bf16.msra.mxu0 0
    %1266 = vmatprep.subr.bf16.mxu0 0
    %1267 = vmatpush1.bf16.msra.mxu0 0
    %1268 = vmatprep.subr.bf16.mxu0 0
    %1269 = vmatpush1.bf16.msra.mxu0 0
    %1270 = vmatprep.subr.bf16.mxu0 0
    %1271 = vmatpush1.bf16.msra.mxu0 0
    %1272 = vmatprep.subr.bf16.mxu0 0
    %1273 = vmatpush1.bf16.msra.mxu0 0
    %1274 = vmatprep.subr.bf16.mxu0 0
    %1275 = vmatpush1.bf16.msra.mxu0 0
    %1276 = vmatprep.mubr.bf16.mxu0 0
    %1277 = vmatmul.mubr.bf16.gmra.mrb[0].mxu0 %v181
    %v1278 = vpop.f32.mrb[0].mxu0
    %v1279 = vadd.f32 %v1230, %v1278
    %v1280 = vpop.f32.mrb[0].mxu0
    %v1281 = vpop.f32.mrb[0].mxu0
    %v1282 = vadd.f32 %v1230, %v1281
    %v1283 = vpop.f32.mrb[0].mxu0
    %1284 = vdwg.mxu0
    %v1285 = vpack.c.bf16 %v1147, %v1147
    %v1286 = vpack.c.bf16 %v1150, %v1150
    %v1287 = vpack.c.bf16 %v1213, %v1213
    %v1288 = vpack.c.bf16 %v1216, %v1216
    %v1290 = vsel %vm360, %v1285, 0
    %v1293 = vsel %vm360, %v1287, 0
    %1295 = vmatprep.subr.bf16.mxu0 0
    %1296 = vmatpush1.bf16.xpose.msra.mxu0 %v1293
    %1297 = vmatprep.subr.bf16.mxu0 0
    %1298 = vmatpush1.bf16.xpose.msra.mxu0 0
    %1299 = vmatprep.subr.bf16.mxu0 0
    %1300 = vmatpush1.bf16.xpose.msra.mxu0 0
    %1301 = vmatprep.subr.bf16.mxu0 0
    %1302 = vmatpush1.bf16.xpose.msra.mxu0 0
    %1303 = vmatprep.subr.bf16.mxu0 0
    %1304 = vmatpush1.bf16.xpose.msra.mxu0 0
    %1305 = vmatprep.subr.bf16.mxu0 0
    %1306 = vmatpush1.bf16.xpose.msra.mxu0 0
    %1307 = vmatprep.subr.bf16.mxu0 0
    %1308 = vmatpush1.bf16.xpose.msra.mxu0 0
    %1309 = vmatprep.subr.bf16.mxu0 0
    %1310 = vmatpush1.bf16.xpose.msra.mxu0 0
    %1311 = vmatprep.subr.bf16.mxu0 0
    %1312 = vmatpush1.bf16.xpose.msra.mxu0 0
    %1313 = vmatprep.subr.bf16.mxu0 0
    %1314 = vmatpush1.bf16.xpose.msra.mxu0 0
    %1315 = vmatprep.subr.bf16.mxu0 0
    %1316 = vmatpush1.bf16.xpose.msra.mxu0 0
    %1317 = vmatprep.subr.bf16.mxu0 0
    %1318 = vmatpush1.bf16.xpose.msra.mxu0 0
    %1319 = vmatprep.subr.bf16.mxu0 0
    %1320 = vmatpush1.bf16.xpose.msra.mxu0 0
    %1321 = vmatprep.subr.bf16.mxu0 0
    %1322 = vmatpush1.bf16.xpose.msra.mxu0 0
    %1323 = vmatprep.subr.bf16.mxu0 0
    %1324 = vmatpush1.bf16.xpose.msra.mxu0 0
    %1325 = vmatprep.subr.bf16.mxu0 0
    %1326 = vmatpush1.bf16.xpose.msra.mxu0 0
    %1327 = vmatprep.mubr.bf16.mxu0 0
    %1328 = vmatmul.mubr.bf16.gmra.mrb[0].mxu0 %v1290
    %v1329 = vpop.f32.mrb[0].mxu0
    %v1330 = vadd.f32 0.0, %v1329
    %v1331 = vpop.f32.mrb[0].mxu0
    %v1332 = vpop.f32.mrb[0].mxu0
    %v1333 = vpop.f32.mrb[0].mxu0
    %1334 = vdwg.mxu0
    %v1336 = vsel %vm360, %v1286, 0
    %v1339 = vsel %vm360, %v1288, 0
    %1341 = vmatprep.subr.bf16.mxu0 0
    %1342 = vmatpush1.bf16.xpose.msra.mxu0 %v1339
    %1343 = vmatprep.subr.bf16.mxu0 0
    %1344 = vmatpush1.bf16.xpose.msra.mxu0 0
    %1345 = vmatprep.subr.bf16.mxu0 0
    %1346 = vmatpush1.bf16.xpose.msra.mxu0 0
    %1347 = vmatprep.subr.bf16.mxu0 0
    %1348 = vmatpush1.bf16.xpose.msra.mxu0 0
    %1349 = vmatprep.subr.bf16.mxu0 0
    %1350 = vmatpush1.bf16.xpose.msra.mxu0 0
    %1351 = vmatprep.subr.bf16.mxu0 0
    %1352 = vmatpush1.bf16.xpose.msra.mxu0 0
    %1353 = vmatprep.subr.bf16.mxu0 0
    %1354 = vmatpush1.bf16.xpose.msra.mxu0 0
    %1355 = vmatprep.subr.bf16.mxu0 0
    %1356 = vmatpush1.bf16.xpose.msra.mxu0 0
    %1357 = vmatprep.subr.bf16.mxu0 0
    %1358 = vmatpush1.bf16.xpose.msra.mxu0 0
    %1359 = vmatprep.subr.bf16.mxu0 0
    %1360 = vmatpush1.bf16.xpose.msra.mxu0 0
    %1361 = vmatprep.subr.bf16.mxu0 0
    %1362 = vmatpush1.bf16.xpose.msra.mxu0 0
    %1363 = vmatprep.subr.bf16.mxu0 0
    %1364 = vmatpush1.bf16.xpose.msra.mxu0 0
    %1365 = vmatprep.subr.bf16.mxu0 0
    %1366 = vmatpush1.bf16.xpose.msra.mxu0 0
    %1367 = vmatprep.subr.bf16.mxu0 0
    %1368 = vmatpush1.bf16.xpose.msra.mxu0 0
    %1369 = vmatprep.subr.bf16.mxu0 0
    %1370 = vmatpush1.bf16.xpose.msra.mxu0 0
    %1371 = vmatprep.subr.bf16.mxu0 0
    %1372 = vmatpush1.bf16.xpose.msra.mxu0 0
    %1373 = vmatprep.mubr.bf16.mxu0 0
    %1374 = vmatmul.mubr.bf16.gmra.mrb[0].mxu0 %v1336
    %v1375 = vpop.f32.mrb[0].mxu0
    %v1376 = vadd.f32 0.0, %v1375
    %v1377 = vpop.f32.mrb[0].mxu0
    %v1378 = vpop.f32.mrb[0].mxu0
    %v1379 = vpop.f32.mrb[0].mxu0
    %1380 = vdwg.mxu0
    %v1381 = vmul.f32 %v1330, 0.35355338
    %v1382 = vmul.f32 %v1376, 0.35355338
    %v1383 = vsel %vm360, %v1381, -inf
    %1384 = vmax.xlane.f32.xlu0 %v1383
    %v1385 = vpop.xlane.xlu0 %1384
    %v1386 = vsel %vm360, %v1382, -inf
    %1387 = vmax.xlane.f32.xlu0 %v1386
    %v1388 = vpop.xlane.xlu0 %1387
    %v1389 = vsub.f32 %v1381, %v1385
    %v1390 = vsub.f32 %v1382, %v1388
    %v1391 = vmul.f32 %v1389, 1.442695
    %v1392 = vpow.pop %v1391
    %v1393 = vmul.f32 %v1390, 1.442695
    %v1394 = vpow.pop %v1393
    %v1395 = vsel %vm360, %v1392, 0.0
    %1396 = vadd.xlane.f32.xlu0 %v1395
    %v1397 = vpop.xlane.xlu0 %1396
    %v1398 = vsel %vm360, %v1394, 0.0
    %1399 = vadd.xlane.f32.xlu0 %v1398
    %v1400 = vpop.xlane.xlu0 %1399
    %v1401 = vrcp.pop %v1397
    %v1402 = vrcp.pop %v1400
    %v1403 = vmul.f32 %v1392, %v1401
    %v1404 = vmul.f32 %v1394, %v1402
    %v1405 = vpack.c.bf16 %v1403, %v1403
    %v1406 = vpack.c.bf16 %v1404, %v1404
    %v1407 = vpack.c.bf16 %v1279, %v1279
    %v1408 = vpack.c.bf16 %v1282, %v1282
    %v1410 = vsel %vm360, %v1405, 0
    %v1413 = vsel %vm484, %v1407, 0
    %1415 = vmatprep.subr.bf16.mxu0 0
    %1416 = vmatpush1.bf16.msra.mxu0 %v1413
    %1417 = vmatprep.subr.bf16.mxu0 0
    %1418 = vmatpush1.bf16.msra.mxu0 0
    %1419 = vmatprep.subr.bf16.mxu0 0
    %1420 = vmatpush1.bf16.msra.mxu0 0
    %1421 = vmatprep.subr.bf16.mxu0 0
    %1422 = vmatpush1.bf16.msra.mxu0 0
    %1423 = vmatprep.subr.bf16.mxu0 0
    %1424 = vmatpush1.bf16.msra.mxu0 0
    %1425 = vmatprep.subr.bf16.mxu0 0
    %1426 = vmatpush1.bf16.msra.mxu0 0
    %1427 = vmatprep.subr.bf16.mxu0 0
    %1428 = vmatpush1.bf16.msra.mxu0 0
    %1429 = vmatprep.subr.bf16.mxu0 0
    %1430 = vmatpush1.bf16.msra.mxu0 0
    %1431 = vmatprep.subr.bf16.mxu0 0
    %1432 = vmatpush1.bf16.msra.mxu0 0
    %1433 = vmatprep.subr.bf16.mxu0 0
    %1434 = vmatpush1.bf16.msra.mxu0 0
    %1435 = vmatprep.subr.bf16.mxu0 0
    %1436 = vmatpush1.bf16.msra.mxu0 0
    %1437 = vmatprep.subr.bf16.mxu0 0
    %1438 = vmatpush1.bf16.msra.mxu0 0
    %1439 = vmatprep.subr.bf16.mxu0 0
    %1440 = vmatpush1.bf16.msra.mxu0 0
    %1441 = vmatprep.subr.bf16.mxu0 0
    %1442 = vmatpush1.bf16.msra.mxu0 0
    %1443 = vmatprep.subr.bf16.mxu0 0
    %1444 = vmatpush1.bf16.msra.mxu0 0
    %1445 = vmatprep.subr.bf16.mxu0 0
    %1446 = vmatpush1.bf16.msra.mxu0 0
    %1447 = vmatprep.mubr.bf16.mxu0 0
    %1448 = vmatmul.mubr.bf16.gmra.mrb[0].mxu0 %v1410
    %v1449 = vpop.f32.mrb[0].mxu0
    %v1450 = vadd.f32 0.0, %v1449
    %v1451 = vpop.f32.mrb[0].mxu0
    %v1452 = vpop.f32.mrb[0].mxu0
    %v1453 = vpop.f32.mrb[0].mxu0
    %1454 = vdwg.mxu0
    %v1456 = vsel %vm360, %v1406, 0
    %v1459 = vsel %vm484, %v1408, 0
    %1461 = vmatprep.subr.bf16.mxu0 0
    %1462 = vmatpush1.bf16.msra.mxu0 %v1459
    %1463 = vmatprep.subr.bf16.mxu0 0
    %1464 = vmatpush1.bf16.msra.mxu0 0
    %1465 = vmatprep.subr.bf16.mxu0 0
    %1466 = vmatpush1.bf16.msra.mxu0 0
    %1467 = vmatprep.subr.bf16.mxu0 0
    %1468 = vmatpush1.bf16.msra.mxu0 0
    %1469 = vmatprep.subr.bf16.mxu0 0
    %1470 = vmatpush1.bf16.msra.mxu0 0
    %1471 = vmatprep.subr.bf16.mxu0 0
    %1472 = vmatpush1.bf16.msra.mxu0 0
    %1473 = vmatprep.subr.bf16.mxu0 0
    %1474 = vmatpush1.bf16.msra.mxu0 0
    %1475 = vmatprep.subr.bf16.mxu0 0
    %1476 = vmatpush1.bf16.msra.mxu0 0
    %1477 = vmatprep.subr.bf16.mxu0 0
    %1478 = vmatpush1.bf16.msra.mxu0 0
    %1479 = vmatprep.subr.bf16.mxu0 0
    %1480 = vmatpush1.bf16.msra.mxu0 0
    %1481 = vmatprep.subr.bf16.mxu0 0
    %1482 = vmatpush1.bf16.msra.mxu0 0
    %1483 = vmatprep.subr.bf16.mxu0 0
    %1484 = vmatpush1.bf16.msra.mxu0 0
    %1485 = vmatprep.subr.bf16.mxu0 0
    %1486 = vmatpush1.bf16.msra.mxu0 0
    %1487 = vmatprep.subr.bf16.mxu0 0
    %1488 = vmatpush1.bf16.msra.mxu0 0
    %1489 = vmatprep.subr.bf16.mxu0 0
    %1490 = vmatpush1.bf16.msra.mxu0 0
    %1491 = vmatprep.subr.bf16.mxu0 0
    %1492 = vmatpush1.bf16.msra.mxu0 0
    %1493 = vmatprep.mubr.bf16.mxu0 0
    %1494 = vmatmul.mubr.bf16.gmra.mrb[0].mxu0 %v1456
    %v1495 = vpop.f32.mrb[0].mxu0
    %v1496 = vadd.f32 0.0, %v1495
    %v1497 = vpop.f32.mrb[0].mxu0
    %v1498 = vpop.f32.mrb[0].mxu0
    %v1499 = vpop.f32.mrb[0].mxu0
    %1500 = vdwg.mxu0
    %v1501 = vpack.c.bf16 %v1496, %v1450
    %s1502 = scalar_lea.vmem %s5, 8
    %v1503 = vld [vmem:[%s1502] sm:$0xf]
    %v1505 = vsel %vm360, %v1501, 0
    %v1508 = vsel %vm484, %v1503, 0
    %1510 = vmatprep.subr.bf16.mxu0 0
    %1511 = vmatpush1.bf16.msra.mxu0 %v1508
    %1512 = vmatprep.subr.bf16.mxu0 0
    %1513 = vmatpush1.bf16.msra.mxu0 0
    %1514 = vmatprep.subr.bf16.mxu0 0
    %1515 = vmatpush1.bf16.msra.mxu0 0
    %1516 = vmatprep.subr.bf16.mxu0 0
    %1517 = vmatpush1.bf16.msra.mxu0 0
    %1518 = vmatprep.subr.bf16.mxu0 0
    %1519 = vmatpush1.bf16.msra.mxu0 0
    %1520 = vmatprep.subr.bf16.mxu0 0
    %1521 = vmatpush1.bf16.msra.mxu0 0
    %1522 = vmatprep.subr.bf16.mxu0 0
    %1523 = vmatpush1.bf16.msra.mxu0 0
    %1524 = vmatprep.subr.bf16.mxu0 0
    %1525 = vmatpush1.bf16.msra.mxu0 0
    %1526 = vmatprep.subr.bf16.mxu0 0
    %1527 = vmatpush1.bf16.msra.mxu0 0
    %1528 = vmatprep.subr.bf16.mxu0 0
    %1529 = vmatpush1.bf16.msra.mxu0 0
    %1530 = vmatprep.subr.bf16.mxu0 0
    %1531 = vmatpush1.bf16.msra.mxu0 0
    %1532 = vmatprep.subr.bf16.mxu0 0
    %1533 = vmatpush1.bf16.msra.mxu0 0
    %1534 = vmatprep.subr.bf16.mxu0 0
    %1535 = vmatpush1.bf16.msra.mxu0 0
    %1536 = vmatprep.subr.bf16.mxu0 0
    %1537 = vmatpush1.bf16.msra.mxu0 0
    %1538 = vmatprep.subr.bf16.mxu0 0
    %1539 = vmatpush1.bf16.msra.mxu0 0
    %1540 = vmatprep.subr.bf16.mxu0 0
    %1541 = vmatpush1.bf16.msra.mxu0 0
    %1542 = vmatprep.mubr.bf16.mxu0 0
    %1543 = vmatmul.mubr.bf16.gmra.mrb[0].mxu0 %v1505
    %v1544 = vpop.f32.mrb[0].mxu0
    %v1545 = vadd.f32 0.0, %v1544
    %v1546 = vpop.f32.mrb[0].mxu0
    %v1547 = vpop.f32.mrb[0].mxu0
    %v1548 = vadd.f32 0.0, %v1547
    %v1549 = vpop.f32.mrb[0].mxu0
    %1550 = vdwg.mxu0
    %v1551 = vadd.f32 %v1081, %v1545
    %v1552 = vadd.f32 %v1084, %v1548
    %s1553 = scalar_lea.vmem %s3, 48
    %v1554 = vld [vmem:[%s1553] sm:$0xf]
    %v1555 = vld [vmem:[%s1553 + $0x4] sm:$0xf]
    %v1556 = vld [vmem:[%s1553 + $0x8] sm:$0xf]
    %v1557 = vld [vmem:[%s1553 + $0xc] sm:$0xf]
    %s1558 = scalar_lea.vmem %s4, 3
    %v1559 = vld [vmem:[%s1558] sm:$0x1]
    %v1561 = vlaneseq
    %v1562 = vshrl.u32 %v1561, 7
    %v1563 = vsub.s32 0, %v1562
    %v1564 = vrot.slane %v1559, %v1563
    %v1570 = vunpack.c.l.b16 %v1554
    %v1571 = vunpack.c.l.b16 %v1555
    %v1572 = vunpack.c.l.b16 %v1556
    %v1573 = vunpack.c.l.b16 %v1557
    %v1574 = vpack.c.b16 %v1571, %v1570
    %v1575 = vpack.c.b16 %v1573, %v1572
    %1578 = vmatprep.subr.bf16.mxu0 0
    %1579 = vmatpush1.bf16.msra.mxu0 %v1574
    %1580 = vmatprep.subr.bf16.mxu0 0
    %1581 = vmatpush1.bf16.msra.mxu0 %v1575
    %1582 = vmatprep.subr.bf16.mxu0 0
    %1583 = vmatpush1.bf16.msra.mxu0 0
    %1584 = vmatprep.subr.bf16.mxu0 0
    %1585 = vmatpush1.bf16.msra.mxu0 0
    %1586 = vmatprep.subr.bf16.mxu0 0
    %1587 = vmatpush1.bf16.msra.mxu0 0
    %1588 = vmatprep.subr.bf16.mxu0 0
    %1589 = vmatpush1.bf16.msra.mxu0 0
    %1590 = vmatprep.subr.bf16.mxu0 0
    %1591 = vmatpush1.bf16.msra.mxu0 0
    %1592 = vmatprep.subr.bf16.mxu0 0
    %1593 = vmatpush1.bf16.msra.mxu0 0
    %1594 = vmatprep.subr.bf16.mxu0 0
    %1595 = vmatpush1.bf16.msra.mxu0 0
    %1596 = vmatprep.subr.bf16.mxu0 0
    %1597 = vmatpush1.bf16.msra.mxu0 0
    %1598 = vmatprep.subr.bf16.mxu0 0
    %1599 = vmatpush1.bf16.msra.mxu0 0
    %1600 = vmatprep.subr.bf16.mxu0 0
    %1601 = vmatpush1.bf16.msra.mxu0 0
    %1602 = vmatprep.subr.bf16.mxu0 0
    %1603 = vmatpush1.bf16.msra.mxu0 0
    %1604 = vmatprep.subr.bf16.mxu0 0
    %1605 = vmatpush1.bf16.msra.mxu0 0
    %1606 = vmatprep.subr.bf16.mxu0 0
    %1607 = vmatpush1.bf16.msra.mxu0 0
    %1608 = vmatprep.subr.bf16.mxu0 0
    %1609 = vmatpush1.bf16.msra.mxu0 0
    %1610 = vmatprep.mubr.bf16.mxu0 0
    %1611 = vmatmul.mubr.bf16.gmra.mrb[0].mxu0 %v181
    %v1612 = vpop.f32.mrb[0].mxu0
    %v1613 = vadd.f32 %v1564, %v1612
    %v1614 = vpop.f32.mrb[0].mxu0
    %v1615 = vpop.f32.mrb[0].mxu0
    %v1616 = vadd.f32 %v1564, %v1615
    %v1617 = vpop.f32.mrb[0].mxu0
    %1618 = vdwg.mxu0
    %s1619 = scalar_lea.vmem %s3, 112
    %v1620 = vld [vmem:[%s1619] sm:$0xf]
    %v1621 = vld [vmem:[%s1619 + $0x4] sm:$0xf]
    %v1622 = vld [vmem:[%s1619 + $0x8] sm:$0xf]
    %v1623 = vld [vmem:[%s1619 + $0xc] sm:$0xf]
    %s1624 = scalar_lea.vmem %s4, 7
    %v1625 = vld [vmem:[%s1624] sm:$0x1]
    %v1627 = vlaneseq
    %v1628 = vshrl.u32 %v1627, 7
    %v1629 = vsub.s32 0, %v1628
    %v1630 = vrot.slane %v1625, %v1629
    %v1636 = vunpack.c.l.b16 %v1620
    %v1637 = vunpack.c.l.b16 %v1621
    %v1638 = vunpack.c.l.b16 %v1622
    %v1639 = vunpack.c.l.b16 %v1623
    %v1640 = vpack.c.b16 %v1637, %v1636
    %v1641 = vpack.c.b16 %v1639, %v1638
    %1644 = vmatprep.subr.bf16.mxu0 0
    %1645 = vmatpush1.bf16.msra.mxu0 %v1640
    %1646 = vmatprep.subr.bf16.mxu0 0
    %1647 = vmatpush1.bf16.msra.mxu0 %v1641
    %1648 = vmatprep.subr.bf16.mxu0 0
    %1649 = vmatpush1.bf16.msra.mxu0 0
    %1650 = vmatprep.subr.bf16.mxu0 0
    %1651 = vmatpush1.bf16.msra.mxu0 0
    %1652 = vmatprep.subr.bf16.mxu0 0
    %1653 = vmatpush1.bf16.msra.mxu0 0
    %1654 = vmatprep.subr.bf16.mxu0 0
    %1655 = vmatpush1.bf16.msra.mxu0 0
    %1656 = vmatprep.subr.bf16.mxu0 0
    %1657 = vmatpush1.bf16.msra.mxu0 0
    %1658 = vmatprep.subr.bf16.mxu0 0
    %1659 = vmatpush1.bf16.msra.mxu0 0
    %1660 = vmatprep.subr.bf16.mxu0 0
    %1661 = vmatpush1.bf16.msra.mxu0 0
    %1662 = vmatprep.subr.bf16.mxu0 0
    %1663 = vmatpush1.bf16.msra.mxu0 0
    %1664 = vmatprep.subr.bf16.mxu0 0
    %1665 = vmatpush1.bf16.msra.mxu0 0
    %1666 = vmatprep.subr.bf16.mxu0 0
    %1667 = vmatpush1.bf16.msra.mxu0 0
    %1668 = vmatprep.subr.bf16.mxu0 0
    %1669 = vmatpush1.bf16.msra.mxu0 0
    %1670 = vmatprep.subr.bf16.mxu0 0
    %1671 = vmatpush1.bf16.msra.mxu0 0
    %1672 = vmatprep.subr.bf16.mxu0 0
    %1673 = vmatpush1.bf16.msra.mxu0 0
    %1674 = vmatprep.subr.bf16.mxu0 0
    %1675 = vmatpush1.bf16.msra.mxu0 0
    %1676 = vmatprep.mubr.bf16.mxu0 0
    %1677 = vmatmul.mubr.bf16.gmra.mrb[0].mxu0 %v181
    %v1678 = vpop.f32.mrb[0].mxu0
    %v1679 = vadd.f32 %v1630, %v1678
    %v1680 = vpop.f32.mrb[0].mxu0
    %v1681 = vpop.f32.mrb[0].mxu0
    %v1682 = vadd.f32 %v1630, %v1681
    %v1683 = vpop.f32.mrb[0].mxu0
    %1684 = vdwg.mxu0
    %s1685 = scalar_lea.vmem %s3, 176
    %v1686 = vld [vmem:[%s1685] sm:$0xf]
    %v1687 = vld [vmem:[%s1685 + $0x4] sm:$0xf]
    %v1688 = vld [vmem:[%s1685 + $0x8] sm:$0xf]
    %v1689 = vld [vmem:[%s1685 + $0xc] sm:$0xf]
    %s1690 = scalar_lea.vmem %s4, 11
    %v1691 = vld [vmem:[%s1690] sm:$0x1]
    %v1693 = vlaneseq
    %v1694 = vshrl.u32 %v1693, 7
    %v1695 = vsub.s32 0, %v1694
    %v1696 = vrot.slane %v1691, %v1695
    %v1702 = vunpack.c.l.b16 %v1686
    %v1703 = vunpack.c.l.b16 %v1687
    %v1704 = vunpack.c.l.b16 %v1688
    %v1705 = vunpack.c.l.b16 %v1689
    %v1706 = vpack.c.b16 %v1703, %v1702
    %v1707 = vpack.c.b16 %v1705, %v1704
    %1710 = vmatprep.subr.bf16.mxu0 0
    %1711 = vmatpush1.bf16.msra.mxu0 %v1706
    %1712 = vmatprep.subr.bf16.mxu0 0
    %1713 = vmatpush1.bf16.msra.mxu0 %v1707
    %1714 = vmatprep.subr.bf16.mxu0 0
    %1715 = vmatpush1.bf16.msra.mxu0 0
    %1716 = vmatprep.subr.bf16.mxu0 0
    %1717 = vmatpush1.bf16.msra.mxu0 0
    %1718 = vmatprep.subr.bf16.mxu0 0
    %1719 = vmatpush1.bf16.msra.mxu0 0
    %1720 = vmatprep.subr.bf16.mxu0 0
    %1721 = vmatpush1.bf16.msra.mxu0 0
    %1722 = vmatprep.subr.bf16.mxu0 0
    %1723 = vmatpush1.bf16.msra.mxu0 0
    %1724 = vmatprep.subr.bf16.mxu0 0
    %1725 = vmatpush1.bf16.msra.mxu0 0
    %1726 = vmatprep.subr.bf16.mxu0 0
    %1727 = vmatpush1.bf16.msra.mxu0 0
    %1728 = vmatprep.subr.bf16.mxu0 0
    %1729 = vmatpush1.bf16.msra.mxu0 0
    %1730 = vmatprep.subr.bf16.mxu0 0
    %1731 = vmatpush1.bf16.msra.mxu0 0
    %1732 = vmatprep.subr.bf16.mxu0 0
    %1733 = vmatpush1.bf16.msra.mxu0 0
    %1734 = vmatprep.subr.bf16.mxu0 0
    %1735 = vmatpush1.bf16.msra.mxu0 0
    %1736 = vmatprep.subr.bf16.mxu0 0
    %1737 = vmatpush1.bf16.msra.mxu0 0
    %1738 = vmatprep.subr.bf16.mxu0 0
    %1739 = vmatpush1.bf16.msra.mxu0 0
    %1740 = vmatprep.subr.bf16.mxu0 0
    %1741 = vmatpush1.bf16.msra.mxu0 0
    %1742 = vmatprep.mubr.bf16.mxu0 0
    %1743 = vmatmul.mubr.bf16.gmra.mrb[0].mxu0 %v181
    %v1744 = vpop.f32.mrb[0].mxu0
    %v1745 = vadd.f32 %v1696, %v1744
    %v1746 = vpop.f32.mrb[0].mxu0
    %v1747 = vpop.f32.mrb[0].mxu0
    %v1748 = vadd.f32 %v1696, %v1747
    %v1749 = vpop.f32.mrb[0].mxu0
    %1750 = vdwg.mxu0
    %v1751 = vpack.c.bf16 %v1613, %v1613
    %v1752 = vpack.c.bf16 %v1616, %v1616
    %v1753 = vpack.c.bf16 %v1679, %v1679
    %v1754 = vpack.c.bf16 %v1682, %v1682
    %v1756 = vsel %vm360, %v1751, 0
    %v1759 = vsel %vm360, %v1753, 0
    %1761 = vmatprep.subr.bf16.mxu0 0
    %1762 = vmatpush1.bf16.xpose.msra.mxu0 %v1759
    %1763 = vmatprep.subr.bf16.mxu0 0
    %1764 = vmatpush1.bf16.xpose.msra.mxu0 0
    %1765 = vmatprep.subr.bf16.mxu0 0
    %1766 = vmatpush1.bf16.xpose.msra.mxu0 0
    %1767 = vmatprep.subr.bf16.mxu0 0
    %1768 = vmatpush1.bf16.xpose.msra.mxu0 0
    %1769 = vmatprep.subr.bf16.mxu0 0
    %1770 = vmatpush1.bf16.xpose.msra.mxu0 0
    %1771 = vmatprep.subr.bf16.mxu0 0
    %1772 = vmatpush1.bf16.xpose.msra.mxu0 0
    %1773 = vmatprep.subr.bf16.mxu0 0
    %1774 = vmatpush1.bf16.xpose.msra.mxu0 0
    %1775 = vmatprep.subr.bf16.mxu0 0
    %1776 = vmatpush1.bf16.xpose.msra.mxu0 0
    %1777 = vmatprep.subr.bf16.mxu0 0
    %1778 = vmatpush1.bf16.xpose.msra.mxu0 0
    %1779 = vmatprep.subr.bf16.mxu0 0
    %1780 = vmatpush1.bf16.xpose.msra.mxu0 0
    %1781 = vmatprep.subr.bf16.mxu0 0
    %1782 = vmatpush1.bf16.xpose.msra.mxu0 0
    %1783 = vmatprep.subr.bf16.mxu0 0
    %1784 = vmatpush1.bf16.xpose.msra.mxu0 0
    %1785 = vmatprep.subr.bf16.mxu0 0
    %1786 = vmatpush1.bf16.xpose.msra.mxu0 0
    %1787 = vmatprep.subr.bf16.mxu0 0
    %1788 = vmatpush1.bf16.xpose.msra.mxu0 0
    %1789 = vmatprep.subr.bf16.mxu0 0
    %1790 = vmatpush1.bf16.xpose.msra.mxu0 0
    %1791 = vmatprep.subr.bf16.mxu0 0
    %1792 = vmatpush1.bf16.xpose.msra.mxu0 0
    %1793 = vmatprep.mubr.bf16.mxu0 0
    %1794 = vmatmul.mubr.bf16.gmra.mrb[0].mxu0 %v1756
    %v1795 = vpop.f32.mrb[0].mxu0
    %v1796 = vadd.f32 0.0, %v1795
    %v1797 = vpop.f32.mrb[0].mxu0
    %v1798 = vpop.f32.mrb[0].mxu0
    %v1799 = vpop.f32.mrb[0].mxu0
    %1800 = vdwg.mxu0
    %v1802 = vsel %vm360, %v1752, 0
    %v1805 = vsel %vm360, %v1754, 0
    %1807 = vmatprep.subr.bf16.mxu0 0
    %1808 = vmatpush1.bf16.xpose.msra.mxu0 %v1805
    %1809 = vmatprep.subr.bf16.mxu0 0
    %1810 = vmatpush1.bf16.xpose.msra.mxu0 0
    %1811 = vmatprep.subr.bf16.mxu0 0
    %1812 = vmatpush1.bf16.xpose.msra.mxu0 0
    %1813 = vmatprep.subr.bf16.mxu0 0
    %1814 = vmatpush1.bf16.xpose.msra.mxu0 0
    %1815 = vmatprep.subr.bf16.mxu0 0
    %1816 = vmatpush1.bf16.xpose.msra.mxu0 0
    %1817 = vmatprep.subr.bf16.mxu0 0
    %1818 = vmatpush1.bf16.xpose.msra.mxu0 0
    %1819 = vmatprep.subr.bf16.mxu0 0
    %1820 = vmatpush1.bf16.xpose.msra.mxu0 0
    %1821 = vmatprep.subr.bf16.mxu0 0
    %1822 = vmatpush1.bf16.xpose.msra.mxu0 0
    %1823 = vmatprep.subr.bf16.mxu0 0
    %1824 = vmatpush1.bf16.xpose.msra.mxu0 0
    %1825 = vmatprep.subr.bf16.mxu0 0
    %1826 = vmatpush1.bf16.xpose.msra.mxu0 0
    %1827 = vmatprep.subr.bf16.mxu0 0
    %1828 = vmatpush1.bf16.xpose.msra.mxu0 0
    %1829 = vmatprep.subr.bf16.mxu0 0
    %1830 = vmatpush1.bf16.xpose.msra.mxu0 0
    %1831 = vmatprep.subr.bf16.mxu0 0
    %1832 = vmatpush1.bf16.xpose.msra.mxu0 0
    %1833 = vmatprep.subr.bf16.mxu0 0
    %1834 = vmatpush1.bf16.xpose.msra.mxu0 0
    %1835 = vmatprep.subr.bf16.mxu0 0
    %1836 = vmatpush1.bf16.xpose.msra.mxu0 0
    %1837 = vmatprep.subr.bf16.mxu0 0
    %1838 = vmatpush1.bf16.xpose.msra.mxu0 0
    %1839 = vmatprep.mubr.bf16.mxu0 0
    %1840 = vmatmul.mubr.bf16.gmra.mrb[0].mxu0 %v1802
    %v1841 = vpop.f32.mrb[0].mxu0
    %v1842 = vadd.f32 0.0, %v1841
    %v1843 = vpop.f32.mrb[0].mxu0
    %v1844 = vpop.f32.mrb[0].mxu0
    %v1845 = vpop.f32.mrb[0].mxu0
    %1846 = vdwg.mxu0
    %v1847 = vmul.f32 %v1796, 0.35355338
    %v1848 = vmul.f32 %v1842, 0.35355338
    %v1849 = vsel %vm360, %v1847, -inf
    %1850 = vmax.xlane.f32.xlu0 %v1849
    %v1851 = vpop.xlane.xlu0 %1850
    %v1852 = vsel %vm360, %v1848, -inf
    %1853 = vmax.xlane.f32.xlu0 %v1852
    %v1854 = vpop.xlane.xlu0 %1853
    %v1855 = vsub.f32 %v1847, %v1851
    %v1856 = vsub.f32 %v1848, %v1854
    %v1857 = vmul.f32 %v1855, 1.442695
    %v1858 = vpow.pop %v1857
    %v1859 = vmul.f32 %v1856, 1.442695
    %v1860 = vpow.pop %v1859
    %v1861 = vsel %vm360, %v1858, 0.0
    %1862 = vadd.xlane.f32.xlu0 %v1861
    %v1863 = vpop.xlane.xlu0 %1862
    %v1864 = vsel %vm360, %v1860, 0.0
    %1865 = vadd.xlane.f32.xlu0 %v1864
    %v1866 = vpop.xlane.xlu0 %1865
    %v1867 = vrcp.pop %v1863
    %v1868 = vrcp.pop %v1866
    %v1869 = vmul.f32 %v1858, %v1867
    %v1870 = vmul.f32 %v1860, %v1868
    %v1871 = vpack.c.bf16 %v1869, %v1869
    %v1872 = vpack.c.bf16 %v1870, %v1870
    %v1873 = vpack.c.bf16 %v1745, %v1745
    %v1874 = vpack.c.bf16 %v1748, %v1748
    %v1876 = vsel %vm360, %v1871, 0
    %v1879 = vsel %vm484, %v1873, 0
    %1881 = vmatprep.subr.bf16.mxu0 0
    %1882 = vmatpush1.bf16.msra.mxu0 %v1879
    %1883 = vmatprep.subr.bf16.mxu0 0
    %1884 = vmatpush1.bf16.msra.mxu0 0
    %1885 = vmatprep.subr.bf16.mxu0 0
    %1886 = vmatpush1.bf16.msra.mxu0 0
    %1887 = vmatprep.subr.bf16.mxu0 0
    %1888 = vmatpush1.bf16.msra.mxu0 0
    %1889 = vmatprep.subr.bf16.mxu0 0
    %1890 = vmatpush1.bf16.msra.mxu0 0
    %1891 = vmatprep.subr.bf16.mxu0 0
    %1892 = vmatpush1.bf16.msra.mxu0 0
    %1893 = vmatprep.subr.bf16.mxu0 0
    %1894 = vmatpush1.bf16.msra.mxu0 0
    %1895 = vmatprep.subr.bf16.mxu0 0
    %1896 = vmatpush1.bf16.msra.mxu0 0
    %1897 = vmatprep.subr.bf16.mxu0 0
    %1898 = vmatpush1.bf16.msra.mxu0 0
    %1899 = vmatprep.subr.bf16.mxu0 0
    %1900 = vmatpush1.bf16.msra.mxu0 0
    %1901 = vmatprep.subr.bf16.mxu0 0
    %1902 = vmatpush1.bf16.msra.mxu0 0
    %1903 = vmatprep.subr.bf16.mxu0 0
    %1904 = vmatpush1.bf16.msra.mxu0 0
    %1905 = vmatprep.subr.bf16.mxu0 0
    %1906 = vmatpush1.bf16.msra.mxu0 0
    %1907 = vmatprep.subr.bf16.mxu0 0
    %1908 = vmatpush1.bf16.msra.mxu0 0
    %1909 = vmatprep.subr.bf16.mxu0 0
    %1910 = vmatpush1.bf16.msra.mxu0 0
    %1911 = vmatprep.subr.bf16.mxu0 0
    %1912 = vmatpush1.bf16.msra.mxu0 0
    %1913 = vmatprep.mubr.bf16.mxu0 0
    %1914 = vmatmul.mubr.bf16.gmra.mrb[0].mxu0 %v1876
    %v1915 = vpop.f32.mrb[0].mxu0
    %v1916 = vadd.f32 0.0, %v1915
    %v1917 = vpop.f32.mrb[0].mxu0
    %v1918 = vpop.f32.mrb[0].mxu0
    %v1919 = vpop.f32.mrb[0].mxu0
    %1920 = vdwg.mxu0
    %v1922 = vsel %vm360, %v1872, 0
    %v1925 = vsel %vm484, %v1874, 0
    %1927 = vmatprep.subr.bf16.mxu0 0
    %1928 = vmatpush1.bf16.msra.mxu0 %v1925
    %1929 = vmatprep.subr.bf16.mxu0 0
    %1930 = vmatpush1.bf16.msra.mxu0 0
    %1931 = vmatprep.subr.bf16.mxu0 0
    %1932 = vmatpush1.bf16.msra.mxu0 0
    %1933 = vmatprep.subr.bf16.mxu0 0
    %1934 = vmatpush1.bf16.msra.mxu0 0
    %1935 = vmatprep.subr.bf16.mxu0 0
    %1936 = vmatpush1.bf16.msra.mxu0 0
    %1937 = vmatprep.subr.bf16.mxu0 0
    %1938 = vmatpush1.bf16.msra.mxu0 0
    %1939 = vmatprep.subr.bf16.mxu0 0
    %1940 = vmatpush1.bf16.msra.mxu0 0
    %1941 = vmatprep.subr.bf16.mxu0 0
    %1942 = vmatpush1.bf16.msra.mxu0 0
    %1943 = vmatprep.subr.bf16.mxu0 0
    %1944 = vmatpush1.bf16.msra.mxu0 0
    %1945 = vmatprep.subr.bf16.mxu0 0
    %1946 = vmatpush1.bf16.msra.mxu0 0
    %1947 = vmatprep.subr.bf16.mxu0 0
    %1948 = vmatpush1.bf16.msra.mxu0 0
    %1949 = vmatprep.subr.bf16.mxu0 0
    %1950 = vmatpush1.bf16.msra.mxu0 0
    %1951 = vmatprep.subr.bf16.mxu0 0
    %1952 = vmatpush1.bf16.msra.mxu0 0
    %1953 = vmatprep.subr.bf16.mxu0 0
    %1954 = vmatpush1.bf16.msra.mxu0 0
    %1955 = vmatprep.subr.bf16.mxu0 0
    %1956 = vmatpush1.bf16.msra.mxu0 0
    %1957 = vmatprep.subr.bf16.mxu0 0
    %1958 = vmatpush1.bf16.msra.mxu0 0
    %1959 = vmatprep.mubr.bf16.mxu0 0
    %1960 = vmatmul.mubr.bf16.gmra.mrb[0].mxu0 %v1922
    %v1961 = vpop.f32.mrb[0].mxu0
    %v1962 = vadd.f32 0.0, %v1961
    %v1963 = vpop.f32.mrb[0].mxu0
    %v1964 = vpop.f32.mrb[0].mxu0
    %v1965 = vpop.f32.mrb[0].mxu0
    %1966 = vdwg.mxu0
    %v1967 = vpack.c.bf16 %v1962, %v1916
    %s1968 = scalar_lea.vmem %s5, 12
    %v1969 = vld [vmem:[%s1968] sm:$0xf]
    %v1971 = vsel %vm360, %v1967, 0
    %v1974 = vsel %vm484, %v1969, 0
    %1976 = vmatprep.subr.bf16.mxu0 0
    %1977 = vmatpush1.bf16.msra.mxu0 %v1974
    %1978 = vmatprep.subr.bf16.mxu0 0
    %1979 = vmatpush1.bf16.msra.mxu0 0
    %1980 = vmatprep.subr.bf16.mxu0 0
    %1981 = vmatpush1.bf16.msra.mxu0 0
    %1982 = vmatprep.subr.bf16.mxu0 0
    %1983 = vmatpush1.bf16.msra.mxu0 0
    %1984 = vmatprep.subr.bf16.mxu0 0
    %1985 = vmatpush1.bf16.msra.mxu0 0
    %1986 = vmatprep.subr.bf16.mxu0 0
    %1987 = vmatpush1.bf16.msra.mxu0 0
    %1988 = vmatprep.subr.bf16.mxu0 0
    %1989 = vmatpush1.bf16.msra.mxu0 0
    %1990 = vmatprep.subr.bf16.mxu0 0
    %1991 = vmatpush1.bf16.msra.mxu0 0
    %1992 = vmatprep.subr.bf16.mxu0 0
    %1993 = vmatpush1.bf16.msra.mxu0 0
    %1994 = vmatprep.subr.bf16.mxu0 0
    %1995 = vmatpush1.bf16.msra.mxu0 0
    %1996 = vmatprep.subr.bf16.mxu0 0
    %1997 = vmatpush1.bf16.msra.mxu0 0
    %1998 = vmatprep.subr.bf16.mxu0 0
    %1999 = vmatpush1.bf16.msra.mxu0 0
    %2000 = vmatprep.subr.bf16.mxu0 0
    %2001 = vmatpush1.bf16.msra.mxu0 0
    %2002 = vmatprep.subr.bf16.mxu0 0
    %2003 = vmatpush1.bf16.msra.mxu0 0
    %2004 = vmatprep.subr.bf16.mxu0 0
    %2005 = vmatpush1.bf16.msra.mxu0 0
    %2006 = vmatprep.subr.bf16.mxu0 0
    %2007 = vmatpush1.bf16.msra.mxu0 0
    %2008 = vmatprep.mubr.bf16.mxu0 0
    %2009 = vmatmul.mubr.bf16.gmra.mrb[0].mxu0 %v1971
    %v2010 = vpop.f32.mrb[0].mxu0
    %v2011 = vadd.f32 0.0, %v2010
    %v2012 = vpop.f32.mrb[0].mxu0
    %v2013 = vpop.f32.mrb[0].mxu0
    %v2014 = vadd.f32 0.0, %v2013
    %v2015 = vpop.f32.mrb[0].mxu0
    %2016 = vdwg.mxu0
    %v2017 = vadd.f32 %v1551, %v2011
    %v2018 = vadd.f32 %v1552, %v2014
    %v2019 = vld [vmem:[%s6] sm:$0x1]
    %v2021 = vlaneseq
    %v2022 = vshrl.u32 %v2021, 7
    %v2023 = vsub.s32 0, %v2022
    %v2024 = vrot.slane %v2019, %v2023
    %v2026 = vadd.f32 %v2017, %v2024
    %v2027 = vadd.f32 %v2018, %v2024
    %v2028 = vadd.f32 %v153, %v2026
    %v2029 = vadd.f32 %v154, %v2027
    %v2030 = vld [vmem:[%s11] sm:$0x1]
    %v2031 = vld [vmem:[%s12] sm:$0x1]
    %v2032 = vsel %vm179, %v2028, 0.0
    %2033 = vadd.xlane.f32.xlu0 %v2032
    %v2034 = vpop.xlane.xlu0 %2033
    %v2035 = vsel %vm179, %v2029, 0.0
    %2036 = vadd.xlane.f32.xlu0 %v2035
    %v2037 = vpop.xlane.xlu0 %2036
    %v2038 = vrcp.pop 32.0
    %v2039 = vmul.f32 %v2034, %v2038
    %v2040 = vmul.f32 %v2037, %v2038
    %v2041 = vsub.f32 %v2028, %v2039
    %v2042 = vsub.f32 %v2029, %v2040
    %v2043 = vmul.f32 %v2041, %v2041
    %v2044 = vmul.f32 %v2042, %v2042
    %v2045 = vsel %vm179, %v2043, 0.0
    %2046 = vadd.xlane.f32.xlu0 %v2045
    %v2047 = vpop.xlane.xlu0 %2046
    %v2048 = vsel %vm179, %v2044, 0.0
    %2049 = vadd.xlane.f32.xlu0 %v2048
    %v2050 = vpop.xlane.xlu0 %2049
    %v2051 = vmul.f32 %v2047, %v2038
    %v2052 = vmul.f32 %v2050, %v2038
    %v2053 = vadd.f32 %v2051, 1e-05
    %v2054 = vadd.f32 %v2052, 1e-05
    %v2055 = vrsqrt.pop %v2053
    %v2056 = vrsqrt.pop %v2054
    %v2057 = vmul.f32 %v2041, %v2055
    %v2058 = vmul.f32 %v2042, %v2056
    %v2060 = vlaneseq
    %v2061 = vshrl.u32 %v2060, 7
    %v2062 = vsub.s32 0, %v2061
    %v2063 = vrot.slane %v2030, %v2062
    %v2065 = vmul.f32 %v2057, %v2063
    %v2066 = vmul.f32 %v2058, %v2063
    %v2068 = vlaneseq
    %v2069 = vshrl.u32 %v2068, 7
    %v2070 = vsub.s32 0, %v2069
    %v2071 = vrot.slane %v2031, %v2070
    %v2073 = vadd.f32 %v2065, %v2071
    %v2074 = vadd.f32 %v2066, %v2071
    %v2075 = vpack.c.bf16 %v2074, %v2073
    %v2076 = vld [vmem:[%s7] sm:$0xf]
    %v2077 = vld [vmem:[%s7 + $0x4] sm:$0xf]
    %v2078 = vld [vmem:[%s7 + $0x8] sm:$0xf]
    %v2079 = vld [vmem:[%s7 + $0xc] sm:$0xf]
    %v2080 = vld [vmem:[%s8] sm:$0x1]
    %v2082 = vlaneseq
    %v2083 = vshrl.u32 %v2082, 7
    %v2084 = vsub.s32 0, %v2083
    %v2085 = vrot.slane %v2080, %v2084
    %v2091 = vunpack.c.l.b16 %v2076
    %v2092 = vunpack.c.l.b16 %v2077
    %v2093 = vunpack.c.l.b16 %v2078
    %v2094 = vunpack.c.l.b16 %v2079
    %v2095 = vpack.c.b16 %v2092, %v2091
    %v2096 = vpack.c.b16 %v2094, %v2093
    %v2100 = vsel %vm179, %v2075, 0
    %2102 = vmatprep.subr.bf16.mxu0 0
    %2103 = vmatpush1.bf16.msra.mxu0 %v2095
    %2104 = vmatprep.subr.bf16.mxu0 0
    %2105 = vmatpush1.bf16.msra.mxu0 %v2096
    %2106 = vmatprep.subr.bf16.mxu0 0
    %2107 = vmatpush1.bf16.msra.mxu0 0
    %2108 = vmatprep.subr.bf16.mxu0 0
    %2109 = vmatpush1.bf16.msra.mxu0 0
    %2110 = vmatprep.subr.bf16.mxu0 0
    %2111 = vmatpush1.bf16.msra.mxu0 0
    %2112 = vmatprep.subr.bf16.mxu0 0
    %2113 = vmatpush1.bf16.msra.mxu0 0
    %2114 = vmatprep.subr.bf16.mxu0 0
    %2115 = vmatpush1.bf16.msra.mxu0 0
    %2116 = vmatprep.subr.bf16.mxu0 0
    %2117 = vmatpush1.bf16.msra.mxu0 0
    %2118 = vmatprep.subr.bf16.mxu0 0
    %2119 = vmatpush1.bf16.msra.mxu0 0
    %2120 = vmatprep.subr.bf16.mxu0 0
    %2121 = vmatpush1.bf16.msra.mxu0 0
    %2122 = vmatprep.subr.bf16.mxu0 0
    %2123 = vmatpush1.bf16.msra.mxu0 0
    %2124 = vmatprep.subr.bf16.mxu0 0
    %2125 = vmatpush1.bf16.msra.mxu0 0
    %2126 = vmatprep.subr.bf16.mxu0 0
    %2127 = vmatpush1.bf16.msra.mxu0 0
    %2128 = vmatprep.subr.bf16.mxu0 0
    %2129 = vmatpush1.bf16.msra.mxu0 0
    %2130 = vmatprep.subr.bf16.mxu0 0
    %2131 = vmatpush1.bf16.msra.mxu0 0
    %2132 = vmatprep.subr.bf16.mxu0 0
    %2133 = vmatpush1.bf16.msra.mxu0 0
    %2134 = vmatprep.mubr.bf16.mxu0 0
    %2135 = vmatmul.mubr.bf16.gmra.mrb[0].mxu0 %v2100
    %v2136 = vpop.f32.mrb[0].mxu0
    %v2137 = vadd.f32 %v2085, %v2136
    %v2138 = vpop.f32.mrb[0].mxu0
    %v2139 = vpop.f32.mrb[0].mxu0
    %v2140 = vadd.f32 %v2085, %v2139
    %v2141 = vpop.f32.mrb[0].mxu0
    %2142 = vdwg.mxu0
    %v2143 = vmax.f32 %v2137, 0.0
    %v2144 = vmax.f32 %v2140, 0.0
    %v2145 = vpack.c.bf16 %v2144, %v2143
    %v2146 = vld [vmem:[%s9] sm:$0xf]
    %v2147 = vld [vmem:[%s9 + $0x4] sm:$0xf]
    %v2148 = vld [vmem:[%s9 + $0x8] sm:$0xf]
    %v2149 = vld [vmem:[%s9 + $0xc] sm:$0xf]
    %v2150 = vld [vmem:[%s9 + $0x10] sm:$0xf]
    %v2151 = vld [vmem:[%s9 + $0x14] sm:$0xf]
    %v2152 = vld [vmem:[%s9 + $0x18] sm:$0xf]
    %v2153 = vld [vmem:[%s9 + $0x1c] sm:$0xf]
    %v2154 = vld [vmem:[%s10] sm:$0x1]
    %v2156 = vlaneseq
    %v2157 = vshrl.u32 %v2156, 7
    %v2158 = vsub.s32 0, %v2157
    %v2159 = vrot.slane %v2154, %v2158
    %v2169 = vunpack.c.l.b16 %v2146
    %v2170 = vunpack.c.l.b16 %v2147
    %v2171 = vunpack.c.l.b16 %v2148
    %v2172 = vunpack.c.l.b16 %v2149
    %v2173 = vunpack.c.l.b16 %v2150
    %v2174 = vunpack.c.l.b16 %v2151
    %v2175 = vunpack.c.l.b16 %v2152
    %v2176 = vunpack.c.l.b16 %v2153
    %v2177 = vpack.c.b16 %v2170, %v2169
    %v2178 = vpack.c.b16 %v2172, %v2171
    %v2179 = vpack.c.b16 %v2174, %v2173
    %v2180 = vpack.c.b16 %v2176, %v2175
    %vm2185 = vcmask 523264
    %v2187 = vsel %vm2185, %v2145, 0
    %2189 = vmatprep.subr.bf16.mxu0 0
    %2190 = vmatpush1.bf16.msra.mxu0 %v2177
    %2191 = vmatprep.subr.bf16.mxu0 0
    %2192 = vmatpush1.bf16.msra.mxu0 %v2178
    %2193 = vmatprep.subr.bf16.mxu0 0
    %2194 = vmatpush1.bf16.msra.mxu0 %v2179
    %2195 = vmatprep.subr.bf16.mxu0 0
    %2196 = vmatpush1.bf16.msra.mxu0 %v2180
    %2197 = vmatprep.subr.bf16.mxu0 0
    %2198 = vmatpush1.bf16.msra.mxu0 0
    %2199 = vmatprep.subr.bf16.mxu0 0
    %2200 = vmatpush1.bf16.msra.mxu0 0
    %2201 = vmatprep.subr.bf16.mxu0 0
    %2202 = vmatpush1.bf16.msra.mxu0 0
    %2203 = vmatprep.subr.bf16.mxu0 0
    %2204 = vmatpush1.bf16.msra.mxu0 0
    %2205 = vmatprep.subr.bf16.mxu0 0
    %2206 = vmatpush1.bf16.msra.mxu0 0
    %2207 = vmatprep.subr.bf16.mxu0 0
    %2208 = vmatpush1.bf16.msra.mxu0 0
    %2209 = vmatprep.subr.bf16.mxu0 0
    %2210 = vmatpush1.bf16.msra.mxu0 0
    %2211 = vmatprep.subr.bf16.mxu0 0
    %2212 = vmatpush1.bf16.msra.mxu0 0
    %2213 = vmatprep.subr.bf16.mxu0 0
    %2214 = vmatpush1.bf16.msra.mxu0 0
    %2215 = vmatprep.subr.bf16.mxu0 0
    %2216 = vmatpush1.bf16.msra.mxu0 0
    %2217 = vmatprep.subr.bf16.mxu0 0
    %2218 = vmatpush1.bf16.msra.mxu0 0
    %2219 = vmatprep.subr.bf16.mxu0 0
    %2220 = vmatpush1.bf16.msra.mxu0 0
    %2221 = vmatprep.mubr.bf16.mxu0 0
    %2222 = vmatmul.mubr.bf16.gmra.mrb[0].mxu0 %v2187
    %v2223 = vpop.f32.mrb[0].mxu0
    %v2224 = vadd.f32 %v2159, %v2223
    %v2225 = vpop.f32.mrb[0].mxu0
    %v2226 = vpop.f32.mrb[0].mxu0
    %v2227 = vadd.f32 %v2159, %v2226
    %v2228 = vpop.f32.mrb[0].mxu0
    %2229 = vdwg.mxu0
    %v2230 = vadd.f32 %v2073, %v2224
    %v2231 = vadd.f32 %v2074, %v2227
    %s2232 = scalar_lea.vmem %s11, 1
    %v2233 = vld [vmem:[%s2232] sm:$0x1]
    %s2234 = scalar_lea.vmem %s12, 1
    %v2235 = vld [vmem:[%s2234] sm:$0x1]
    %v2236 = vsel %vm179, %v2230, 0.0
    %2237 = vadd.xlane.f32.xlu0 %v2236
    %v2238 = vpop.xlane.xlu0 %2237
    %v2239 = vsel %vm179, %v2231, 0.0
    %2240 = vadd.xlane.f32.xlu0 %v2239
    %v2241 = vpop.xlane.xlu0 %2240
    %v2242 = vmul.f32 %v2238, %v2038
    %v2243 = vmul.f32 %v2241, %v2038
    %v2244 = vsub.f32 %v2230, %v2242
    %v2245 = vsub.f32 %v2231, %v2243
    %v2246 = vmul.f32 %v2244, %v2244
    %v2247 = vmul.f32 %v2245, %v2245
    %v2248 = vsel %vm179, %v2246, 0.0
    %2249 = vadd.xlane.f32.xlu0 %v2248
    %v2250 = vpop.xlane.xlu0 %2249
    %v2251 = vsel %vm179, %v2247, 0.0
    %2252 = vadd.xlane.f32.xlu0 %v2251
    %v2253 = vpop.xlane.xlu0 %2252
    %v2254 = vmul.f32 %v2250, %v2038
    %v2255 = vmul.f32 %v2253, %v2038
    %v2256 = vadd.f32 %v2254, 1e-05
    %v2257 = vadd.f32 %v2255, 1e-05
    %v2258 = vrsqrt.pop %v2256
    %v2259 = vrsqrt.pop %v2257
    %v2260 = vmul.f32 %v2244, %v2258
    %v2261 = vmul.f32 %v2245, %v2259
    %v2263 = vlaneseq
    %v2264 = vshrl.u32 %v2263, 7
    %v2265 = vsub.s32 0, %v2264
    %v2266 = vrot.slane %v2233, %v2265
    %v2268 = vmul.f32 %v2260, %v2266
    %v2269 = vmul.f32 %v2261, %v2266
    %v2271 = vlaneseq
    %v2272 = vshrl.u32 %v2271, 7
    %v2273 = vsub.s32 0, %v2272
    %v2274 = vrot.slane %v2235, %v2273
    %v2276 = vadd.f32 %v2268, %v2274
    %v2277 = vadd.f32 %v2269, %v2274
    %v2278 = vpack.c.bf16 %v2277, %v2276
    %s2279 = scalar_lea.vmem %s3, 192
    %v2280 = vld [vmem:[%s2279] sm:$0xf]
    %v2281 = vld [vmem:[%s2279 + $0x4] sm:$0xf]
    %v2282 = vld [vmem:[%s2279 + $0x8] sm:$0xf]
    %v2283 = vld [vmem:[%s2279 + $0xc] sm:$0xf]
    %s2284 = scalar_lea.vmem %s4, 12
    %v2285 = vld [vmem:[%s2284] sm:$0x1]
    %v2287 = vlaneseq
    %v2288 = vshrl.u32 %v2287, 7
    %v2289 = vsub.s32 0, %v2288
    %v2290 = vrot.slane %v2285, %v2289
    %v2296 = vunpack.c.l.b16 %v2280
    %v2297 = vunpack.c.l.b16 %v2281
    %v2298 = vunpack.c.l.b16 %v2282
    %v2299 = vunpack.c.l.b16 %v2283
    %v2300 = vpack.c.b16 %v2297, %v2296
    %v2301 = vpack.c.b16 %v2299, %v2298
    %v2305 = vsel %vm179, %v2278, 0
    %2307 = vmatprep.subr.bf16.mxu0 0
    %2308 = vmatpush1.bf16.msra.mxu0 %v2300
    %2309 = vmatprep.subr.bf16.mxu0 0
    %2310 = vmatpush1.bf16.msra.mxu0 %v2301
    %2311 = vmatprep.subr.bf16.mxu0 0
    %2312 = vmatpush1.bf16.msra.mxu0 0
    %2313 = vmatprep.subr.bf16.mxu0 0
    %2314 = vmatpush1.bf16.msra.mxu0 0
    %2315 = vmatprep.subr.bf16.mxu0 0
    %2316 = vmatpush1.bf16.msra.mxu0 0
    %2317 = vmatprep.subr.bf16.mxu0 0
    %2318 = vmatpush1.bf16.msra.mxu0 0
    %2319 = vmatprep.subr.bf16.mxu0 0
    %2320 = vmatpush1.bf16.msra.mxu0 0
    %2321 = vmatprep.subr.bf16.mxu0 0
    %2322 = vmatpush1.bf16.msra.mxu0 0
    %2323 = vmatprep.subr.bf16.mxu0 0
    %2324 = vmatpush1.bf16.msra.mxu0 0
    %2325 = vmatprep.subr.bf16.mxu0 0
    %2326 = vmatpush1.bf16.msra.mxu0 0
    %2327 = vmatprep.subr.bf16.mxu0 0
    %2328 = vmatpush1.bf16.msra.mxu0 0
    %2329 = vmatprep.subr.bf16.mxu0 0
    %2330 = vmatpush1.bf16.msra.mxu0 0
    %2331 = vmatprep.subr.bf16.mxu0 0
    %2332 = vmatpush1.bf16.msra.mxu0 0
    %2333 = vmatprep.subr.bf16.mxu0 0
    %2334 = vmatpush1.bf16.msra.mxu0 0
    %2335 = vmatprep.subr.bf16.mxu0 0
    %2336 = vmatpush1.bf16.msra.mxu0 0
    %2337 = vmatprep.subr.bf16.mxu0 0
    %2338 = vmatpush1.bf16.msra.mxu0 0
    %2339 = vmatprep.mubr.bf16.mxu0 0
    %2340 = vmatmul.mubr.bf16.gmra.mrb[0].mxu0 %v2305
    %v2341 = vpop.f32.mrb[0].mxu0
    %v2342 = vadd.f32 %v2290, %v2341
    %v2343 = vpop.f32.mrb[0].mxu0
    %v2344 = vpop.f32.mrb[0].mxu0
    %v2345 = vadd.f32 %v2290, %v2344
    %v2346 = vpop.f32.mrb[0].mxu0
    %2347 = vdwg.mxu0
    %s2348 = scalar_lea.vmem %s3, 256
    %v2349 = vld [vmem:[%s2348] sm:$0xf]
    %v2350 = vld [vmem:[%s2348 + $0x4] sm:$0xf]
    %v2351 = vld [vmem:[%s2348 + $0x8] sm:$0xf]
    %v2352 = vld [vmem:[%s2348 + $0xc] sm:$0xf]
    %s2353 = scalar_lea.vmem %s4, 16
    %v2354 = vld [vmem:[%s2353] sm:$0x1]
    %v2356 = vlaneseq
    %v2357 = vshrl.u32 %v2356, 7
    %v2358 = vsub.s32 0, %v2357
    %v2359 = vrot.slane %v2354, %v2358
    %v2365 = vunpack.c.l.b16 %v2349
    %v2366 = vunpack.c.l.b16 %v2350
    %v2367 = vunpack.c.l.b16 %v2351
    %v2368 = vunpack.c.l.b16 %v2352
    %v2369 = vpack.c.b16 %v2366, %v2365
    %v2370 = vpack.c.b16 %v2368, %v2367
    %2373 = vmatprep.subr.bf16.mxu0 0
    %2374 = vmatpush1.bf16.msra.mxu0 %v2369
    %2375 = vmatprep.subr.bf16.mxu0 0
    %2376 = vmatpush1.bf16.msra.mxu0 %v2370
    %2377 = vmatprep.subr.bf16.mxu0 0
    %2378 = vmatpush1.bf16.msra.mxu0 0
    %2379 = vmatprep.subr.bf16.mxu0 0
    %2380 = vmatpush1.bf16.msra.mxu0 0
    %2381 = vmatprep.subr.bf16.mxu0 0
    %2382 = vmatpush1.bf16.msra.mxu0 0
    %2383 = vmatprep.subr.bf16.mxu0 0
    %2384 = vmatpush1.bf16.msra.mxu0 0
    %2385 = vmatprep.subr.bf16.mxu0 0
    %2386 = vmatpush1.bf16.msra.mxu0 0
    %2387 = vmatprep.subr.bf16.mxu0 0
    %2388 = vmatpush1.bf16.msra.mxu0 0
    %2389 = vmatprep.subr.bf16.mxu0 0
    %2390 = vmatpush1.bf16.msra.mxu0 0
    %2391 = vmatprep.subr.bf16.mxu0 0
    %2392 = vmatpush1.bf16.msra.mxu0 0
    %2393 = vmatprep.subr.bf16.mxu0 0
    %2394 = vmatpush1.bf16.msra.mxu0 0
    %2395 = vmatprep.subr.bf16.mxu0 0
    %2396 = vmatpush1.bf16.msra.mxu0 0
    %2397 = vmatprep.subr.bf16.mxu0 0
    %2398 = vmatpush1.bf16.msra.mxu0 0
    %2399 = vmatprep.subr.bf16.mxu0 0
    %2400 = vmatpush1.bf16.msra.mxu0 0
    %2401 = vmatprep.subr.bf16.mxu0 0
    %2402 = vmatpush1.bf16.msra.mxu0 0
    %2403 = vmatprep.subr.bf16.mxu0 0
    %2404 = vmatpush1.bf16.msra.mxu0 0
    %2405 = vmatprep.mubr.bf16.mxu0 0
    %2406 = vmatmul.mubr.bf16.gmra.mrb[0].mxu0 %v2305
    %v2407 = vpop.f32.mrb[0].mxu0
    %v2408 = vadd.f32 %v2359, %v2407
    %v2409 = vpop.f32.mrb[0].mxu0
    %v2410 = vpop.f32.mrb[0].mxu0
    %v2411 = vadd.f32 %v2359, %v2410
    %v2412 = vpop.f32.mrb[0].mxu0
    %2413 = vdwg.mxu0
    %s2414 = scalar_lea.vmem %s3, 320
    %v2415 = vld [vmem:[%s2414] sm:$0xf]
    %v2416 = vld [vmem:[%s2414 + $0x4] sm:$0xf]
    %v2417 = vld [vmem:[%s2414 + $0x8] sm:$0xf]
    %v2418 = vld [vmem:[%s2414 + $0xc] sm:$0xf]
    %s2419 = scalar_lea.vmem %s4, 20
    %v2420 = vld [vmem:[%s2419] sm:$0x1]
    %v2422 = vlaneseq
    %v2423 = vshrl.u32 %v2422, 7
    %v2424 = vsub.s32 0, %v2423
    %v2425 = vrot.slane %v2420, %v2424
    %v2431 = vunpack.c.l.b16 %v2415
    %v2432 = vunpack.c.l.b16 %v2416
    %v2433 = vunpack.c.l.b16 %v2417
    %v2434 = vunpack.c.l.b16 %v2418
    %v2435 = vpack.c.b16 %v2432, %v2431
    %v2436 = vpack.c.b16 %v2434, %v2433
    %2439 = vmatprep.subr.bf16.mxu0 0
    %2440 = vmatpush1.bf16.msra.mxu0 %v2435
    %2441 = vmatprep.subr.bf16.mxu0 0
    %2442 = vmatpush1.bf16.msra.mxu0 %v2436
    %2443 = vmatprep.subr.bf16.mxu0 0
    %2444 = vmatpush1.bf16.msra.mxu0 0
    %2445 = vmatprep.subr.bf16.mxu0 0
    %2446 = vmatpush1.bf16.msra.mxu0 0
    %2447 = vmatprep.subr.bf16.mxu0 0
    %2448 = vmatpush1.bf16.msra.mxu0 0
    %2449 = vmatprep.subr.bf16.mxu0 0
    %2450 = vmatpush1.bf16.msra.mxu0 0
    %2451 = vmatprep.subr.bf16.mxu0 0
    %2452 = vmatpush1.bf16.msra.mxu0 0
    %2453 = vmatprep.subr.bf16.mxu0 0
    %2454 = vmatpush1.bf16.msra.mxu0 0
    %2455 = vmatprep.subr.bf16.mxu0 0
    %2456 = vmatpush1.bf16.msra.mxu0 0
    %2457 = vmatprep.subr.bf16.mxu0 0
    %2458 = vmatpush1.bf16.msra.mxu0 0
    %2459 = vmatprep.subr.bf16.mxu0 0
    %2460 = vmatpush1.bf16.msra.mxu0 0
    %2461 = vmatprep.subr.bf16.mxu0 0
    %2462 = vmatpush1.bf16.msra.mxu0 0
    %2463 = vmatprep.subr.bf16.mxu0 0
    %2464 = vmatpush1.bf16.msra.mxu0 0
    %2465 = vmatprep.subr.bf16.mxu0 0
    %2466 = vmatpush1.bf16.msra.mxu0 0
    %2467 = vmatprep.subr.bf16.mxu0 0
    %2468 = vmatpush1.bf16.msra.mxu0 0
    %2469 = vmatprep.subr.bf16.mxu0 0
    %2470 = vmatpush1.bf16.msra.mxu0 0
    %2471 = vmatprep.mubr.bf16.mxu0 0
    %2472 = vmatmul.mubr.bf16.gmra.mrb[0].mxu0 %v2305
    %v2473 = vpop.f32.mrb[0].mxu0
    %v2474 = vadd.f32 %v2425, %v2473
    %v2475 = vpop.f32.mrb[0].mxu0
    %v2476 = vpop.f32.mrb[0].mxu0
    %v2477 = vadd.f32 %v2425, %v2476
    %v2478 = vpop.f32.mrb[0].mxu0
    %2479 = vdwg.mxu0
    %v2480 = vpack.c.bf16 %v2342, %v2342
    %v2481 = vpack.c.bf16 %v2345, %v2345
    %v2482 = vpack.c.bf16 %v2408, %v2408
    %v2483 = vpack.c.bf16 %v2411, %v2411
    %v2485 = vsel %vm360, %v2480, 0
    %v2488 = vsel %vm360, %v2482, 0
    %2490 = vmatprep.subr.bf16.mxu0 0
    %2491 = vmatpush1.bf16.xpose.msra.mxu0 %v2488
    %2492 = vmatprep.subr.bf16.mxu0 0
    %2493 = vmatpush1.bf16.xpose.msra.mxu0 0
    %2494 = vmatprep.subr.bf16.mxu0 0
    %2495 = vmatpush1.bf16.xpose.msra.mxu0 0
    %2496 = vmatprep.subr.bf16.mxu0 0
    %2497 = vmatpush1.bf16.xpose.msra.mxu0 0
    %2498 = vmatprep.subr.bf16.mxu0 0
    %2499 = vmatpush1.bf16.xpose.msra.mxu0 0
    %2500 = vmatprep.subr.bf16.mxu0 0
    %2501 = vmatpush1.bf16.xpose.msra.mxu0 0
    %2502 = vmatprep.subr.bf16.mxu0 0
    %2503 = vmatpush1.bf16.xpose.msra.mxu0 0
    %2504 = vmatprep.subr.bf16.mxu0 0
    %2505 = vmatpush1.bf16.xpose.msra.mxu0 0
    %2506 = vmatprep.subr.bf16.mxu0 0
    %2507 = vmatpush1.bf16.xpose.msra.mxu0 0
    %2508 = vmatprep.subr.bf16.mxu0 0
    %2509 = vmatpush1.bf16.xpose.msra.mxu0 0
    %2510 = vmatprep.subr.bf16.mxu0 0
    %2511 = vmatpush1.bf16.xpose.msra.mxu0 0
    %2512 = vmatprep.subr.bf16.mxu0 0
    %2513 = vmatpush1.bf16.xpose.msra.mxu0 0
    %2514 = vmatprep.subr.bf16.mxu0 0
    %2515 = vmatpush1.bf16.xpose.msra.mxu0 0
    %2516 = vmatprep.subr.bf16.mxu0 0
    %2517 = vmatpush1.bf16.xpose.msra.mxu0 0
    %2518 = vmatprep.subr.bf16.mxu0 0
    %2519 = vmatpush1.bf16.xpose.msra.mxu0 0
    %2520 = vmatprep.subr.bf16.mxu0 0
    %2521 = vmatpush1.bf16.xpose.msra.mxu0 0
    %2522 = vmatprep.mubr.bf16.mxu0 0
    %2523 = vmatmul.mubr.bf16.gmra.mrb[0].mxu0 %v2485
    %v2524 = vpop.f32.mrb[0].mxu0
    %v2525 = vadd.f32 0.0, %v2524
    %v2526 = vpop.f32.mrb[0].mxu0
    %v2527 = vpop.f32.mrb[0].mxu0
    %v2528 = vpop.f32.mrb[0].mxu0
    %2529 = vdwg.mxu0
    %v2531 = vsel %vm360, %v2481, 0
    %v2534 = vsel %vm360, %v2483, 0
    %2536 = vmatprep.subr.bf16.mxu0 0
    %2537 = vmatpush1.bf16.xpose.msra.mxu0 %v2534
    %2538 = vmatprep.subr.bf16.mxu0 0
    %2539 = vmatpush1.bf16.xpose.msra.mxu0 0
    %2540 = vmatprep.subr.bf16.mxu0 0
    %2541 = vmatpush1.bf16.xpose.msra.mxu0 0
    %2542 = vmatprep.subr.bf16.mxu0 0
    %2543 = vmatpush1.bf16.xpose.msra.mxu0 0
    %2544 = vmatprep.subr.bf16.mxu0 0
    %2545 = vmatpush1.bf16.xpose.msra.mxu0 0
    %2546 = vmatprep.subr.bf16.mxu0 0
    %2547 = vmatpush1.bf16.xpose.msra.mxu0 0
    %2548 = vmatprep.subr.bf16.mxu0 0
    %2549 = vmatpush1.bf16.xpose.msra.mxu0 0
    %2550 = vmatprep.subr.bf16.mxu0 0
    %2551 = vmatpush1.bf16.xpose.msra.mxu0 0
    %2552 = vmatprep.subr.bf16.mxu0 0
    %2553 = vmatpush1.bf16.xpose.msra.mxu0 0
    %2554 = vmatprep.subr.bf16.mxu0 0
    %2555 = vmatpush1.bf16.xpose.msra.mxu0 0
    %2556 = vmatprep.subr.bf16.mxu0 0
    %2557 = vmatpush1.bf16.xpose.msra.mxu0 0
    %2558 = vmatprep.subr.bf16.mxu0 0
    %2559 = vmatpush1.bf16.xpose.msra.mxu0 0
    %2560 = vmatprep.subr.bf16.mxu0 0
    %2561 = vmatpush1.bf16.xpose.msra.mxu0 0
    %2562 = vmatprep.subr.bf16.mxu0 0
    %2563 = vmatpush1.bf16.xpose.msra.mxu0 0
    %2564 = vmatprep.subr.bf16.mxu0 0
    %2565 = vmatpush1.bf16.xpose.msra.mxu0 0
    %2566 = vmatprep.subr.bf16.mxu0 0
    %2567 = vmatpush1.bf16.xpose.msra.mxu0 0
    %2568 = vmatprep.mubr.bf16.mxu0 0
    %2569 = vmatmul.mubr.bf16.gmra.mrb[0].mxu0 %v2531
    %v2570 = vpop.f32.mrb[0].mxu0
    %v2571 = vadd.f32 0.0, %v2570
    %v2572 = vpop.f32.mrb[0].mxu0
    %v2573 = vpop.f32.mrb[0].mxu0
    %v2574 = vpop.f32.mrb[0].mxu0
    %2575 = vdwg.mxu0
    %v2576 = vmul.f32 %v2525, 0.35355338
    %v2577 = vmul.f32 %v2571, 0.35355338
    %v2578 = vsel %vm360, %v2576, -inf
    %2579 = vmax.xlane.f32.xlu0 %v2578
    %v2580 = vpop.xlane.xlu0 %2579
    %v2581 = vsel %vm360, %v2577, -inf
    %2582 = vmax.xlane.f32.xlu0 %v2581
    %v2583 = vpop.xlane.xlu0 %2582
    %v2584 = vsub.f32 %v2576, %v2580
    %v2585 = vsub.f32 %v2577, %v2583
    %v2586 = vmul.f32 %v2584, 1.442695
    %v2587 = vpow.pop %v2586
    %v2588 = vmul.f32 %v2585, 1.442695
    %v2589 = vpow.pop %v2588
    %v2590 = vsel %vm360, %v2587, 0.0
    %2591 = vadd.xlane.f32.xlu0 %v2590
    %v2592 = vpop.xlane.xlu0 %2591
    %v2593 = vsel %vm360, %v2589, 0.0
    %2594 = vadd.xlane.f32.xlu0 %v2593
    %v2595 = vpop.xlane.xlu0 %2594
    %v2596 = vrcp.pop %v2592
    %v2597 = vrcp.pop %v2595
    %v2598 = vmul.f32 %v2587, %v2596
    %v2599 = vmul.f32 %v2589, %v2597
    %v2600 = vpack.c.bf16 %v2598, %v2598
    %v2601 = vpack.c.bf16 %v2599, %v2599
    %v2602 = vpack.c.bf16 %v2474, %v2474
    %v2603 = vpack.c.bf16 %v2477, %v2477
    %v2605 = vsel %vm360, %v2600, 0
    %v2608 = vsel %vm484, %v2602, 0
    %2610 = vmatprep.subr.bf16.mxu0 0
    %2611 = vmatpush1.bf16.msra.mxu0 %v2608
    %2612 = vmatprep.subr.bf16.mxu0 0
    %2613 = vmatpush1.bf16.msra.mxu0 0
    %2614 = vmatprep.subr.bf16.mxu0 0
    %2615 = vmatpush1.bf16.msra.mxu0 0
    %2616 = vmatprep.subr.bf16.mxu0 0
    %2617 = vmatpush1.bf16.msra.mxu0 0
    %2618 = vmatprep.subr.bf16.mxu0 0
    %2619 = vmatpush1.bf16.msra.mxu0 0
    %2620 = vmatprep.subr.bf16.mxu0 0
    %2621 = vmatpush1.bf16.msra.mxu0 0
    %2622 = vmatprep.subr.bf16.mxu0 0
    %2623 = vmatpush1.bf16.msra.mxu0 0
    %2624 = vmatprep.subr.bf16.mxu0 0
    %2625 = vmatpush1.bf16.msra.mxu0 0
    %2626 = vmatprep.subr.bf16.mxu0 0
    %2627 = vmatpush1.bf16.msra.mxu0 0
    %2628 = vmatprep.subr.bf16.mxu0 0
    %2629 = vmatpush1.bf16.msra.mxu0 0
    %2630 = vmatprep.subr.bf16.mxu0 0
    %2631 = vmatpush1.bf16.msra.mxu0 0
    %2632 = vmatprep.subr.bf16.mxu0 0
    %2633 = vmatpush1.bf16.msra.mxu0 0
    %2634 = vmatprep.subr.bf16.mxu0 0
    %2635 = vmatpush1.bf16.msra.mxu0 0
    %2636 = vmatprep.subr.bf16.mxu0 0
    %2637 = vmatpush1.bf16.msra.mxu0 0
    %2638 = vmatprep.subr.bf16.mxu0 0
    %2639 = vmatpush1.bf16.msra.mxu0 0
    %2640 = vmatprep.subr.bf16.mxu0 0
    %2641 = vmatpush1.bf16.msra.mxu0 0
    %2642 = vmatprep.mubr.bf16.mxu0 0
    %2643 = vmatmul.mubr.bf16.gmra.mrb[0].mxu0 %v2605
    %v2644 = vpop.f32.mrb[0].mxu0
    %v2645 = vadd.f32 0.0, %v2644
    %v2646 = vpop.f32.mrb[0].mxu0
    %v2647 = vpop.f32.mrb[0].mxu0
    %v2648 = vpop.f32.mrb[0].mxu0
    %2649 = vdwg.mxu0
    %v2651 = vsel %vm360, %v2601, 0
    %v2654 = vsel %vm484, %v2603, 0
    %2656 = vmatprep.subr.bf16.mxu0 0
    %2657 = vmatpush1.bf16.msra.mxu0 %v2654
    %2658 = vmatprep.subr.bf16.mxu0 0
    %2659 = vmatpush1.bf16.msra.mxu0 0
    %2660 = vmatprep.subr.bf16.mxu0 0
    %2661 = vmatpush1.bf16.msra.mxu0 0
    %2662 = vmatprep.subr.bf16.mxu0 0
    %2663 = vmatpush1.bf16.msra.mxu0 0
    %2664 = vmatprep.subr.bf16.mxu0 0
    %2665 = vmatpush1.bf16.msra.mxu0 0
    %2666 = vmatprep.subr.bf16.mxu0 0
    %2667 = vmatpush1.bf16.msra.mxu0 0
    %2668 = vmatprep.subr.bf16.mxu0 0
    %2669 = vmatpush1.bf16.msra.mxu0 0
    %2670 = vmatprep.subr.bf16.mxu0 0
    %2671 = vmatpush1.bf16.msra.mxu0 0
    %2672 = vmatprep.subr.bf16.mxu0 0
    %2673 = vmatpush1.bf16.msra.mxu0 0
    %2674 = vmatprep.subr.bf16.mxu0 0
    %2675 = vmatpush1.bf16.msra.mxu0 0
    %2676 = vmatprep.subr.bf16.mxu0 0
    %2677 = vmatpush1.bf16.msra.mxu0 0
    %2678 = vmatprep.subr.bf16.mxu0 0
    %2679 = vmatpush1.bf16.msra.mxu0 0
    %2680 = vmatprep.subr.bf16.mxu0 0
    %2681 = vmatpush1.bf16.msra.mxu0 0
    %2682 = vmatprep.subr.bf16.mxu0 0
    %2683 = vmatpush1.bf16.msra.mxu0 0
    %2684 = vmatprep.subr.bf16.mxu0 0
    %2685 = vmatpush1.bf16.msra.mxu0 0
    %2686 = vmatprep.subr.bf16.mxu0 0
    %2687 = vmatpush1.bf16.msra.mxu0 0
    %2688 = vmatprep.mubr.bf16.mxu0 0
    %2689 = vmatmul.mubr.bf16.gmra.mrb[0].mxu0 %v2651
    %v2690 = vpop.f32.mrb[0].mxu0
    %v2691 = vadd.f32 0.0, %v2690
    %v2692 = vpop.f32.mrb[0].mxu0
    %v2693 = vpop.f32.mrb[0].mxu0
    %v2694 = vpop.f32.mrb[0].mxu0
    %2695 = vdwg.mxu0
    %v2696 = vpack.c.bf16 %v2691, %v2645
    %s2697 = scalar_lea.vmem %s5, 16
    %v2698 = vld [vmem:[%s2697] sm:$0xf]
    %s2699 = scalar_lea.vmem %s3, 208
    %v2700 = vld [vmem:[%s2699] sm:$0xf]
    %v2701 = vld [vmem:[%s2699 + $0x4] sm:$0xf]
    %v2702 = vld [vmem:[%s2699 + $0x8] sm:$0xf]
    %v2703 = vld [vmem:[%s2699 + $0xc] sm:$0xf]
    %s2704 = scalar_lea.vmem %s4, 13
    %v2705 = vld [vmem:[%s2704] sm:$0x1]
    %v2707 = vlaneseq
    %v2708 = vshrl.u32 %v2707, 7
    %v2709 = vsub.s32 0, %v2708
    %v2710 = vrot.slane %v2705, %v2709
    %v2716 = vunpack.c.l.b16 %v2700
    %v2717 = vunpack.c.l.b16 %v2701
    %v2718 = vunpack.c.l.b16 %v2702
    %v2719 = vunpack.c.l.b16 %v2703
    %v2720 = vpack.c.b16 %v2717, %v2716
    %v2721 = vpack.c.b16 %v2719, %v2718
    %2724 = vmatprep.subr.bf16.mxu0 0
    %2725 = vmatpush1.bf16.msra.mxu0 %v2720
    %2726 = vmatprep.subr.bf16.mxu0 0
    %2727 = vmatpush1.bf16.msra.mxu0 %v2721
    %2728 = vmatprep.subr.bf16.mxu0 0
    %2729 = vmatpush1.bf16.msra.mxu0 0
    %2730 = vmatprep.subr.bf16.mxu0 0
    %2731 = vmatpush1.bf16.msra.mxu0 0
    %2732 = vmatprep.subr.bf16.mxu0 0
    %2733 = vmatpush1.bf16.msra.mxu0 0
    %2734 = vmatprep.subr.bf16.mxu0 0
    %2735 = vmatpush1.bf16.msra.mxu0 0
    %2736 = vmatprep.subr.bf16.mxu0 0
    %2737 = vmatpush1.bf16.msra.mxu0 0
    %2738 = vmatprep.subr.bf16.mxu0 0
    %2739 = vmatpush1.bf16.msra.mxu0 0
    %2740 = vmatprep.subr.bf16.mxu0 0
    %2741 = vmatpush1.bf16.msra.mxu0 0
    %2742 = vmatprep.subr.bf16.mxu0 0
    %2743 = vmatpush1.bf16.msra.mxu0 0
    %2744 = vmatprep.subr.bf16.mxu0 0
    %2745 = vmatpush1.bf16.msra.mxu0 0
    %2746 = vmatprep.subr.bf16.mxu0 0
    %2747 = vmatpush1.bf16.msra.mxu0 0
    %2748 = vmatprep.subr.bf16.mxu0 0
    %2749 = vmatpush1.bf16.msra.mxu0 0
    %2750 = vmatprep.subr.bf16.mxu0 0
    %2751 = vmatpush1.bf16.msra.mxu0 0
    %2752 = vmatprep.subr.bf16.mxu0 0
    %2753 = vmatpush1.bf16.msra.mxu0 0
    %2754 = vmatprep.subr.bf16.mxu0 0
    %2755 = vmatpush1.bf16.msra.mxu0 0
    %2756 = vmatprep.mubr.bf16.mxu0 0
    %2757 = vmatmul.mubr.bf16.gmra.mrb[0].mxu0 %v2305
    %v2758 = vpop.f32.mrb[0].mxu0
    %v2759 = vadd.f32 %v2710, %v2758
    %v2760 = vpop.f32.mrb[0].mxu0
    %v2761 = vpop.f32.mrb[0].mxu0
    %v2762 = vadd.f32 %v2710, %v2761
    %v2763 = vpop.f32.mrb[0].mxu0
    %2764 = vdwg.mxu0
    %s2765 = scalar_lea.vmem %s3, 272
    %v2766 = vld [vmem:[%s2765] sm:$0xf]
    %v2767 = vld [vmem:[%s2765 + $0x4] sm:$0xf]
    %v2768 = vld [vmem:[%s2765 + $0x8] sm:$0xf]
    %v2769 = vld [vmem:[%s2765 + $0xc] sm:$0xf]
    %s2770 = scalar_lea.vmem %s4, 17
    %v2771 = vld [vmem:[%s2770] sm:$0x1]
    %v2773 = vlaneseq
    %v2774 = vshrl.u32 %v2773, 7
    %v2775 = vsub.s32 0, %v2774
    %v2776 = vrot.slane %v2771, %v2775
    %v2782 = vunpack.c.l.b16 %v2766
    %v2783 = vunpack.c.l.b16 %v2767
    %v2784 = vunpack.c.l.b16 %v2768
    %v2785 = vunpack.c.l.b16 %v2769
    %v2786 = vpack.c.b16 %v2783, %v2782
    %v2787 = vpack.c.b16 %v2785, %v2784
    %2790 = vmatprep.subr.bf16.mxu0 0
    %2791 = vmatpush1.bf16.msra.mxu0 %v2786
    %2792 = vmatprep.subr.bf16.mxu0 0
    %2793 = vmatpush1.bf16.msra.mxu0 %v2787
    %2794 = vmatprep.subr.bf16.mxu0 0
    %2795 = vmatpush1.bf16.msra.mxu0 0
    %2796 = vmatprep.subr.bf16.mxu0 0
    %2797 = vmatpush1.bf16.msra.mxu0 0
    %2798 = vmatprep.subr.bf16.mxu0 0
    %2799 = vmatpush1.bf16.msra.mxu0 0
    %2800 = vmatprep.subr.bf16.mxu0 0
    %2801 = vmatpush1.bf16.msra.mxu0 0
    %2802 = vmatprep.subr.bf16.mxu0 0
    %2803 = vmatpush1.bf16.msra.mxu0 0
    %2804 = vmatprep.subr.bf16.mxu0 0
    %2805 = vmatpush1.bf16.msra.mxu0 0
    %2806 = vmatprep.subr.bf16.mxu0 0
    %2807 = vmatpush1.bf16.msra.mxu0 0
    %2808 = vmatprep.subr.bf16.mxu0 0
    %2809 = vmatpush1.bf16.msra.mxu0 0
    %2810 = vmatprep.subr.bf16.mxu0 0
    %2811 = vmatpush1.bf16.msra.mxu0 0
    %2812 = vmatprep.subr.bf16.mxu0 0
    %2813 = vmatpush1.bf16.msra.mxu0 0
    %2814 = vmatprep.subr.bf16.mxu0 0
    %2815 = vmatpush1.bf16.msra.mxu0 0
    %2816 = vmatprep.subr.bf16.mxu0 0
    %2817 = vmatpush1.bf16.msra.mxu0 0
    %2818 = vmatprep.subr.bf16.mxu0 0
    %2819 = vmatpush1.bf16.msra.mxu0 0
    %2820 = vmatprep.subr.bf16.mxu0 0
    %2821 = vmatpush1.bf16.msra.mxu0 0
    %2822 = vmatprep.mubr.bf16.mxu0 0
    %2823 = vmatmul.mubr.bf16.gmra.mrb[0].mxu0 %v2305
    %v2824 = vpop.f32.mrb[0].mxu0
    %v2825 = vadd.f32 %v2776, %v2824
    %v2826 = vpop.f32.mrb[0].mxu0
    %v2827 = vpop.f32.mrb[0].mxu0
    %v2828 = vadd.f32 %v2776, %v2827
    %v2829 = vpop.f32.mrb[0].mxu0
    %2830 = vdwg.mxu0
    %s2831 = scalar_lea.vmem %s3, 336
    %v2832 = vld [vmem:[%s2831] sm:$0xf]
    %v2833 = vld [vmem:[%s2831 + $0x4] sm:$0xf]
    %v2834 = vld [vmem:[%s2831 + $0x8] sm:$0xf]
    %v2835 = vld [vmem:[%s2831 + $0xc] sm:$0xf]
    %s2836 = scalar_lea.vmem %s4, 21
    %v2837 = vld [vmem:[%s2836] sm:$0x1]
    %v2839 = vlaneseq
    %v2840 = vshrl.u32 %v2839, 7
    %v2841 = vsub.s32 0, %v2840
    %v2842 = vrot.slane %v2837, %v2841
    %v2848 = vunpack.c.l.b16 %v2832
    %v2849 = vunpack.c.l.b16 %v2833
    %v2850 = vunpack.c.l.b16 %v2834
    %v2851 = vunpack.c.l.b16 %v2835
    %v2852 = vpack.c.b16 %v2849, %v2848
    %v2853 = vpack.c.b16 %v2851, %v2850
    %2856 = vmatprep.subr.bf16.mxu0 0
    %2857 = vmatpush1.bf16.msra.mxu0 %v2852
    %2858 = vmatprep.subr.bf16.mxu0 0
    %2859 = vmatpush1.bf16.msra.mxu0 %v2853
    %2860 = vmatprep.subr.bf16.mxu0 0
    %2861 = vmatpush1.bf16.msra.mxu0 0
    %2862 = vmatprep.subr.bf16.mxu0 0
    %2863 = vmatpush1.bf16.msra.mxu0 0
    %2864 = vmatprep.subr.bf16.mxu0 0
    %2865 = vmatpush1.bf16.msra.mxu0 0
    %2866 = vmatprep.subr.bf16.mxu0 0
    %2867 = vmatpush1.bf16.msra.mxu0 0
    %2868 = vmatprep.subr.bf16.mxu0 0
    %2869 = vmatpush1.bf16.msra.mxu0 0
    %2870 = vmatprep.subr.bf16.mxu0 0
    %2871 = vmatpush1.bf16.msra.mxu0 0
    %2872 = vmatprep.subr.bf16.mxu0 0
    %2873 = vmatpush1.bf16.msra.mxu0 0
    %2874 = vmatprep.subr.bf16.mxu0 0
    %2875 = vmatpush1.bf16.msra.mxu0 0
    %2876 = vmatprep.subr.bf16.mxu0 0
    %2877 = vmatpush1.bf16.msra.mxu0 0
    %2878 = vmatprep.subr.bf16.mxu0 0
    %2879 = vmatpush1.bf16.msra.mxu0 0
    %2880 = vmatprep.subr.bf16.mxu0 0
    %2881 = vmatpush1.bf16.msra.mxu0 0
    %2882 = vmatprep.subr.bf16.mxu0 0
    %2883 = vmatpush1.bf16.msra.mxu0 0
    %2884 = vmatprep.subr.bf16.mxu0 0
    %2885 = vmatpush1.bf16.msra.mxu0 0
    %2886 = vmatprep.subr.bf16.mxu0 0
    %2887 = vmatpush1.bf16.msra.mxu0 0
    %2888 = vmatprep.mubr.bf16.mxu0 0
    %2889 = vmatmul.mubr.bf16.gmra.mrb[0].mxu0 %v2305
    %v2890 = vpop.f32.mrb[0].mxu0
    %v2891 = vadd.f32 %v2842, %v2890
    %v2892 = vpop.f32.mrb[0].mxu0
    %v2893 = vpop.f32.mrb[0].mxu0
    %v2894 = vadd.f32 %v2842, %v2893
    %v2895 = vpop.f32.mrb[0].mxu0
    %2896 = vdwg.mxu0
    %v2897 = vpack.c.bf16 %v2759, %v2759
    %v2898 = vpack.c.bf16 %v2762, %v2762
    %v2899 = vpack.c.bf16 %v2825, %v2825
    %v2900 = vpack.c.bf16 %v2828, %v2828
    %v2902 = vsel %vm360, %v2897, 0
    %v2905 = vsel %vm360, %v2899, 0
    %2907 = vmatprep.subr.bf16.mxu0 0
    %2908 = vmatpush1.bf16.xpose.msra.mxu0 %v2905
    %2909 = vmatprep.subr.bf16.mxu0 0
    %2910 = vmatpush1.bf16.xpose.msra.mxu0 0
    %2911 = vmatprep.subr.bf16.mxu0 0
    %2912 = vmatpush1.bf16.xpose.msra.mxu0 0
    %2913 = vmatprep.subr.bf16.mxu0 0
    %2914 = vmatpush1.bf16.xpose.msra.mxu0 0
    %2915 = vmatprep.subr.bf16.mxu0 0
    %2916 = vmatpush1.bf16.xpose.msra.mxu0 0
    %2917 = vmatprep.subr.bf16.mxu0 0
    %2918 = vmatpush1.bf16.xpose.msra.mxu0 0
    %2919 = vmatprep.subr.bf16.mxu0 0
    %2920 = vmatpush1.bf16.xpose.msra.mxu0 0
    %2921 = vmatprep.subr.bf16.mxu0 0
    %2922 = vmatpush1.bf16.xpose.msra.mxu0 0
    %2923 = vmatprep.subr.bf16.mxu0 0
    %2924 = vmatpush1.bf16.xpose.msra.mxu0 0
    %2925 = vmatprep.subr.bf16.mxu0 0
    %2926 = vmatpush1.bf16.xpose.msra.mxu0 0
    %2927 = vmatprep.subr.bf16.mxu0 0
    %2928 = vmatpush1.bf16.xpose.msra.mxu0 0
    %2929 = vmatprep.subr.bf16.mxu0 0
    %2930 = vmatpush1.bf16.xpose.msra.mxu0 0
    %2931 = vmatprep.subr.bf16.mxu0 0
    %2932 = vmatpush1.bf16.xpose.msra.mxu0 0
    %2933 = vmatprep.subr.bf16.mxu0 0
    %2934 = vmatpush1.bf16.xpose.msra.mxu0 0
    %2935 = vmatprep.subr.bf16.mxu0 0
    %2936 = vmatpush1.bf16.xpose.msra.mxu0 0
    %2937 = vmatprep.subr.bf16.mxu0 0
    %2938 = vmatpush1.bf16.xpose.msra.mxu0 0
    %2939 = vmatprep.mubr.bf16.mxu0 0
    %2940 = vmatmul.mubr.bf16.gmra.mrb[0].mxu0 %v2902
    %v2941 = vpop.f32.mrb[0].mxu0
    %v2942 = vadd.f32 0.0, %v2941
    %v2943 = vpop.f32.mrb[0].mxu0
    %v2944 = vpop.f32.mrb[0].mxu0
    %v2945 = vpop.f32.mrb[0].mxu0
    %2946 = vdwg.mxu0
    %v2948 = vsel %vm360, %v2898, 0
    %v2951 = vsel %vm360, %v2900, 0
    %2953 = vmatprep.subr.bf16.mxu0 0
    %2954 = vmatpush1.bf16.xpose.msra.mxu0 %v2951
    %2955 = vmatprep.subr.bf16.mxu0 0
    %2956 = vmatpush1.bf16.xpose.msra.mxu0 0
    %2957 = vmatprep.subr.bf16.mxu0 0
    %2958 = vmatpush1.bf16.xpose.msra.mxu0 0
    %2959 = vmatprep.subr.bf16.mxu0 0
    %2960 = vmatpush1.bf16.xpose.msra.mxu0 0
    %2961 = vmatprep.subr.bf16.mxu0 0
    %2962 = vmatpush1.bf16.xpose.msra.mxu0 0
    %2963 = vmatprep.subr.bf16.mxu0 0
    %2964 = vmatpush1.bf16.xpose.msra.mxu0 0
    %2965 = vmatprep.subr.bf16.mxu0 0
    %2966 = vmatpush1.bf16.xpose.msra.mxu0 0
    %2967 = vmatprep.subr.bf16.mxu0 0
    %2968 = vmatpush1.bf16.xpose.msra.mxu0 0
    %2969 = vmatprep.subr.bf16.mxu0 0
    %2970 = vmatpush1.bf16.xpose.msra.mxu0 0
    %2971 = vmatprep.subr.bf16.mxu0 0
    %2972 = vmatpush1.bf16.xpose.msra.mxu0 0
    %2973 = vmatprep.subr.bf16.mxu0 0
    %2974 = vmatpush1.bf16.xpose.msra.mxu0 0
    %2975 = vmatprep.subr.bf16.mxu0 0
    %2976 = vmatpush1.bf16.xpose.msra.mxu0 0
    %2977 = vmatprep.subr.bf16.mxu0 0
    %2978 = vmatpush1.bf16.xpose.msra.mxu0 0
    %2979 = vmatprep.subr.bf16.mxu0 0
    %2980 = vmatpush1.bf16.xpose.msra.mxu0 0
    %2981 = vmatprep.subr.bf16.mxu0 0
    %2982 = vmatpush1.bf16.xpose.msra.mxu0 0
    %2983 = vmatprep.subr.bf16.mxu0 0
    %2984 = vmatpush1.bf16.xpose.msra.mxu0 0
    %2985 = vmatprep.mubr.bf16.mxu0 0
    %2986 = vmatmul.mubr.bf16.gmra.mrb[0].mxu0 %v2948
    %v2987 = vpop.f32.mrb[0].mxu0
    %v2988 = vadd.f32 0.0, %v2987
    %v2989 = vpop.f32.mrb[0].mxu0
    %v2990 = vpop.f32.mrb[0].mxu0
    %v2991 = vpop.f32.mrb[0].mxu0
    %2992 = vdwg.mxu0
    %v2993 = vmul.f32 %v2942, 0.35355338
    %v2994 = vmul.f32 %v2988, 0.35355338
    %v2995 = vsel %vm360, %v2993, -inf
    %2996 = vmax.xlane.f32.xlu0 %v2995
    %v2997 = vpop.xlane.xlu0 %2996
    %v2998 = vsel %vm360, %v2994, -inf
    %2999 = vmax.xlane.f32.xlu0 %v2998
    %v3000 = vpop.xlane.xlu0 %2999
    %v3001 = vsub.f32 %v2993, %v2997
    %v3002 = vsub.f32 %v2994, %v3000
    %v3003 = vmul.f32 %v3001, 1.442695
    %v3004 = vpow.pop %v3003
    %v3005 = vmul.f32 %v3002, 1.442695
    %v3006 = vpow.pop %v3005
    %v3007 = vsel %vm360, %v3004, 0.0
    %3008 = vadd.xlane.f32.xlu0 %v3007
    %v3009 = vpop.xlane.xlu0 %3008
    %v3010 = vsel %vm360, %v3006, 0.0
    %3011 = vadd.xlane.f32.xlu0 %v3010
    %v3012 = vpop.xlane.xlu0 %3011
    %v3013 = vrcp.pop %v3009
    %v3014 = vrcp.pop %v3012
    %v3015 = vmul.f32 %v3004, %v3013
    %v3016 = vmul.f32 %v3006, %v3014
    %v3017 = vpack.c.bf16 %v3015, %v3015
    %v3018 = vpack.c.bf16 %v3016, %v3016
    %v3019 = vpack.c.bf16 %v2891, %v2891
    %v3020 = vpack.c.bf16 %v2894, %v2894
    %v3022 = vsel %vm360, %v3017, 0
    %v3025 = vsel %vm484, %v3019, 0
    %3027 = vmatprep.subr.bf16.mxu0 0
    %3028 = vmatpush1.bf16.msra.mxu0 %v3025
    %3029 = vmatprep.subr.bf16.mxu0 0
    %3030 = vmatpush1.bf16.msra.mxu0 0
    %3031 = vmatprep.subr.bf16.mxu0 0
    %3032 = vmatpush1.bf16.msra.mxu0 0
    %3033 = vmatprep.subr.bf16.mxu0 0
    %3034 = vmatpush1.bf16.msra.mxu0 0
    %3035 = vmatprep.subr.bf16.mxu0 0
    %3036 = vmatpush1.bf16.msra.mxu0 0
    %3037 = vmatprep.subr.bf16.mxu0 0
    %3038 = vmatpush1.bf16.msra.mxu0 0
    %3039 = vmatprep.subr.bf16.mxu0 0
    %3040 = vmatpush1.bf16.msra.mxu0 0
    %3041 = vmatprep.subr.bf16.mxu0 0
    %3042 = vmatpush1.bf16.msra.mxu0 0
    %3043 = vmatprep.subr.bf16.mxu0 0
    %3044 = vmatpush1.bf16.msra.mxu0 0
    %3045 = vmatprep.subr.bf16.mxu0 0
    %3046 = vmatpush1.bf16.msra.mxu0 0
    %3047 = vmatprep.subr.bf16.mxu0 0
    %3048 = vmatpush1.bf16.msra.mxu0 0
    %3049 = vmatprep.subr.bf16.mxu0 0
    %3050 = vmatpush1.bf16.msra.mxu0 0
    %3051 = vmatprep.subr.bf16.mxu0 0
    %3052 = vmatpush1.bf16.msra.mxu0 0
    %3053 = vmatprep.subr.bf16.mxu0 0
    %3054 = vmatpush1.bf16.msra.mxu0 0
    %3055 = vmatprep.subr.bf16.mxu0 0
    %3056 = vmatpush1.bf16.msra.mxu0 0
    %3057 = vmatprep.subr.bf16.mxu0 0
    %3058 = vmatpush1.bf16.msra.mxu0 0
    %3059 = vmatprep.mubr.bf16.mxu0 0
    %3060 = vmatmul.mubr.bf16.gmra.mrb[0].mxu0 %v3022
    %v3061 = vpop.f32.mrb[0].mxu0
    %v3062 = vadd.f32 0.0, %v3061
    %v3063 = vpop.f32.mrb[0].mxu0
    %v3064 = vpop.f32.mrb[0].mxu0
    %v3065 = vpop.f32.mrb[0].mxu0
    %3066 = vdwg.mxu0
    %v3068 = vsel %vm360, %v3018, 0
    %v3071 = vsel %vm484, %v3020, 0
    %3073 = vmatprep.subr.bf16.mxu0 0
    %3074 = vmatpush1.bf16.msra.mxu0 %v3071
    %3075 = vmatprep.subr.bf16.mxu0 0
    %3076 = vmatpush1.bf16.msra.mxu0 0
    %3077 = vmatprep.subr.bf16.mxu0 0
    %3078 = vmatpush1.bf16.msra.mxu0 0
    %3079 = vmatprep.subr.bf16.mxu0 0
    %3080 = vmatpush1.bf16.msra.mxu0 0
    %3081 = vmatprep.subr.bf16.mxu0 0
    %3082 = vmatpush1.bf16.msra.mxu0 0
    %3083 = vmatprep.subr.bf16.mxu0 0
    %3084 = vmatpush1.bf16.msra.mxu0 0
    %3085 = vmatprep.subr.bf16.mxu0 0
    %3086 = vmatpush1.bf16.msra.mxu0 0
    %3087 = vmatprep.subr.bf16.mxu0 0
    %3088 = vmatpush1.bf16.msra.mxu0 0
    %3089 = vmatprep.subr.bf16.mxu0 0
    %3090 = vmatpush1.bf16.msra.mxu0 0
    %3091 = vmatprep.subr.bf16.mxu0 0
    %3092 = vmatpush1.bf16.msra.mxu0 0
    %3093 = vmatprep.subr.bf16.mxu0 0
    %3094 = vmatpush1.bf16.msra.mxu0 0
    %3095 = vmatprep.subr.bf16.mxu0 0
    %3096 = vmatpush1.bf16.msra.mxu0 0
    %3097 = vmatprep.subr.bf16.mxu0 0
    %3098 = vmatpush1.bf16.msra.mxu0 0
    %3099 = vmatprep.subr.bf16.mxu0 0
    %3100 = vmatpush1.bf16.msra.mxu0 0
    %3101 = vmatprep.subr.bf16.mxu0 0
    %3102 = vmatpush1.bf16.msra.mxu0 0
    %3103 = vmatprep.subr.bf16.mxu0 0
    %3104 = vmatpush1.bf16.msra.mxu0 0
    %3105 = vmatprep.mubr.bf16.mxu0 0
    %3106 = vmatmul.mubr.bf16.gmra.mrb[0].mxu0 %v3068
    %v3107 = vpop.f32.mrb[0].mxu0
    %v3108 = vadd.f32 0.0, %v3107
    %v3109 = vpop.f32.mrb[0].mxu0
    %v3110 = vpop.f32.mrb[0].mxu0
    %v3111 = vpop.f32.mrb[0].mxu0
    %3112 = vdwg.mxu0
    %v3113 = vpack.c.bf16 %v3108, %v3062
    %s3114 = scalar_lea.vmem %s5, 20
    %v3115 = vld [vmem:[%s3114] sm:$0xf]
    %v3117 = vsel %vm360, %v3113, 0
    %v3120 = vsel %vm484, %v3115, 0
    %3122 = vmatprep.subr.bf16.mxu0 0
    %3123 = vmatpush1.bf16.msra.mxu0 %v3120
    %3124 = vmatprep.subr.bf16.mxu0 0
    %3125 = vmatpush1.bf16.msra.mxu0 0
    %3126 = vmatprep.subr.bf16.mxu0 0
    %3127 = vmatpush1.bf16.msra.mxu0 0
    %3128 = vmatprep.subr.bf16.mxu0 0
    %3129 = vmatpush1.bf16.msra.mxu0 0
    %3130 = vmatprep.subr.bf16.mxu0 0
    %3131 = vmatpush1.bf16.msra.mxu0 0
    %3132 = vmatprep.subr.bf16.mxu0 0
    %3133 = vmatpush1.bf16.msra.mxu0 0
    %3134 = vmatprep.subr.bf16.mxu0 0
    %3135 = vmatpush1.bf16.msra.mxu0 0
    %3136 = vmatprep.subr.bf16.mxu0 0
    %3137 = vmatpush1.bf16.msra.mxu0 0
    %3138 = vmatprep.subr.bf16.mxu0 0
    %3139 = vmatpush1.bf16.msra.mxu0 0
    %3140 = vmatprep.subr.bf16.mxu0 0
    %3141 = vmatpush1.bf16.msra.mxu0 0
    %3142 = vmatprep.subr.bf16.mxu0 0
    %3143 = vmatpush1.bf16.msra.mxu0 0
    %3144 = vmatprep.subr.bf16.mxu0 0
    %3145 = vmatpush1.bf16.msra.mxu0 0
    %3146 = vmatprep.subr.bf16.mxu0 0
    %3147 = vmatpush1.bf16.msra.mxu0 0
    %3148 = vmatprep.subr.bf16.mxu0 0
    %3149 = vmatpush1.bf16.msra.mxu0 0
    %3150 = vmatprep.subr.bf16.mxu0 0
    %3151 = vmatpush1.bf16.msra.mxu0 0
    %3152 = vmatprep.subr.bf16.mxu0 0
    %3153 = vmatpush1.bf16.msra.mxu0 0
    %3154 = vmatprep.mubr.bf16.mxu0 0
    %3155 = vmatmul.mubr.bf16.gmra.mrb[0].mxu0 %v3117
    %v3156 = vpop.f32.mrb[0].mxu0
    %v3157 = vadd.f32 0.0, %v3156
    %v3158 = vpop.f32.mrb[0].mxu0
    %v3159 = vpop.f32.mrb[0].mxu0
    %v3160 = vadd.f32 0.0, %v3159
    %v3161 = vpop.f32.mrb[0].mxu0
    %3162 = vdwg.mxu0
    %v3164 = vsel %vm360, %v2696, 0
    %v3167 = vsel %vm484, %v2698, 0
    %3169 = vmatprep.subr.bf16.mxu0 0
    %3170 = vmatpush1.bf16.msra.mxu0 %v3167
    %3171 = vmatprep.subr.bf16.mxu0 0
    %3172 = vmatpush1.bf16.msra.mxu0 0
    %3173 = vmatprep.subr.bf16.mxu0 0
    %3174 = vmatpush1.bf16.msra.mxu0 0
    %3175 = vmatprep.subr.bf16.mxu0 0
    %3176 = vmatpush1.bf16.msra.mxu0 0
    %3177 = vmatprep.subr.bf16.mxu0 0
    %3178 = vmatpush1.bf16.msra.mxu0 0
    %3179 = vmatprep.subr.bf16.mxu0 0
    %3180 = vmatpush1.bf16.msra.mxu0 0
    %3181 = vmatprep.subr.bf16.mxu0 0
    %3182 = vmatpush1.bf16.msra.mxu0 0
    %3183 = vmatprep.subr.bf16.mxu0 0
    %3184 = vmatpush1.bf16.msra.mxu0 0
    %3185 = vmatprep.subr.bf16.mxu0 0
    %3186 = vmatpush1.bf16.msra.mxu0 0
    %3187 = vmatprep.subr.bf16.mxu0 0
    %3188 = vmatpush1.bf16.msra.mxu0 0
    %3189 = vmatprep.subr.bf16.mxu0 0
    %3190 = vmatpush1.bf16.msra.mxu0 0
    %3191 = vmatprep.subr.bf16.mxu0 0
    %3192 = vmatpush1.bf16.msra.mxu0 0
    %3193 = vmatprep.subr.bf16.mxu0 0
    %3194 = vmatpush1.bf16.msra.mxu0 0
    %3195 = vmatprep.subr.bf16.mxu0 0
    %3196 = vmatpush1.bf16.msra.mxu0 0
    %3197 = vmatprep.subr.bf16.mxu0 0
    %3198 = vmatpush1.bf16.msra.mxu0 0
    %3199 = vmatprep.subr.bf16.mxu0 0
    %3200 = vmatpush1.bf16.msra.mxu0 0
    %3201 = vmatprep.mubr.bf16.mxu0 0
    %3202 = vmatmul.mubr.bf16.gmra.mrb[0].mxu0 %v3164
    %v3203 = vpop.f32.mrb[0].mxu0
    %v3204 = vadd.f32 %v3157, %v3203
    %v3205 = vpop.f32.mrb[0].mxu0
    %v3206 = vpop.f32.mrb[0].mxu0
    %v3207 = vadd.f32 %v3160, %v3206
    %v3208 = vpop.f32.mrb[0].mxu0
    %3209 = vdwg.mxu0
    %s3210 = scalar_lea.vmem %s3, 224
    %v3211 = vld [vmem:[%s3210] sm:$0xf]
    %v3212 = vld [vmem:[%s3210 + $0x4] sm:$0xf]
    %v3213 = vld [vmem:[%s3210 + $0x8] sm:$0xf]
    %v3214 = vld [vmem:[%s3210 + $0xc] sm:$0xf]
    %s3215 = scalar_lea.vmem %s4, 14
    %v3216 = vld [vmem:[%s3215] sm:$0x1]
    %v3218 = vlaneseq
    %v3219 = vshrl.u32 %v3218, 7
    %v3220 = vsub.s32 0, %v3219
    %v3221 = vrot.slane %v3216, %v3220
    %v3227 = vunpack.c.l.b16 %v3211
    %v3228 = vunpack.c.l.b16 %v3212
    %v3229 = vunpack.c.l.b16 %v3213
    %v3230 = vunpack.c.l.b16 %v3214
    %v3231 = vpack.c.b16 %v3228, %v3227
    %v3232 = vpack.c.b16 %v3230, %v3229
    %3235 = vmatprep.subr.bf16.mxu0 0
    %3236 = vmatpush1.bf16.msra.mxu0 %v3231
    %3237 = vmatprep.subr.bf16.mxu0 0
    %3238 = vmatpush1.bf16.msra.mxu0 %v3232
    %3239 = vmatprep.subr.bf16.mxu0 0
    %3240 = vmatpush1.bf16.msra.mxu0 0
    %3241 = vmatprep.subr.bf16.mxu0 0
    %3242 = vmatpush1.bf16.msra.mxu0 0
    %3243 = vmatprep.subr.bf16.mxu0 0
    %3244 = vmatpush1.bf16.msra.mxu0 0
    %3245 = vmatprep.subr.bf16.mxu0 0
    %3246 = vmatpush1.bf16.msra.mxu0 0
    %3247 = vmatprep.subr.bf16.mxu0 0
    %3248 = vmatpush1.bf16.msra.mxu0 0
    %3249 = vmatprep.subr.bf16.mxu0 0
    %3250 = vmatpush1.bf16.msra.mxu0 0
    %3251 = vmatprep.subr.bf16.mxu0 0
    %3252 = vmatpush1.bf16.msra.mxu0 0
    %3253 = vmatprep.subr.bf16.mxu0 0
    %3254 = vmatpush1.bf16.msra.mxu0 0
    %3255 = vmatprep.subr.bf16.mxu0 0
    %3256 = vmatpush1.bf16.msra.mxu0 0
    %3257 = vmatprep.subr.bf16.mxu0 0
    %3258 = vmatpush1.bf16.msra.mxu0 0
    %3259 = vmatprep.subr.bf16.mxu0 0
    %3260 = vmatpush1.bf16.msra.mxu0 0
    %3261 = vmatprep.subr.bf16.mxu0 0
    %3262 = vmatpush1.bf16.msra.mxu0 0
    %3263 = vmatprep.subr.bf16.mxu0 0
    %3264 = vmatpush1.bf16.msra.mxu0 0
    %3265 = vmatprep.subr.bf16.mxu0 0
    %3266 = vmatpush1.bf16.msra.mxu0 0
    %3267 = vmatprep.mubr.bf16.mxu0 0
    %3268 = vmatmul.mubr.bf16.gmra.mrb[0].mxu0 %v2305
    %v3269 = vpop.f32.mrb[0].mxu0
    %v3270 = vadd.f32 %v3221, %v3269
    %v3271 = vpop.f32.mrb[0].mxu0
    %v3272 = vpop.f32.mrb[0].mxu0
    %v3273 = vadd.f32 %v3221, %v3272
    %v3274 = vpop.f32.mrb[0].mxu0
    %3275 = vdwg.mxu0
    %s3276 = scalar_lea.vmem %s3, 288
    %v3277 = vld [vmem:[%s3276] sm:$0xf]
    %v3278 = vld [vmem:[%s3276 + $0x4] sm:$0xf]
    %v3279 = vld [vmem:[%s3276 + $0x8] sm:$0xf]
    %v3280 = vld [vmem:[%s3276 + $0xc] sm:$0xf]
    %s3281 = scalar_lea.vmem %s4, 18
    %v3282 = vld [vmem:[%s3281] sm:$0x1]
    %v3284 = vlaneseq
    %v3285 = vshrl.u32 %v3284, 7
    %v3286 = vsub.s32 0, %v3285
    %v3287 = vrot.slane %v3282, %v3286
    %v3293 = vunpack.c.l.b16 %v3277
    %v3294 = vunpack.c.l.b16 %v3278
    %v3295 = vunpack.c.l.b16 %v3279
    %v3296 = vunpack.c.l.b16 %v3280
    %v3297 = vpack.c.b16 %v3294, %v3293
    %v3298 = vpack.c.b16 %v3296, %v3295
    %3301 = vmatprep.subr.bf16.mxu0 0
    %3302 = vmatpush1.bf16.msra.mxu0 %v3297
    %3303 = vmatprep.subr.bf16.mxu0 0
    %3304 = vmatpush1.bf16.msra.mxu0 %v3298
    %3305 = vmatprep.subr.bf16.mxu0 0
    %3306 = vmatpush1.bf16.msra.mxu0 0
    %3307 = vmatprep.subr.bf16.mxu0 0
    %3308 = vmatpush1.bf16.msra.mxu0 0
    %3309 = vmatprep.subr.bf16.mxu0 0
    %3310 = vmatpush1.bf16.msra.mxu0 0
    %3311 = vmatprep.subr.bf16.mxu0 0
    %3312 = vmatpush1.bf16.msra.mxu0 0
    %3313 = vmatprep.subr.bf16.mxu0 0
    %3314 = vmatpush1.bf16.msra.mxu0 0
    %3315 = vmatprep.subr.bf16.mxu0 0
    %3316 = vmatpush1.bf16.msra.mxu0 0
    %3317 = vmatprep.subr.bf16.mxu0 0
    %3318 = vmatpush1.bf16.msra.mxu0 0
    %3319 = vmatprep.subr.bf16.mxu0 0
    %3320 = vmatpush1.bf16.msra.mxu0 0
    %3321 = vmatprep.subr.bf16.mxu0 0
    %3322 = vmatpush1.bf16.msra.mxu0 0
    %3323 = vmatprep.subr.bf16.mxu0 0
    %3324 = vmatpush1.bf16.msra.mxu0 0
    %3325 = vmatprep.subr.bf16.mxu0 0
    %3326 = vmatpush1.bf16.msra.mxu0 0
    %3327 = vmatprep.subr.bf16.mxu0 0
    %3328 = vmatpush1.bf16.msra.mxu0 0
    %3329 = vmatprep.subr.bf16.mxu0 0
    %3330 = vmatpush1.bf16.msra.mxu0 0
    %3331 = vmatprep.subr.bf16.mxu0 0
    %3332 = vmatpush1.bf16.msra.mxu0 0
    %3333 = vmatprep.mubr.bf16.mxu0 0
    %3334 = vmatmul.mubr.bf16.gmra.mrb[0].mxu0 %v2305
    %v3335 = vpop.f32.mrb[0].mxu0
    %v3336 = vadd.f32 %v3287, %v3335
    %v3337 = vpop.f32.mrb[0].mxu0
    %v3338 = vpop.f32.mrb[0].mxu0
    %v3339 = vadd.f32 %v3287, %v3338
    %v3340 = vpop.f32.mrb[0].mxu0
    %3341 = vdwg.mxu0
    %s3342 = scalar_lea.vmem %s3, 352
    %v3343 = vld [vmem:[%s3342] sm:$0xf]
    %v3344 = vld [vmem:[%s3342 + $0x4] sm:$0xf]
    %v3345 = vld [vmem:[%s3342 + $0x8] sm:$0xf]
    %v3346 = vld [vmem:[%s3342 + $0xc] sm:$0xf]
    %s3347 = scalar_lea.vmem %s4, 22
    %v3348 = vld [vmem:[%s3347] sm:$0x1]
    %v3350 = vlaneseq
    %v3351 = vshrl.u32 %v3350, 7
    %v3352 = vsub.s32 0, %v3351
    %v3353 = vrot.slane %v3348, %v3352
    %v3359 = vunpack.c.l.b16 %v3343
    %v3360 = vunpack.c.l.b16 %v3344
    %v3361 = vunpack.c.l.b16 %v3345
    %v3362 = vunpack.c.l.b16 %v3346
    %v3363 = vpack.c.b16 %v3360, %v3359
    %v3364 = vpack.c.b16 %v3362, %v3361
    %3367 = vmatprep.subr.bf16.mxu0 0
    %3368 = vmatpush1.bf16.msra.mxu0 %v3363
    %3369 = vmatprep.subr.bf16.mxu0 0
    %3370 = vmatpush1.bf16.msra.mxu0 %v3364
    %3371 = vmatprep.subr.bf16.mxu0 0
    %3372 = vmatpush1.bf16.msra.mxu0 0
    %3373 = vmatprep.subr.bf16.mxu0 0
    %3374 = vmatpush1.bf16.msra.mxu0 0
    %3375 = vmatprep.subr.bf16.mxu0 0
    %3376 = vmatpush1.bf16.msra.mxu0 0
    %3377 = vmatprep.subr.bf16.mxu0 0
    %3378 = vmatpush1.bf16.msra.mxu0 0
    %3379 = vmatprep.subr.bf16.mxu0 0
    %3380 = vmatpush1.bf16.msra.mxu0 0
    %3381 = vmatprep.subr.bf16.mxu0 0
    %3382 = vmatpush1.bf16.msra.mxu0 0
    %3383 = vmatprep.subr.bf16.mxu0 0
    %3384 = vmatpush1.bf16.msra.mxu0 0
    %3385 = vmatprep.subr.bf16.mxu0 0
    %3386 = vmatpush1.bf16.msra.mxu0 0
    %3387 = vmatprep.subr.bf16.mxu0 0
    %3388 = vmatpush1.bf16.msra.mxu0 0
    %3389 = vmatprep.subr.bf16.mxu0 0
    %3390 = vmatpush1.bf16.msra.mxu0 0
    %3391 = vmatprep.subr.bf16.mxu0 0
    %3392 = vmatpush1.bf16.msra.mxu0 0
    %3393 = vmatprep.subr.bf16.mxu0 0
    %3394 = vmatpush1.bf16.msra.mxu0 0
    %3395 = vmatprep.subr.bf16.mxu0 0
    %3396 = vmatpush1.bf16.msra.mxu0 0
    %3397 = vmatprep.subr.bf16.mxu0 0
    %3398 = vmatpush1.bf16.msra.mxu0 0
    %3399 = vmatprep.mubr.bf16.mxu0 0
    %3400 = vmatmul.mubr.bf16.gmra.mrb[0].mxu0 %v2305
    %v3401 = vpop.f32.mrb[0].mxu0
    %v3402 = vadd.f32 %v3353, %v3401
    %v3403 = vpop.f32.mrb[0].mxu0
    %v3404 = vpop.f32.mrb[0].mxu0
    %v3405 = vadd.f32 %v3353, %v3404
    %v3406 = vpop.f32.mrb[0].mxu0
    %3407 = vdwg.mxu0
    %v3408 = vpack.c.bf16 %v3270, %v3270
    %v3409 = vpack.c.bf16 %v3273, %v3273
    %v3410 = vpack.c.bf16 %v3336, %v3336
    %v3411 = vpack.c.bf16 %v3339, %v3339
    %v3413 = vsel %vm360, %v3408, 0
    %v3416 = vsel %vm360, %v3410, 0
    %3418 = vmatprep.subr.bf16.mxu0 0
    %3419 = vmatpush1.bf16.xpose.msra.mxu0 %v3416
    %3420 = vmatprep.subr.bf16.mxu0 0
    %3421 = vmatpush1.bf16.xpose.msra.mxu0 0
    %3422 = vmatprep.subr.bf16.mxu0 0
    %3423 = vmatpush1.bf16.xpose.msra.mxu0 0
    %3424 = vmatprep.subr.bf16.mxu0 0
    %3425 = vmatpush1.bf16.xpose.msra.mxu0 0
    %3426 = vmatprep.subr.bf16.mxu0 0
    %3427 = vmatpush1.bf16.xpose.msra.mxu0 0
    %3428 = vmatprep.subr.bf16.mxu0 0
    %3429 = vmatpush1.bf16.xpose.msra.mxu0 0
    %3430 = vmatprep.subr.bf16.mxu0 0
    %3431 = vmatpush1.bf16.xpose.msra.mxu0 0
    %3432 = vmatprep.subr.bf16.mxu0 0
    %3433 = vmatpush1.bf16.xpose.msra.mxu0 0
    %3434 = vmatprep.subr.bf16.mxu0 0
    %3435 = vmatpush1.bf16.xpose.msra.mxu0 0
    %3436 = vmatprep.subr.bf16.mxu0 0
    %3437 = vmatpush1.bf16.xpose.msra.mxu0 0
    %3438 = vmatprep.subr.bf16.mxu0 0
    %3439 = vmatpush1.bf16.xpose.msra.mxu0 0
    %3440 = vmatprep.subr.bf16.mxu0 0
    %3441 = vmatpush1.bf16.xpose.msra.mxu0 0
    %3442 = vmatprep.subr.bf16.mxu0 0
    %3443 = vmatpush1.bf16.xpose.msra.mxu0 0
    %3444 = vmatprep.subr.bf16.mxu0 0
    %3445 = vmatpush1.bf16.xpose.msra.mxu0 0
    %3446 = vmatprep.subr.bf16.mxu0 0
    %3447 = vmatpush1.bf16.xpose.msra.mxu0 0
    %3448 = vmatprep.subr.bf16.mxu0 0
    %3449 = vmatpush1.bf16.xpose.msra.mxu0 0
    %3450 = vmatprep.mubr.bf16.mxu0 0
    %3451 = vmatmul.mubr.bf16.gmra.mrb[0].mxu0 %v3413
    %v3452 = vpop.f32.mrb[0].mxu0
    %v3453 = vadd.f32 0.0, %v3452
    %v3454 = vpop.f32.mrb[0].mxu0
    %v3455 = vpop.f32.mrb[0].mxu0
    %v3456 = vpop.f32.mrb[0].mxu0
    %3457 = vdwg.mxu0
    %v3459 = vsel %vm360, %v3409, 0
    %v3462 = vsel %vm360, %v3411, 0
    %3464 = vmatprep.subr.bf16.mxu0 0
    %3465 = vmatpush1.bf16.xpose.msra.mxu0 %v3462
    %3466 = vmatprep.subr.bf16.mxu0 0
    %3467 = vmatpush1.bf16.xpose.msra.mxu0 0
    %3468 = vmatprep.subr.bf16.mxu0 0
    %3469 = vmatpush1.bf16.xpose.msra.mxu0 0
    %3470 = vmatprep.subr.bf16.mxu0 0
    %3471 = vmatpush1.bf16.xpose.msra.mxu0 0
    %3472 = vmatprep.subr.bf16.mxu0 0
    %3473 = vmatpush1.bf16.xpose.msra.mxu0 0
    %3474 = vmatprep.subr.bf16.mxu0 0
    %3475 = vmatpush1.bf16.xpose.msra.mxu0 0
    %3476 = vmatprep.subr.bf16.mxu0 0
    %3477 = vmatpush1.bf16.xpose.msra.mxu0 0
    %3478 = vmatprep.subr.bf16.mxu0 0
    %3479 = vmatpush1.bf16.xpose.msra.mxu0 0
    %3480 = vmatprep.subr.bf16.mxu0 0
    %3481 = vmatpush1.bf16.xpose.msra.mxu0 0
    %3482 = vmatprep.subr.bf16.mxu0 0
    %3483 = vmatpush1.bf16.xpose.msra.mxu0 0
    %3484 = vmatprep.subr.bf16.mxu0 0
    %3485 = vmatpush1.bf16.xpose.msra.mxu0 0
    %3486 = vmatprep.subr.bf16.mxu0 0
    %3487 = vmatpush1.bf16.xpose.msra.mxu0 0
    %3488 = vmatprep.subr.bf16.mxu0 0
    %3489 = vmatpush1.bf16.xpose.msra.mxu0 0
    %3490 = vmatprep.subr.bf16.mxu0 0
    %3491 = vmatpush1.bf16.xpose.msra.mxu0 0
    %3492 = vmatprep.subr.bf16.mxu0 0
    %3493 = vmatpush1.bf16.xpose.msra.mxu0 0
    %3494 = vmatprep.subr.bf16.mxu0 0
    %3495 = vmatpush1.bf16.xpose.msra.mxu0 0
    %3496 = vmatprep.mubr.bf16.mxu0 0
    %3497 = vmatmul.mubr.bf16.gmra.mrb[0].mxu0 %v3459
    %v3498 = vpop.f32.mrb[0].mxu0
    %v3499 = vadd.f32 0.0, %v3498
    %v3500 = vpop.f32.mrb[0].mxu0
    %v3501 = vpop.f32.mrb[0].mxu0
    %v3502 = vpop.f32.mrb[0].mxu0
    %3503 = vdwg.mxu0
    %v3504 = vmul.f32 %v3453, 0.35355338
    %v3505 = vmul.f32 %v3499, 0.35355338
    %v3506 = vsel %vm360, %v3504, -inf
    %3507 = vmax.xlane.f32.xlu0 %v3506
    %v3508 = vpop.xlane.xlu0 %3507
    %v3509 = vsel %vm360, %v3505, -inf
    %3510 = vmax.xlane.f32.xlu0 %v3509
    %v3511 = vpop.xlane.xlu0 %3510
    %v3512 = vsub.f32 %v3504, %v3508
    %v3513 = vsub.f32 %v3505, %v3511
    %v3514 = vmul.f32 %v3512, 1.442695
    %v3515 = vpow.pop %v3514
    %v3516 = vmul.f32 %v3513, 1.442695
    %v3517 = vpow.pop %v3516
    %v3518 = vsel %vm360, %v3515, 0.0
    %3519 = vadd.xlane.f32.xlu0 %v3518
    %v3520 = vpop.xlane.xlu0 %3519
    %v3521 = vsel %vm360, %v3517, 0.0
    %3522 = vadd.xlane.f32.xlu0 %v3521
    %v3523 = vpop.xlane.xlu0 %3522
    %v3524 = vrcp.pop %v3520
    %v3525 = vrcp.pop %v3523
    %v3526 = vmul.f32 %v3515, %v3524
    %v3527 = vmul.f32 %v3517, %v3525
    %v3528 = vpack.c.bf16 %v3526, %v3526
    %v3529 = vpack.c.bf16 %v3527, %v3527
    %v3530 = vpack.c.bf16 %v3402, %v3402
    %v3531 = vpack.c.bf16 %v3405, %v3405
    %v3533 = vsel %vm360, %v3528, 0
    %v3536 = vsel %vm484, %v3530, 0
    %3538 = vmatprep.subr.bf16.mxu0 0
    %3539 = vmatpush1.bf16.msra.mxu0 %v3536
    %3540 = vmatprep.subr.bf16.mxu0 0
    %3541 = vmatpush1.bf16.msra.mxu0 0
    %3542 = vmatprep.subr.bf16.mxu0 0
    %3543 = vmatpush1.bf16.msra.mxu0 0
    %3544 = vmatprep.subr.bf16.mxu0 0
    %3545 = vmatpush1.bf16.msra.mxu0 0
    %3546 = vmatprep.subr.bf16.mxu0 0
    %3547 = vmatpush1.bf16.msra.mxu0 0
    %3548 = vmatprep.subr.bf16.mxu0 0
    %3549 = vmatpush1.bf16.msra.mxu0 0
    %3550 = vmatprep.subr.bf16.mxu0 0
    %3551 = vmatpush1.bf16.msra.mxu0 0
    %3552 = vmatprep.subr.bf16.mxu0 0
    %3553 = vmatpush1.bf16.msra.mxu0 0
    %3554 = vmatprep.subr.bf16.mxu0 0
    %3555 = vmatpush1.bf16.msra.mxu0 0
    %3556 = vmatprep.subr.bf16.mxu0 0
    %3557 = vmatpush1.bf16.msra.mxu0 0
    %3558 = vmatprep.subr.bf16.mxu0 0
    %3559 = vmatpush1.bf16.msra.mxu0 0
    %3560 = vmatprep.subr.bf16.mxu0 0
    %3561 = vmatpush1.bf16.msra.mxu0 0
    %3562 = vmatprep.subr.bf16.mxu0 0
    %3563 = vmatpush1.bf16.msra.mxu0 0
    %3564 = vmatprep.subr.bf16.mxu0 0
    %3565 = vmatpush1.bf16.msra.mxu0 0
    %3566 = vmatprep.subr.bf16.mxu0 0
    %3567 = vmatpush1.bf16.msra.mxu0 0
    %3568 = vmatprep.subr.bf16.mxu0 0
    %3569 = vmatpush1.bf16.msra.mxu0 0
    %3570 = vmatprep.mubr.bf16.mxu0 0
    %3571 = vmatmul.mubr.bf16.gmra.mrb[0].mxu0 %v3533
    %v3572 = vpop.f32.mrb[0].mxu0
    %v3573 = vadd.f32 0.0, %v3572
    %v3574 = vpop.f32.mrb[0].mxu0
    %v3575 = vpop.f32.mrb[0].mxu0
    %v3576 = vpop.f32.mrb[0].mxu0
    %3577 = vdwg.mxu0
    %v3579 = vsel %vm360, %v3529, 0
    %v3582 = vsel %vm484, %v3531, 0
    %3584 = vmatprep.subr.bf16.mxu0 0
    %3585 = vmatpush1.bf16.msra.mxu0 %v3582
    %3586 = vmatprep.subr.bf16.mxu0 0
    %3587 = vmatpush1.bf16.msra.mxu0 0
    %3588 = vmatprep.subr.bf16.mxu0 0
    %3589 = vmatpush1.bf16.msra.mxu0 0
    %3590 = vmatprep.subr.bf16.mxu0 0
    %3591 = vmatpush1.bf16.msra.mxu0 0
    %3592 = vmatprep.subr.bf16.mxu0 0
    %3593 = vmatpush1.bf16.msra.mxu0 0
    %3594 = vmatprep.subr.bf16.mxu0 0
    %3595 = vmatpush1.bf16.msra.mxu0 0
    %3596 = vmatprep.subr.bf16.mxu0 0
    %3597 = vmatpush1.bf16.msra.mxu0 0
    %3598 = vmatprep.subr.bf16.mxu0 0
    %3599 = vmatpush1.bf16.msra.mxu0 0
    %3600 = vmatprep.subr.bf16.mxu0 0
    %3601 = vmatpush1.bf16.msra.mxu0 0
    %3602 = vmatprep.subr.bf16.mxu0 0
    %3603 = vmatpush1.bf16.msra.mxu0 0
    %3604 = vmatprep.subr.bf16.mxu0 0
    %3605 = vmatpush1.bf16.msra.mxu0 0
    %3606 = vmatprep.subr.bf16.mxu0 0
    %3607 = vmatpush1.bf16.msra.mxu0 0
    %3608 = vmatprep.subr.bf16.mxu0 0
    %3609 = vmatpush1.bf16.msra.mxu0 0
    %3610 = vmatprep.subr.bf16.mxu0 0
    %3611 = vmatpush1.bf16.msra.mxu0 0
    %3612 = vmatprep.subr.bf16.mxu0 0
    %3613 = vmatpush1.bf16.msra.mxu0 0
    %3614 = vmatprep.subr.bf16.mxu0 0
    %3615 = vmatpush1.bf16.msra.mxu0 0
    %3616 = vmatprep.mubr.bf16.mxu0 0
    %3617 = vmatmul.mubr.bf16.gmra.mrb[0].mxu0 %v3579
    %v3618 = vpop.f32.mrb[0].mxu0
    %v3619 = vadd.f32 0.0, %v3618
    %v3620 = vpop.f32.mrb[0].mxu0
    %v3621 = vpop.f32.mrb[0].mxu0
    %v3622 = vpop.f32.mrb[0].mxu0
    %3623 = vdwg.mxu0
    %v3624 = vpack.c.bf16 %v3619, %v3573
    %s3625 = scalar_lea.vmem %s5, 24
    %v3626 = vld [vmem:[%s3625] sm:$0xf]
    %v3628 = vsel %vm360, %v3624, 0
    %v3631 = vsel %vm484, %v3626, 0
    %3633 = vmatprep.subr.bf16.mxu0 0
    %3634 = vmatpush1.bf16.msra.mxu0 %v3631
    %3635 = vmatprep.subr.bf16.mxu0 0
    %3636 = vmatpush1.bf16.msra.mxu0 0
    %3637 = vmatprep.subr.bf16.mxu0 0
    %3638 = vmatpush1.bf16.msra.mxu0 0
    %3639 = vmatprep.subr.bf16.mxu0 0
    %3640 = vmatpush1.bf16.msra.mxu0 0
    %3641 = vmatprep.subr.bf16.mxu0 0
    %3642 = vmatpush1.bf16.msra.mxu0 0
    %3643 = vmatprep.subr.bf16.mxu0 0
    %3644 = vmatpush1.bf16.msra.mxu0 0
    %3645 = vmatprep.subr.bf16.mxu0 0
    %3646 = vmatpush1.bf16.msra.mxu0 0
    %3647 = vmatprep.subr.bf16.mxu0 0
    %3648 = vmatpush1.bf16.msra.mxu0 0
    %3649 = vmatprep.subr.bf16.mxu0 0
    %3650 = vmatpush1.bf16.msra.mxu0 0
    %3651 = vmatprep.subr.bf16.mxu0 0
    %3652 = vmatpush1.bf16.msra.mxu0 0
    %3653 = vmatprep.subr.bf16.mxu0 0
    %3654 = vmatpush1.bf16.msra.mxu0 0
    %3655 = vmatprep.subr.bf16.mxu0 0
    %3656 = vmatpush1.bf16.msra.mxu0 0
    %3657 = vmatprep.subr.bf16.mxu0 0
    %3658 = vmatpush1.bf16.msra.mxu0 0
    %3659 = vmatprep.subr.bf16.mxu0 0
    %3660 = vmatpush1.bf16.msra.mxu0 0
    %3661 = vmatprep.subr.bf16.mxu0 0
    %3662 = vmatpush1.bf16.msra.mxu0 0
    %3663 = vmatprep.subr.bf16.mxu0 0
    %3664 = vmatpush1.bf16.msra.mxu0 0
    %3665 = vmatprep.mubr.bf16.mxu0 0
    %3666 = vmatmul.mubr.bf16.gmra.mrb[0].mxu0 %v3628
    %v3667 = vpop.f32.mrb[0].mxu0
    %v3668 = vadd.f32 0.0, %v3667
    %v3669 = vpop.f32.mrb[0].mxu0
    %v3670 = vpop.f32.mrb[0].mxu0
    %v3671 = vadd.f32 0.0, %v3670
    %v3672 = vpop.f32.mrb[0].mxu0
    %3673 = vdwg.mxu0
    %v3674 = vadd.f32 %v3204, %v3668
    %v3675 = vadd.f32 %v3207, %v3671
    %s3676 = scalar_lea.vmem %s3, 240
    %v3677 = vld [vmem:[%s3676] sm:$0xf]
    %v3678 = vld [vmem:[%s3676 + $0x4] sm:$0xf]
    %v3679 = vld [vmem:[%s3676 + $0x8] sm:$0xf]
    %v3680 = vld [vmem:[%s3676 + $0xc] sm:$0xf]
    %s3681 = scalar_lea.vmem %s4, 15
    %v3682 = vld [vmem:[%s3681] sm:$0x1]
    %v3684 = vlaneseq
    %v3685 = vshrl.u32 %v3684, 7
    %v3686 = vsub.s32 0, %v3685
    %v3687 = vrot.slane %v3682, %v3686
    %v3693 = vunpack.c.l.b16 %v3677
    %v3694 = vunpack.c.l.b16 %v3678
    %v3695 = vunpack.c.l.b16 %v3679
    %v3696 = vunpack.c.l.b16 %v3680
    %v3697 = vpack.c.b16 %v3694, %v3693
    %v3698 = vpack.c.b16 %v3696, %v3695
    %3701 = vmatprep.subr.bf16.mxu0 0
    %3702 = vmatpush1.bf16.msra.mxu0 %v3697
    %3703 = vmatprep.subr.bf16.mxu0 0
    %3704 = vmatpush1.bf16.msra.mxu0 %v3698
    %3705 = vmatprep.subr.bf16.mxu0 0
    %3706 = vmatpush1.bf16.msra.mxu0 0
    %3707 = vmatprep.subr.bf16.mxu0 0
    %3708 = vmatpush1.bf16.msra.mxu0 0
    %3709 = vmatprep.subr.bf16.mxu0 0
    %3710 = vmatpush1.bf16.msra.mxu0 0
    %3711 = vmatprep.subr.bf16.mxu0 0
    %3712 = vmatpush1.bf16.msra.mxu0 0
    %3713 = vmatprep.subr.bf16.mxu0 0
    %3714 = vmatpush1.bf16.msra.mxu0 0
    %3715 = vmatprep.subr.bf16.mxu0 0
    %3716 = vmatpush1.bf16.msra.mxu0 0
    %3717 = vmatprep.subr.bf16.mxu0 0
    %3718 = vmatpush1.bf16.msra.mxu0 0
    %3719 = vmatprep.subr.bf16.mxu0 0
    %3720 = vmatpush1.bf16.msra.mxu0 0
    %3721 = vmatprep.subr.bf16.mxu0 0
    %3722 = vmatpush1.bf16.msra.mxu0 0
    %3723 = vmatprep.subr.bf16.mxu0 0
    %3724 = vmatpush1.bf16.msra.mxu0 0
    %3725 = vmatprep.subr.bf16.mxu0 0
    %3726 = vmatpush1.bf16.msra.mxu0 0
    %3727 = vmatprep.subr.bf16.mxu0 0
    %3728 = vmatpush1.bf16.msra.mxu0 0
    %3729 = vmatprep.subr.bf16.mxu0 0
    %3730 = vmatpush1.bf16.msra.mxu0 0
    %3731 = vmatprep.subr.bf16.mxu0 0
    %3732 = vmatpush1.bf16.msra.mxu0 0
    %3733 = vmatprep.mubr.bf16.mxu0 0
    %3734 = vmatmul.mubr.bf16.gmra.mrb[0].mxu0 %v2305
    %v3735 = vpop.f32.mrb[0].mxu0
    %v3736 = vadd.f32 %v3687, %v3735
    %v3737 = vpop.f32.mrb[0].mxu0
    %v3738 = vpop.f32.mrb[0].mxu0
    %v3739 = vadd.f32 %v3687, %v3738
    %v3740 = vpop.f32.mrb[0].mxu0
    %3741 = vdwg.mxu0
    %s3742 = scalar_lea.vmem %s3, 304
    %v3743 = vld [vmem:[%s3742] sm:$0xf]
    %v3744 = vld [vmem:[%s3742 + $0x4] sm:$0xf]
    %v3745 = vld [vmem:[%s3742 + $0x8] sm:$0xf]
    %v3746 = vld [vmem:[%s3742 + $0xc] sm:$0xf]
    %s3747 = scalar_lea.vmem %s4, 19
    %v3748 = vld [vmem:[%s3747] sm:$0x1]
    %v3750 = vlaneseq
    %v3751 = vshrl.u32 %v3750, 7
    %v3752 = vsub.s32 0, %v3751
    %v3753 = vrot.slane %v3748, %v3752
    %v3759 = vunpack.c.l.b16 %v3743
    %v3760 = vunpack.c.l.b16 %v3744
    %v3761 = vunpack.c.l.b16 %v3745
    %v3762 = vunpack.c.l.b16 %v3746
    %v3763 = vpack.c.b16 %v3760, %v3759
    %v3764 = vpack.c.b16 %v3762, %v3761
    %3767 = vmatprep.subr.bf16.mxu0 0
    %3768 = vmatpush1.bf16.msra.mxu0 %v3763
    %3769 = vmatprep.subr.bf16.mxu0 0
    %3770 = vmatpush1.bf16.msra.mxu0 %v3764
    %3771 = vmatprep.subr.bf16.mxu0 0
    %3772 = vmatpush1.bf16.msra.mxu0 0
    %3773 = vmatprep.subr.bf16.mxu0 0
    %3774 = vmatpush1.bf16.msra.mxu0 0
    %3775 = vmatprep.subr.bf16.mxu0 0
    %3776 = vmatpush1.bf16.msra.mxu0 0
    %3777 = vmatprep.subr.bf16.mxu0 0
    %3778 = vmatpush1.bf16.msra.mxu0 0
    %3779 = vmatprep.subr.bf16.mxu0 0
    %3780 = vmatpush1.bf16.msra.mxu0 0
    %3781 = vmatprep.subr.bf16.mxu0 0
    %3782 = vmatpush1.bf16.msra.mxu0 0
    %3783 = vmatprep.subr.bf16.mxu0 0
    %3784 = vmatpush1.bf16.msra.mxu0 0
    %3785 = vmatprep.subr.bf16.mxu0 0
    %3786 = vmatpush1.bf16.msra.mxu0 0
    %3787 = vmatprep.subr.bf16.mxu0 0
    %3788 = vmatpush1.bf16.msra.mxu0 0
    %3789 = vmatprep.subr.bf16.mxu0 0
    %3790 = vmatpush1.bf16.msra.mxu0 0
    %3791 = vmatprep.subr.bf16.mxu0 0
    %3792 = vmatpush1.bf16.msra.mxu0 0
    %3793 = vmatprep.subr.bf16.mxu0 0
    %3794 = vmatpush1.bf16.msra.mxu0 0
    %3795 = vmatprep.subr.bf16.mxu0 0
    %3796 = vmatpush1.bf16.msra.mxu0 0
    %3797 = vmatprep.subr.bf16.mxu0 0
    %3798 = vmatpush1.bf16.msra.mxu0 0
    %3799 = vmatprep.mubr.bf16.mxu0 0
    %3800 = vmatmul.mubr.bf16.gmra.mrb[0].mxu0 %v2305
    %v3801 = vpop.f32.mrb[0].mxu0
    %v3802 = vadd.f32 %v3753, %v3801
    %v3803 = vpop.f32.mrb[0].mxu0
    %v3804 = vpop.f32.mrb[0].mxu0
    %v3805 = vadd.f32 %v3753, %v3804
    %v3806 = vpop.f32.mrb[0].mxu0
    %3807 = vdwg.mxu0
    %s3808 = scalar_lea.vmem %s3, 368
    %v3809 = vld [vmem:[%s3808] sm:$0xf]
    %v3810 = vld [vmem:[%s3808 + $0x4] sm:$0xf]
    %v3811 = vld [vmem:[%s3808 + $0x8] sm:$0xf]
    %v3812 = vld [vmem:[%s3808 + $0xc] sm:$0xf]
    %s3813 = scalar_lea.vmem %s4, 23
    %v3814 = vld [vmem:[%s3813] sm:$0x1]
    %v3816 = vlaneseq
    %v3817 = vshrl.u32 %v3816, 7
    %v3818 = vsub.s32 0, %v3817
    %v3819 = vrot.slane %v3814, %v3818
    %v3825 = vunpack.c.l.b16 %v3809
    %v3826 = vunpack.c.l.b16 %v3810
    %v3827 = vunpack.c.l.b16 %v3811
    %v3828 = vunpack.c.l.b16 %v3812
    %v3829 = vpack.c.b16 %v3826, %v3825
    %v3830 = vpack.c.b16 %v3828, %v3827
    %3833 = vmatprep.subr.bf16.mxu0 0
    %3834 = vmatpush1.bf16.msra.mxu0 %v3829
    %3835 = vmatprep.subr.bf16.mxu0 0
    %3836 = vmatpush1.bf16.msra.mxu0 %v3830
    %3837 = vmatprep.subr.bf16.mxu0 0
    %3838 = vmatpush1.bf16.msra.mxu0 0
    %3839 = vmatprep.subr.bf16.mxu0 0
    %3840 = vmatpush1.bf16.msra.mxu0 0
    %3841 = vmatprep.subr.bf16.mxu0 0
    %3842 = vmatpush1.bf16.msra.mxu0 0
    %3843 = vmatprep.subr.bf16.mxu0 0
    %3844 = vmatpush1.bf16.msra.mxu0 0
    %3845 = vmatprep.subr.bf16.mxu0 0
    %3846 = vmatpush1.bf16.msra.mxu0 0
    %3847 = vmatprep.subr.bf16.mxu0 0
    %3848 = vmatpush1.bf16.msra.mxu0 0
    %3849 = vmatprep.subr.bf16.mxu0 0
    %3850 = vmatpush1.bf16.msra.mxu0 0
    %3851 = vmatprep.subr.bf16.mxu0 0
    %3852 = vmatpush1.bf16.msra.mxu0 0
    %3853 = vmatprep.subr.bf16.mxu0 0
    %3854 = vmatpush1.bf16.msra.mxu0 0
    %3855 = vmatprep.subr.bf16.mxu0 0
    %3856 = vmatpush1.bf16.msra.mxu0 0
    %3857 = vmatprep.subr.bf16.mxu0 0
    %3858 = vmatpush1.bf16.msra.mxu0 0
    %3859 = vmatprep.subr.bf16.mxu0 0
    %3860 = vmatpush1.bf16.msra.mxu0 0
    %3861 = vmatprep.subr.bf16.mxu0 0
    %3862 = vmatpush1.bf16.msra.mxu0 0
    %3863 = vmatprep.subr.bf16.mxu0 0
    %3864 = vmatpush1.bf16.msra.mxu0 0
    %3865 = vmatprep.mubr.bf16.mxu0 0
    %3866 = vmatmul.mubr.bf16.gmra.mrb[0].mxu0 %v2305
    %v3867 = vpop.f32.mrb[0].mxu0
    %v3868 = vadd.f32 %v3819, %v3867
    %v3869 = vpop.f32.mrb[0].mxu0
    %v3870 = vpop.f32.mrb[0].mxu0
    %v3871 = vadd.f32 %v3819, %v3870
    %v3872 = vpop.f32.mrb[0].mxu0
    %3873 = vdwg.mxu0
    %v3874 = vpack.c.bf16 %v3736, %v3736
    %v3875 = vpack.c.bf16 %v3739, %v3739
    %v3876 = vpack.c.bf16 %v3802, %v3802
    %v3877 = vpack.c.bf16 %v3805, %v3805
    %v3879 = vsel %vm360, %v3874, 0
    %v3882 = vsel %vm360, %v3876, 0
    %3884 = vmatprep.subr.bf16.mxu0 0
    %3885 = vmatpush1.bf16.xpose.msra.mxu0 %v3882
    %3886 = vmatprep.subr.bf16.mxu0 0
    %3887 = vmatpush1.bf16.xpose.msra.mxu0 0
    %3888 = vmatprep.subr.bf16.mxu0 0
    %3889 = vmatpush1.bf16.xpose.msra.mxu0 0
    %3890 = vmatprep.subr.bf16.mxu0 0
    %3891 = vmatpush1.bf16.xpose.msra.mxu0 0
    %3892 = vmatprep.subr.bf16.mxu0 0
    %3893 = vmatpush1.bf16.xpose.msra.mxu0 0
    %3894 = vmatprep.subr.bf16.mxu0 0
    %3895 = vmatpush1.bf16.xpose.msra.mxu0 0
    %3896 = vmatprep.subr.bf16.mxu0 0
    %3897 = vmatpush1.bf16.xpose.msra.mxu0 0
    %3898 = vmatprep.subr.bf16.mxu0 0
    %3899 = vmatpush1.bf16.xpose.msra.mxu0 0
    %3900 = vmatprep.subr.bf16.mxu0 0
    %3901 = vmatpush1.bf16.xpose.msra.mxu0 0
    %3902 = vmatprep.subr.bf16.mxu0 0
    %3903 = vmatpush1.bf16.xpose.msra.mxu0 0
    %3904 = vmatprep.subr.bf16.mxu0 0
    %3905 = vmatpush1.bf16.xpose.msra.mxu0 0
    %3906 = vmatprep.subr.bf16.mxu0 0
    %3907 = vmatpush1.bf16.xpose.msra.mxu0 0
    %3908 = vmatprep.subr.bf16.mxu0 0
    %3909 = vmatpush1.bf16.xpose.msra.mxu0 0
    %3910 = vmatprep.subr.bf16.mxu0 0
    %3911 = vmatpush1.bf16.xpose.msra.mxu0 0
    %3912 = vmatprep.subr.bf16.mxu0 0
    %3913 = vmatpush1.bf16.xpose.msra.mxu0 0
    %3914 = vmatprep.subr.bf16.mxu0 0
    %3915 = vmatpush1.bf16.xpose.msra.mxu0 0
    %3916 = vmatprep.mubr.bf16.mxu0 0
    %3917 = vmatmul.mubr.bf16.gmra.mrb[0].mxu0 %v3879
    %v3918 = vpop.f32.mrb[0].mxu0
    %v3919 = vadd.f32 0.0, %v3918
    %v3920 = vpop.f32.mrb[0].mxu0
    %v3921 = vpop.f32.mrb[0].mxu0
    %v3922 = vpop.f32.mrb[0].mxu0
    %3923 = vdwg.mxu0
    %v3925 = vsel %vm360, %v3875, 0
    %v3928 = vsel %vm360, %v3877, 0
    %3930 = vmatprep.subr.bf16.mxu0 0
    %3931 = vmatpush1.bf16.xpose.msra.mxu0 %v3928
    %3932 = vmatprep.subr.bf16.mxu0 0
    %3933 = vmatpush1.bf16.xpose.msra.mxu0 0
    %3934 = vmatprep.subr.bf16.mxu0 0
    %3935 = vmatpush1.bf16.xpose.msra.mxu0 0
    %3936 = vmatprep.subr.bf16.mxu0 0
    %3937 = vmatpush1.bf16.xpose.msra.mxu0 0
    %3938 = vmatprep.subr.bf16.mxu0 0
    %3939 = vmatpush1.bf16.xpose.msra.mxu0 0
    %3940 = vmatprep.subr.bf16.mxu0 0
    %3941 = vmatpush1.bf16.xpose.msra.mxu0 0
    %3942 = vmatprep.subr.bf16.mxu0 0
    %3943 = vmatpush1.bf16.xpose.msra.mxu0 0
    %3944 = vmatprep.subr.bf16.mxu0 0
    %3945 = vmatpush1.bf16.xpose.msra.mxu0 0
    %3946 = vmatprep.subr.bf16.mxu0 0
    %3947 = vmatpush1.bf16.xpose.msra.mxu0 0
    %3948 = vmatprep.subr.bf16.mxu0 0
    %3949 = vmatpush1.bf16.xpose.msra.mxu0 0
    %3950 = vmatprep.subr.bf16.mxu0 0
    %3951 = vmatpush1.bf16.xpose.msra.mxu0 0
    %3952 = vmatprep.subr.bf16.mxu0 0
    %3953 = vmatpush1.bf16.xpose.msra.mxu0 0
    %3954 = vmatprep.subr.bf16.mxu0 0
    %3955 = vmatpush1.bf16.xpose.msra.mxu0 0
    %3956 = vmatprep.subr.bf16.mxu0 0
    %3957 = vmatpush1.bf16.xpose.msra.mxu0 0
    %3958 = vmatprep.subr.bf16.mxu0 0
    %3959 = vmatpush1.bf16.xpose.msra.mxu0 0
    %3960 = vmatprep.subr.bf16.mxu0 0
    %3961 = vmatpush1.bf16.xpose.msra.mxu0 0
    %3962 = vmatprep.mubr.bf16.mxu0 0
    %3963 = vmatmul.mubr.bf16.gmra.mrb[0].mxu0 %v3925
    %v3964 = vpop.f32.mrb[0].mxu0
    %v3965 = vadd.f32 0.0, %v3964
    %v3966 = vpop.f32.mrb[0].mxu0
    %v3967 = vpop.f32.mrb[0].mxu0
    %v3968 = vpop.f32.mrb[0].mxu0
    %3969 = vdwg.mxu0
    %v3970 = vmul.f32 %v3919, 0.35355338
    %v3971 = vmul.f32 %v3965, 0.35355338
    %v3972 = vsel %vm360, %v3970, -inf
    %3973 = vmax.xlane.f32.xlu0 %v3972
    %v3974 = vpop.xlane.xlu0 %3973
    %v3975 = vsel %vm360, %v3971, -inf
    %3976 = vmax.xlane.f32.xlu0 %v3975
    %v3977 = vpop.xlane.xlu0 %3976
    %v3978 = vsub.f32 %v3970, %v3974
    %v3979 = vsub.f32 %v3971, %v3977
    %v3980 = vmul.f32 %v3978, 1.442695
    %v3981 = vpow.pop %v3980
    %v3982 = vmul.f32 %v3979, 1.442695
    %v3983 = vpow.pop %v3982
    %v3984 = vsel %vm360, %v3981, 0.0
    %3985 = vadd.xlane.f32.xlu0 %v3984
    %v3986 = vpop.xlane.xlu0 %3985
    %v3987 = vsel %vm360, %v3983, 0.0
    %3988 = vadd.xlane.f32.xlu0 %v3987
    %v3989 = vpop.xlane.xlu0 %3988
    %v3990 = vrcp.pop %v3986
    %v3991 = vrcp.pop %v3989
    %v3992 = vmul.f32 %v3981, %v3990
    %v3993 = vmul.f32 %v3983, %v3991
    %v3994 = vpack.c.bf16 %v3992, %v3992
    %v3995 = vpack.c.bf16 %v3993, %v3993
    %v3996 = vpack.c.bf16 %v3868, %v3868
    %v3997 = vpack.c.bf16 %v3871, %v3871
    %v3999 = vsel %vm360, %v3994, 0
    %v4002 = vsel %vm484, %v3996, 0
    %4004 = vmatprep.subr.bf16.mxu0 0
    %4005 = vmatpush1.bf16.msra.mxu0 %v4002
    %4006 = vmatprep.subr.bf16.mxu0 0
    %4007 = vmatpush1.bf16.msra.mxu0 0
    %4008 = vmatprep.subr.bf16.mxu0 0
    %4009 = vmatpush1.bf16.msra.mxu0 0
    %4010 = vmatprep.subr.bf16.mxu0 0
    %4011 = vmatpush1.bf16.msra.mxu0 0
    %4012 = vmatprep.subr.bf16.mxu0 0
    %4013 = vmatpush1.bf16.msra.mxu0 0
    %4014 = vmatprep.subr.bf16.mxu0 0
    %4015 = vmatpush1.bf16.msra.mxu0 0
    %4016 = vmatprep.subr.bf16.mxu0 0
    %4017 = vmatpush1.bf16.msra.mxu0 0
    %4018 = vmatprep.subr.bf16.mxu0 0
    %4019 = vmatpush1.bf16.msra.mxu0 0
    %4020 = vmatprep.subr.bf16.mxu0 0
    %4021 = vmatpush1.bf16.msra.mxu0 0
    %4022 = vmatprep.subr.bf16.mxu0 0
    %4023 = vmatpush1.bf16.msra.mxu0 0
    %4024 = vmatprep.subr.bf16.mxu0 0
    %4025 = vmatpush1.bf16.msra.mxu0 0
    %4026 = vmatprep.subr.bf16.mxu0 0
    %4027 = vmatpush1.bf16.msra.mxu0 0
    %4028 = vmatprep.subr.bf16.mxu0 0
    %4029 = vmatpush1.bf16.msra.mxu0 0
    %4030 = vmatprep.subr.bf16.mxu0 0
    %4031 = vmatpush1.bf16.msra.mxu0 0
    %4032 = vmatprep.subr.bf16.mxu0 0
    %4033 = vmatpush1.bf16.msra.mxu0 0
    %4034 = vmatprep.subr.bf16.mxu0 0
    %4035 = vmatpush1.bf16.msra.mxu0 0
    %4036 = vmatprep.mubr.bf16.mxu0 0
    %4037 = vmatmul.mubr.bf16.gmra.mrb[0].mxu0 %v3999
    %v4038 = vpop.f32.mrb[0].mxu0
    %v4039 = vadd.f32 0.0, %v4038
    %v4040 = vpop.f32.mrb[0].mxu0
    %v4041 = vpop.f32.mrb[0].mxu0
    %v4042 = vpop.f32.mrb[0].mxu0
    %4043 = vdwg.mxu0
    %v4045 = vsel %vm360, %v3995, 0
    %v4048 = vsel %vm484, %v3997, 0
    %4050 = vmatprep.subr.bf16.mxu0 0
    %4051 = vmatpush1.bf16.msra.mxu0 %v4048
    %4052 = vmatprep.subr.bf16.mxu0 0
    %4053 = vmatpush1.bf16.msra.mxu0 0
    %4054 = vmatprep.subr.bf16.mxu0 0
    %4055 = vmatpush1.bf16.msra.mxu0 0
    %4056 = vmatprep.subr.bf16.mxu0 0
    %4057 = vmatpush1.bf16.msra.mxu0 0
    %4058 = vmatprep.subr.bf16.mxu0 0
    %4059 = vmatpush1.bf16.msra.mxu0 0
    %4060 = vmatprep.subr.bf16.mxu0 0
    %4061 = vmatpush1.bf16.msra.mxu0 0
    %4062 = vmatprep.subr.bf16.mxu0 0
    %4063 = vmatpush1.bf16.msra.mxu0 0
    %4064 = vmatprep.subr.bf16.mxu0 0
    %4065 = vmatpush1.bf16.msra.mxu0 0
    %4066 = vmatprep.subr.bf16.mxu0 0
    %4067 = vmatpush1.bf16.msra.mxu0 0
    %4068 = vmatprep.subr.bf16.mxu0 0
    %4069 = vmatpush1.bf16.msra.mxu0 0
    %4070 = vmatprep.subr.bf16.mxu0 0
    %4071 = vmatpush1.bf16.msra.mxu0 0
    %4072 = vmatprep.subr.bf16.mxu0 0
    %4073 = vmatpush1.bf16.msra.mxu0 0
    %4074 = vmatprep.subr.bf16.mxu0 0
    %4075 = vmatpush1.bf16.msra.mxu0 0
    %4076 = vmatprep.subr.bf16.mxu0 0
    %4077 = vmatpush1.bf16.msra.mxu0 0
    %4078 = vmatprep.subr.bf16.mxu0 0
    %4079 = vmatpush1.bf16.msra.mxu0 0
    %4080 = vmatprep.subr.bf16.mxu0 0
    %4081 = vmatpush1.bf16.msra.mxu0 0
    %4082 = vmatprep.mubr.bf16.mxu0 0
    %4083 = vmatmul.mubr.bf16.gmra.mrb[0].mxu0 %v4045
    %v4084 = vpop.f32.mrb[0].mxu0
    %v4085 = vadd.f32 0.0, %v4084
    %v4086 = vpop.f32.mrb[0].mxu0
    %v4087 = vpop.f32.mrb[0].mxu0
    %v4088 = vpop.f32.mrb[0].mxu0
    %4089 = vdwg.mxu0
    %v4090 = vpack.c.bf16 %v4085, %v4039
    %s4091 = scalar_lea.vmem %s5, 28
    %v4092 = vld [vmem:[%s4091] sm:$0xf]
    %v4094 = vsel %vm360, %v4090, 0
    %v4097 = vsel %vm484, %v4092, 0
    %4099 = vmatprep.subr.bf16.mxu0 0
    %4100 = vmatpush1.bf16.msra.mxu0 %v4097
    %4101 = vmatprep.subr.bf16.mxu0 0
    %4102 = vmatpush1.bf16.msra.mxu0 0
    %4103 = vmatprep.subr.bf16.mxu0 0
    %4104 = vmatpush1.bf16.msra.mxu0 0
    %4105 = vmatprep.subr.bf16.mxu0 0
    %4106 = vmatpush1.bf16.msra.mxu0 0
    %4107 = vmatprep.subr.bf16.mxu0 0
    %4108 = vmatpush1.bf16.msra.mxu0 0
    %4109 = vmatprep.subr.bf16.mxu0 0
    %4110 = vmatpush1.bf16.msra.mxu0 0
    %4111 = vmatprep.subr.bf16.mxu0 0
    %4112 = vmatpush1.bf16.msra.mxu0 0
    %4113 = vmatprep.subr.bf16.mxu0 0
    %4114 = vmatpush1.bf16.msra.mxu0 0
    %4115 = vmatprep.subr.bf16.mxu0 0
    %4116 = vmatpush1.bf16.msra.mxu0 0
    %4117 = vmatprep.subr.bf16.mxu0 0
    %4118 = vmatpush1.bf16.msra.mxu0 0
    %4119 = vmatprep.subr.bf16.mxu0 0
    %4120 = vmatpush1.bf16.msra.mxu0 0
    %4121 = vmatprep.subr.bf16.mxu0 0
    %4122 = vmatpush1.bf16.msra.mxu0 0
    %4123 = vmatprep.subr.bf16.mxu0 0
    %4124 = vmatpush1.bf16.msra.mxu0 0
    %4125 = vmatprep.subr.bf16.mxu0 0
    %4126 = vmatpush1.bf16.msra.mxu0 0
    %4127 = vmatprep.subr.bf16.mxu0 0
    %4128 = vmatpush1.bf16.msra.mxu0 0
    %4129 = vmatprep.subr.bf16.mxu0 0
    %4130 = vmatpush1.bf16.msra.mxu0 0
    %4131 = vmatprep.mubr.bf16.mxu0 0
    %4132 = vmatmul.mubr.bf16.gmra.mrb[0].mxu0 %v4094
    %v4133 = vpop.f32.mrb[0].mxu0
    %v4134 = vadd.f32 0.0, %v4133
    %v4135 = vpop.f32.mrb[0].mxu0
    %v4136 = vpop.f32.mrb[0].mxu0
    %v4137 = vadd.f32 0.0, %v4136
    %v4138 = vpop.f32.mrb[0].mxu0
    %4139 = vdwg.mxu0
    %v4140 = vadd.f32 %v3674, %v4134
    %v4141 = vadd.f32 %v3675, %v4137
    %s4142 = scalar_lea.vmem %s6, 1
    %v4143 = vld [vmem:[%s4142] sm:$0x1]
    %v4145 = vlaneseq
    %v4146 = vshrl.u32 %v4145, 7
    %v4147 = vsub.s32 0, %v4146
    %v4148 = vrot.slane %v4143, %v4147
    %v4150 = vadd.f32 %v4140, %v4148
    %v4151 = vadd.f32 %v4141, %v4148
    %v4152 = vadd.f32 %v2276, %v4150
    %v4153 = vadd.f32 %v2277, %v4151
    %s4154 = scalar_lea.vmem %s11, 2
    %v4155 = vld [vmem:[%s4154] sm:$0x1]
    %s4156 = scalar_lea.vmem %s12, 2
    %v4157 = vld [vmem:[%s4156] sm:$0x1]
    %v4158 = vsel %vm179, %v4152, 0.0
    %4159 = vadd.xlane.f32.xlu0 %v4158
    %v4160 = vpop.xlane.xlu0 %4159
    %v4161 = vsel %vm179, %v4153, 0.0
    %4162 = vadd.xlane.f32.xlu0 %v4161
    %v4163 = vpop.xlane.xlu0 %4162
    %v4164 = vmul.f32 %v4160, %v2038
    %v4165 = vmul.f32 %v4163, %v2038
    %v4166 = vsub.f32 %v4152, %v4164
    %v4167 = vsub.f32 %v4153, %v4165
    %v4168 = vmul.f32 %v4166, %v4166
    %v4169 = vmul.f32 %v4167, %v4167
    %v4170 = vsel %vm179, %v4168, 0.0
    %4171 = vadd.xlane.f32.xlu0 %v4170
    %v4172 = vpop.xlane.xlu0 %4171
    %v4173 = vsel %vm179, %v4169, 0.0
    %4174 = vadd.xlane.f32.xlu0 %v4173
    %v4175 = vpop.xlane.xlu0 %4174
    %v4176 = vmul.f32 %v4172, %v2038
    %v4177 = vmul.f32 %v4175, %v2038
    %v4178 = vadd.f32 %v4176, 1e-05
    %v4179 = vadd.f32 %v4177, 1e-05
    %v4180 = vrsqrt.pop %v4178
    %v4181 = vrsqrt.pop %v4179
    %v4182 = vmul.f32 %v4166, %v4180
    %v4183 = vmul.f32 %v4167, %v4181
    %v4185 = vlaneseq
    %v4186 = vshrl.u32 %v4185, 7
    %v4187 = vsub.s32 0, %v4186
    %v4188 = vrot.slane %v4155, %v4187
    %v4190 = vmul.f32 %v4182, %v4188
    %v4191 = vmul.f32 %v4183, %v4188
    %v4193 = vlaneseq
    %v4194 = vshrl.u32 %v4193, 7
    %v4195 = vsub.s32 0, %v4194
    %v4196 = vrot.slane %v4157, %v4195
    %v4198 = vadd.f32 %v4190, %v4196
    %v4199 = vadd.f32 %v4191, %v4196
    %v4200 = vpack.c.bf16 %v4199, %v4198
    %s4201 = scalar_lea.vmem %s7, 16
    %v4202 = vld [vmem:[%s4201] sm:$0xf]
    %v4203 = vld [vmem:[%s4201 + $0x4] sm:$0xf]
    %v4204 = vld [vmem:[%s4201 + $0x8] sm:$0xf]
    %v4205 = vld [vmem:[%s4201 + $0xc] sm:$0xf]
    %s4206 = scalar_lea.vmem %s8, 1
    %v4207 = vld [vmem:[%s4206] sm:$0x1]
    %v4209 = vlaneseq
    %v4210 = vshrl.u32 %v4209, 7
    %v4211 = vsub.s32 0, %v4210
    %v4212 = vrot.slane %v4207, %v4211
    %v4218 = vunpack.c.l.b16 %v4202
    %v4219 = vunpack.c.l.b16 %v4203
    %v4220 = vunpack.c.l.b16 %v4204
    %v4221 = vunpack.c.l.b16 %v4205
    %v4222 = vpack.c.b16 %v4219, %v4218
    %v4223 = vpack.c.b16 %v4221, %v4220
    %v4227 = vsel %vm179, %v4200, 0
    %4229 = vmatprep.subr.bf16.mxu0 0
    %4230 = vmatpush1.bf16.msra.mxu0 %v4222
    %4231 = vmatprep.subr.bf16.mxu0 0
    %4232 = vmatpush1.bf16.msra.mxu0 %v4223
    %4233 = vmatprep.subr.bf16.mxu0 0
    %4234 = vmatpush1.bf16.msra.mxu0 0
    %4235 = vmatprep.subr.bf16.mxu0 0
    %4236 = vmatpush1.bf16.msra.mxu0 0
    %4237 = vmatprep.subr.bf16.mxu0 0
    %4238 = vmatpush1.bf16.msra.mxu0 0
    %4239 = vmatprep.subr.bf16.mxu0 0
    %4240 = vmatpush1.bf16.msra.mxu0 0
    %4241 = vmatprep.subr.bf16.mxu0 0
    %4242 = vmatpush1.bf16.msra.mxu0 0
    %4243 = vmatprep.subr.bf16.mxu0 0
    %4244 = vmatpush1.bf16.msra.mxu0 0
    %4245 = vmatprep.subr.bf16.mxu0 0
    %4246 = vmatpush1.bf16.msra.mxu0 0
    %4247 = vmatprep.subr.bf16.mxu0 0
    %4248 = vmatpush1.bf16.msra.mxu0 0
    %4249 = vmatprep.subr.bf16.mxu0 0
    %4250 = vmatpush1.bf16.msra.mxu0 0
    %4251 = vmatprep.subr.bf16.mxu0 0
    %4252 = vmatpush1.bf16.msra.mxu0 0
    %4253 = vmatprep.subr.bf16.mxu0 0
    %4254 = vmatpush1.bf16.msra.mxu0 0
    %4255 = vmatprep.subr.bf16.mxu0 0
    %4256 = vmatpush1.bf16.msra.mxu0 0
    %4257 = vmatprep.subr.bf16.mxu0 0
    %4258 = vmatpush1.bf16.msra.mxu0 0
    %4259 = vmatprep.subr.bf16.mxu0 0
    %4260 = vmatpush1.bf16.msra.mxu0 0
    %4261 = vmatprep.mubr.bf16.mxu0 0
    %4262 = vmatmul.mubr.bf16.gmra.mrb[0].mxu0 %v4227
    %v4263 = vpop.f32.mrb[0].mxu0
    %v4264 = vadd.f32 %v4212, %v4263
    %v4265 = vpop.f32.mrb[0].mxu0
    %v4266 = vpop.f32.mrb[0].mxu0
    %v4267 = vadd.f32 %v4212, %v4266
    %v4268 = vpop.f32.mrb[0].mxu0
    %4269 = vdwg.mxu0
    %v4270 = vmax.f32 %v4264, 0.0
    %v4271 = vmax.f32 %v4267, 0.0
    %v4272 = vpack.c.bf16 %v4271, %v4270
    %s4273 = scalar_lea.vmem %s9, 32
    %v4274 = vld [vmem:[%s4273] sm:$0xf]
    %v4275 = vld [vmem:[%s4273 + $0x4] sm:$0xf]
    %v4276 = vld [vmem:[%s4273 + $0x8] sm:$0xf]
    %v4277 = vld [vmem:[%s4273 + $0xc] sm:$0xf]
    %v4278 = vld [vmem:[%s4273 + $0x10] sm:$0xf]
    %v4279 = vld [vmem:[%s4273 + $0x14] sm:$0xf]
    %v4280 = vld [vmem:[%s4273 + $0x18] sm:$0xf]
    %v4281 = vld [vmem:[%s4273 + $0x1c] sm:$0xf]
    %s4282 = scalar_lea.vmem %s10, 1
    %v4283 = vld [vmem:[%s4282] sm:$0x1]
    %v4285 = vlaneseq
    %v4286 = vshrl.u32 %v4285, 7
    %v4287 = vsub.s32 0, %v4286
    %v4288 = vrot.slane %v4283, %v4287
    %v4298 = vunpack.c.l.b16 %v4274
    %v4299 = vunpack.c.l.b16 %v4275
    %v4300 = vunpack.c.l.b16 %v4276
    %v4301 = vunpack.c.l.b16 %v4277
    %v4302 = vunpack.c.l.b16 %v4278
    %v4303 = vunpack.c.l.b16 %v4279
    %v4304 = vunpack.c.l.b16 %v4280
    %v4305 = vunpack.c.l.b16 %v4281
    %v4306 = vpack.c.b16 %v4299, %v4298
    %v4307 = vpack.c.b16 %v4301, %v4300
    %v4308 = vpack.c.b16 %v4303, %v4302
    %v4309 = vpack.c.b16 %v4305, %v4304
    %v4315 = vsel %vm2185, %v4272, 0
    %4317 = vmatprep.subr.bf16.mxu0 0
    %4318 = vmatpush1.bf16.msra.mxu0 %v4306
    %4319 = vmatprep.subr.bf16.mxu0 0
    %4320 = vmatpush1.bf16.msra.mxu0 %v4307
    %4321 = vmatprep.subr.bf16.mxu0 0
    %4322 = vmatpush1.bf16.msra.mxu0 %v4308
    %4323 = vmatprep.subr.bf16.mxu0 0
    %4324 = vmatpush1.bf16.msra.mxu0 %v4309
    %4325 = vmatprep.subr.bf16.mxu0 0
    %4326 = vmatpush1.bf16.msra.mxu0 0
    %4327 = vmatprep.subr.bf16.mxu0 0
    %4328 = vmatpush1.bf16.msra.mxu0 0
    %4329 = vmatprep.subr.bf16.mxu0 0
    %4330 = vmatpush1.bf16.msra.mxu0 0
    %4331 = vmatprep.subr.bf16.mxu0 0
    %4332 = vmatpush1.bf16.msra.mxu0 0
    %4333 = vmatprep.subr.bf16.mxu0 0
    %4334 = vmatpush1.bf16.msra.mxu0 0
    %4335 = vmatprep.subr.bf16.mxu0 0
    %4336 = vmatpush1.bf16.msra.mxu0 0
    %4337 = vmatprep.subr.bf16.mxu0 0
    %4338 = vmatpush1.bf16.msra.mxu0 0
    %4339 = vmatprep.subr.bf16.mxu0 0
    %4340 = vmatpush1.bf16.msra.mxu0 0
    %4341 = vmatprep.subr.bf16.mxu0 0
    %4342 = vmatpush1.bf16.msra.mxu0 0
    %4343 = vmatprep.subr.bf16.mxu0 0
    %4344 = vmatpush1.bf16.msra.mxu0 0
    %4345 = vmatprep.subr.bf16.mxu0 0
    %4346 = vmatpush1.bf16.msra.mxu0 0
    %4347 = vmatprep.subr.bf16.mxu0 0
    %4348 = vmatpush1.bf16.msra.mxu0 0
    %4349 = vmatprep.mubr.bf16.mxu0 0
    %4350 = vmatmul.mubr.bf16.gmra.mrb[0].mxu0 %v4315
    %v4351 = vpop.f32.mrb[0].mxu0
    %v4352 = vadd.f32 %v4288, %v4351
    %v4353 = vpop.f32.mrb[0].mxu0
    %v4354 = vpop.f32.mrb[0].mxu0
    %v4355 = vadd.f32 %v4288, %v4354
    %v4356 = vpop.f32.mrb[0].mxu0
    %4357 = vdwg.mxu0
    %v4358 = vadd.f32 %v4198, %v4352
    %v4359 = vadd.f32 %v4199, %v4355
    %s4360 = scalar_lea.vmem %s11, 3
    %v4361 = vld [vmem:[%s4360] sm:$0x1]
    %s4362 = scalar_lea.vmem %s12, 3
    %v4363 = vld [vmem:[%s4362] sm:$0x1]
    %v4364 = vsel %vm179, %v4358, 0.0
    %4365 = vadd.xlane.f32.xlu0 %v4364
    %v4366 = vpop.xlane.xlu0 %4365
    %v4367 = vsel %vm179, %v4359, 0.0
    %4368 = vadd.xlane.f32.xlu0 %v4367
    %v4369 = vpop.xlane.xlu0 %4368
    %v4370 = vmul.f32 %v4366, %v2038
    %v4371 = vmul.f32 %v4369, %v2038
    %v4372 = vsub.f32 %v4358, %v4370
    %v4373 = vsub.f32 %v4359, %v4371
    %v4374 = vmul.f32 %v4372, %v4372
    %v4375 = vmul.f32 %v4373, %v4373
    %v4376 = vsel %vm179, %v4374, 0.0
    %4377 = vadd.xlane.f32.xlu0 %v4376
    %v4378 = vpop.xlane.xlu0 %4377
    %v4379 = vsel %vm179, %v4375, 0.0
    %4380 = vadd.xlane.f32.xlu0 %v4379
    %v4381 = vpop.xlane.xlu0 %4380
    %v4382 = vmul.f32 %v4378, %v2038
    %v4383 = vmul.f32 %v4381, %v2038
    %v4384 = vadd.f32 %v4382, 1e-05
    %v4385 = vadd.f32 %v4383, 1e-05
    %v4386 = vrsqrt.pop %v4384
    %v4387 = vrsqrt.pop %v4385
    %v4388 = vmul.f32 %v4372, %v4386
    %v4389 = vmul.f32 %v4373, %v4387
    %v4391 = vlaneseq
    %v4392 = vshrl.u32 %v4391, 7
    %v4393 = vsub.s32 0, %v4392
    %v4394 = vrot.slane %v4361, %v4393
    %v4396 = vmul.f32 %v4388, %v4394
    %v4397 = vmul.f32 %v4389, %v4394
    %v4399 = vlaneseq
    %v4400 = vshrl.u32 %v4399, 7
    %v4401 = vsub.s32 0, %v4400
    %v4402 = vrot.slane %v4363, %v4401
    %v4404 = vadd.f32 %v4396, %v4402
    %v4405 = vadd.f32 %v4397, %v4402
    %v4406 = vadd.f32 %v4404, %v4405
    %v4407 = vmul.f32 %v4406, 0.5
    %v4408 = vpack.c.bf16 %v4407, %v4407
    %v4409 = vld [vmem:[%s13] sm:$0xf]
    %v4410 = vld [vmem:[%s13 + $0x4] sm:$0xf]
    %v4411 = vld [vmem:[%s13 + $0x8] sm:$0xf]
    %v4412 = vld [vmem:[%s13 + $0xc] sm:$0xf]
    %v4413 = vld [vmem:[%s14] sm:$0x1]
    %v4415 = vlaneseq
    %v4416 = vshrl.u32 %v4415, 7
    %v4417 = vsub.s32 0, %v4416
    %v4418 = vrot.slane %v4413, %v4417
    %v4424 = vunpack.c.l.b16 %v4409
    %v4425 = vunpack.c.l.b16 %v4410
    %v4426 = vunpack.c.l.b16 %v4411
    %v4427 = vunpack.c.l.b16 %v4412
    %v4428 = vpack.c.b16 %v4425, %v4424
    %v4429 = vpack.c.b16 %v4427, %v4426
    %v4433 = vsel %vm179, %v4408, 0
    %4435 = vmatprep.subr.bf16.mxu0 0
    %4436 = vmatpush1.bf16.msra.mxu0 %v4428
    %4437 = vmatprep.subr.bf16.mxu0 0
    %4438 = vmatpush1.bf16.msra.mxu0 %v4429
    %4439 = vmatprep.subr.bf16.mxu0 0
    %4440 = vmatpush1.bf16.msra.mxu0 0
    %4441 = vmatprep.subr.bf16.mxu0 0
    %4442 = vmatpush1.bf16.msra.mxu0 0
    %4443 = vmatprep.subr.bf16.mxu0 0
    %4444 = vmatpush1.bf16.msra.mxu0 0
    %4445 = vmatprep.subr.bf16.mxu0 0
    %4446 = vmatpush1.bf16.msra.mxu0 0
    %4447 = vmatprep.subr.bf16.mxu0 0
    %4448 = vmatpush1.bf16.msra.mxu0 0
    %4449 = vmatprep.subr.bf16.mxu0 0
    %4450 = vmatpush1.bf16.msra.mxu0 0
    %4451 = vmatprep.subr.bf16.mxu0 0
    %4452 = vmatpush1.bf16.msra.mxu0 0
    %4453 = vmatprep.subr.bf16.mxu0 0
    %4454 = vmatpush1.bf16.msra.mxu0 0
    %4455 = vmatprep.subr.bf16.mxu0 0
    %4456 = vmatpush1.bf16.msra.mxu0 0
    %4457 = vmatprep.subr.bf16.mxu0 0
    %4458 = vmatpush1.bf16.msra.mxu0 0
    %4459 = vmatprep.subr.bf16.mxu0 0
    %4460 = vmatpush1.bf16.msra.mxu0 0
    %4461 = vmatprep.subr.bf16.mxu0 0
    %4462 = vmatpush1.bf16.msra.mxu0 0
    %4463 = vmatprep.subr.bf16.mxu0 0
    %4464 = vmatpush1.bf16.msra.mxu0 0
    %4465 = vmatprep.subr.bf16.mxu0 0
    %4466 = vmatpush1.bf16.msra.mxu0 0
    %4467 = vmatprep.mubr.bf16.mxu0 0
    %4468 = vmatmul.mubr.bf16.gmra.mrb[0].mxu0 %v4433
    %v4469 = vpop.f32.mrb[0].mxu0
    %v4470 = vadd.f32 %v4418, %v4469
    %v4471 = vpop.f32.mrb[0].mxu0
    %v4472 = vpop.f32.mrb[0].mxu0
    %v4473 = vpop.f32.mrb[0].mxu0
    %4474 = vdwg.mxu0
    %4475 = vst [vmem:[#allocation5] sm:$0xff] %v4470
    // Predicated region
    $region58: #{masked_lm_forward.1} parent=1 // pred_check
      _
    $region59: #{masked_lm_forward.1} parent=1 // pred_check_branch
      %4477 = sbr.rel (0) target = $region61
    $region60: #{masked_lm_forward.1} parent=1 // pred_region
      %s4479 = ssub.s32 128, 128
      %4480 = vsyncadd [#allocation6], %s4479
      %s4482 = sshll.u32 [#allocation5], 4
      %s4483 = int_to_ptr.vmem [resolvable:$true] %s4482
      %4485 = dma.vmem_to_hbm [thread:$0]  %s4483, 128, %s15, [#allocation6]
    $region61: #{masked_lm_forward.1} parent=1 // pred_fallthru
      _
    // Predicated region
    $region62: #{masked_lm_forward.1} parent=1 // pred_check
      _
    $region63: #{masked_lm_forward.1} parent=1 // pred_check_branch
      %4487 = sbr.rel (0) target = $region65
    $region64: #{masked_lm_forward.1} parent=1 // pred_region
      %4488 = dma.done [#allocation6], 128
    $region65: #{masked_lm_forward.1} parent=1 // pred_fallthru
      _
    %4489 = vsyncpa [#allocation6], 1

</llo_original>
